<compile_context>
chip_gen: v5e
topology: v5e:2x2
jax: 0.10.0
libtpu: 0.0.40
codegen_flags: <defaults>
</compile_context>

<pallas_src>
import functools

import numpy as np

import jax
import jax.numpy as jnp
from jax.experimental import pallas as pl
from jax.experimental.pallas import tpu as pltpu


# ----------------------- static tree-layout helpers ------------------------

def _level_sigmas(num_leaves):
    """sigmas[l][p] = natural node index (within level l) stored at position p.

    Chosen (bit-reversal at the leaves) so that at every internal level the
    left children of all parents form one contiguous row block and the right
    children the next contiguous block -> contiguous static slices only
    inside the kernel."""
    depth = num_leaves.bit_length() - 1          # num_leaves must be 2**depth
    sig = [None] * (depth + 1)
    sig[depth] = [0]
    for l in range(depth, 0, -1):
        w = len(sig[l])
        child = [0] * (2 * w)
        for k, s in enumerate(sig[l]):
            child[k] = 2 * s                     # left children first ...
            child[w + k] = 2 * s + 1             # ... then right children
        sig[l - 1] = child
    return sig


def _build_row_index(num_leaves, batch, tile_b):
    """idx[b, natural_node] = global kernel row that holds that node's result."""
    sig = _level_sigmas(num_leaves)
    n_nodes = 2 * num_leaves - 1
    tile_rows = tile_b * n_nodes
    idx = np.zeros((batch, n_nodes), dtype=np.int32)
    node_off, row_off, width, l = 0, 0, num_leaves, 0
    while width >= 1:
        for p, s in enumerate(sig[l]):
            for b in range(batch):
                t, bl = divmod(b, tile_b)
                idx[b, node_off + s] = t * tile_rows + row_off + p * tile_b + bl
        node_off += width
        row_off += tile_b * width
        width //= 2
        l += 1
    return idx


# ----------------------------- fused kernel --------------------------------

def _fused_tree_kernel(emb_ref, w_iou_ref, b_iou_ref, u_cat_ref, b_cat_ref,
                       w_lin_ref, b_lin_ref, out_ref,
                       x_ref, hcat_ref, ccat_ref, mcat_ref,
                       *, num_leaves, tile_b, h_size):
    H = h_size

    def sigm(x):
        # one EUP tanh per sigmoid instead of exp + divide
        return 0.5 * jnp.tanh(0.5 * x) + 0.5

    def node(iou_i, iou_o, iou_u, c_kids):
        i = sigm(iou_i)
        o = sigm(iou_o)
        u = jnp.tanh(iou_u)
        c = i * u + c_kids
        h = o * jnp.tanh(c)
        return h, c

    def store_level(h, c, m, rows, row_off, is_root):
        # x = h + max_h (dropout == identity) for the final classifier matmul
        x_ref[row_off:row_off + rows, :] = h + m
        if not is_root:
            # cat layout for the NEXT level's parents: row r of the cat slab
            # is [left-child vec | right-child vec] -> next level's matmul LHS
            # and elementwise child combines need no concatenate.
            half = rows // 2
            hcat_ref[0:half, :H] = h[0:half]
            hcat_ref[0:half, H:] = h[half:]
            ccat_ref[0:half, :H] = c[0:half]
            ccat_ref[0:half, H:] = c[half:]
            mcat_ref[0:half, :H] = m[0:half]
            mcat_ref[0:half, H:] = m[half:]

    # ---- leaves: iou = (emb * mask) @ W_iou + b_iou (mask applied in wrapper)
    leaf_rows = tile_b * num_leaves
    iou = jnp.dot(emb_ref[...], w_iou_ref[...],
                  preferred_element_type=jnp.float32) + b_iou_ref[...]
    h, c = node(iou[:, :H], iou[:, H:2 * H], iou[:, 2 * H:], 0.0)
    m = jnp.maximum(h, 0.0)                      # max(h, initial max_h = 0)
    store_level(h, c, m, leaf_rows, 0, is_root=False)

    # ---- internal levels (fully unrolled; everything stays in VMEM) --------
    row_off = leaf_rows
    width = num_leaves // 2
    while width >= 1:
        rows = tile_b * width                    # parent rows this level
        h_cat = hcat_ref[0:rows, :]
        c_cat = ccat_ref[0:rows, :]
        m_cat = mcat_ref[0:rows, :]
        # one fused (rows, 2H) x (2H, 5H) matmul: [f_pre | i | o | u]
        pre = jnp.dot(h_cat, u_cat_ref[...],
                      preferred_element_type=jnp.float32) + b_cat_ref[...]
        f = sigm(pre[:, :2 * H])
        fc = f * c_cat
        c_kids = fc[:, :H] + fc[:, H:]
        m_kids = jnp.maximum(m_cat[:, :H], m_cat[:, H:])
        # i/o/u sliced directly from pre at 2H/3H/4H (no vreg-crossing slice)
        h, c = node(pre[:, 2 * H:3 * H], pre[:, 3 * H:4 * H],
                    pre[:, 4 * H:], c_kids)
        m = jnp.maximum(h, m_kids)
        store_level(h, c, m, rows, row_off, is_root=(width == 1))
        row_off += rows
        width //= 2

    # ---- classifier: logits = (h + max_h) @ W_lin + b_lin (lane-padded) ----
    out_ref[...] = jnp.dot(x_ref[...], w_lin_ref[...],
                           preferred_element_type=jnp.float32) + b_lin_ref[...]


# ----------------------------- wrapper --------------------------------------

def _const_spec(shape):
    n = len(shape)
    return pl.BlockSpec(shape, lambda t, n=n: (0,) * n)   # resident across steps


@functools.partial(jax.jit, static_argnames=("num_leaves", "tile_b"))
def tree_lstm_forward(params, wordid, mask, num_leaves, tile_b=32):
    """TreeLSTM forward over a batch of complete binary trees.

    wordid, mask: (batch, n_nodes); per-tree node order is
    [leaves, level 1, ..., root], children of internal node j at a level are
    nodes (2j, 2j+1) of the previous level.  Returns (batch, n_nodes, C)."""
    batch, n_nodes = wordid.shape
    assert num_leaves >= 2 and (num_leaves & (num_leaves - 1)) == 0, \
        "complete-binary-tree layout requires power-of-two num_leaves"
    assert n_nodes == 2 * num_leaves - 1
    tile_b = min(tile_b, batch)
    assert batch % tile_b == 0, "batch must be a multiple of tile_b"
    num_tiles = batch // tile_b

    H = params["b_iou"].shape[-1] // 3
    X = params["embedding"].shape[-1]
    C = params["W_lin"].shape[-1]
    C_pad = 128
    tile_rows = tile_b * n_nodes
    leaf_rows = tile_b * num_leaves

    # Leaf embeddings, masked in the wrapper ((emb*mask)@W == (emb@W)*mask),
    # bit-reversed position order, batch-minor, grouped per batch tile so the
    # kernel's per-level child reads are contiguous row blocks.
    leaf_ids = (wordid * mask)[:, :num_leaves]
    leaf_emb = params["embedding"][leaf_ids]                        # (B, L, X)
    leaf_emb = leaf_emb * mask.astype(jnp.float32)[:, :num_leaves, None]
    sigma0 = np.asarray(_level_sigmas(num_leaves)[0])
    leaf_emb = leaf_emb[:, sigma0, :]                               # pos-ordered
    leaf_emb = leaf_emb.reshape(num_tiles, tile_b, num_leaves, X)
    leaf_emb = jnp.transpose(leaf_emb, (0, 2, 1, 3))
    leaf_emb = leaf_emb.reshape(num_tiles * leaf_rows, X)

    # Fused recurrence weight / bias and lane-padded classifier weight.
    U_cat = jnp.concatenate([params["U_f"], params["U_iou"]], axis=1)   # (2H,5H)
    b_cat = jnp.concatenate([params["b_f"], params["b_iou"]], axis=1)   # (1,5H)
    W_lin_p = jnp.pad(params["W_lin"], ((0, 0), (0, C_pad - C)))
    b_lin_p = jnp.pad(params["b_lin"], ((0, 0), (0, C_pad - C)))

    kernel = functools.partial(_fused_tree_kernel, num_leaves=num_leaves,
                               tile_b=tile_b, h_size=H)
    out = pl.pallas_call(
        kernel,
        out_shape=jax.ShapeDtypeStruct((num_tiles * tile_rows, C_pad),
                                       jnp.float32),
        grid=(num_tiles,),
        in_specs=[
            pl.BlockSpec((leaf_rows, X), lambda t: (t, 0)),
            _const_spec(params["W_iou"].shape),
            _const_spec(params["b_iou"].shape),
            _const_spec(U_cat.shape),
            _const_spec(b_cat.shape),
            _const_spec(W_lin_p.shape),
            _const_spec(b_lin_p.shape),
        ],
        out_specs=pl.BlockSpec((tile_rows, C_pad), lambda t: (t, 0)),
        scratch_shapes=[
            pltpu.VMEM((tile_rows, H), jnp.float32),              # x = h+max_h
            pltpu.VMEM((leaf_rows // 2, 2 * H), jnp.float32),     # h   (cat)
            pltpu.VMEM((leaf_rows // 2, 2 * H), jnp.float32),     # c   (cat)
            pltpu.VMEM((leaf_rows // 2, 2 * H), jnp.float32),     # max_h (cat)
        ],
        compiler_params=pltpu.CompilerParams(
            dimension_semantics=("parallel",),
            vmem_limit_bytes=32 * 1024 * 1024),
    )(leaf_emb, params["W_iou"], params["b_iou"], U_cat, b_cat,
      W_lin_p, b_lin_p)

    # Map kernel rows (tile-major, level-major, bit-reversed positions,
    # batch-minor) back to natural (batch, node) order; drop lane padding.
    idx = jnp.asarray(_build_row_index(num_leaves, batch, tile_b))   # (B, N)
    return out[idx][:, :, :C]


# ----------------------------- pure-JAX reference ---------------------------

def tree_lstm_reference(params, wordid, mask, num_leaves):
    H = params["b_iou"].shape[-1] // 3
    emb = params["embedding"][wordid * mask]                      # (B, N, X)
    mask_f = mask.astype(jnp.float32)[..., None]

    def gates(iou, c_kids):
        i = jax.nn.sigmoid(iou[..., :H])
        o = jax.nn.sigmoid(iou[..., H:2 * H])
        u = jnp.tanh(iou[..., 2 * H:])
        c = i * u + c_kids
        h = o * jnp.tanh(c)
        return h, c

    iou_leaf = (emb[:, :num_leaves] @ params["W_iou"]) * mask_f[:, :num_leaves] \
               + params["b_iou"]
    h, c = gates(iou_leaf, 0.0)
    m = jnp.maximum(h, 0.0)

    h_parts, m_parts = [h], [m]
    width = num_leaves // 2
    while width >= 1:
        hl, hr = h[:, 0::2], h[:, 1::2]
        cl, cr = c[:, 0::2], c[:, 1::2]
        ml, mr = m[:, 0::2], m[:, 1::2]
        h_cat = jnp.concatenate([hl, hr], axis=-1)
        f = jax.nn.sigmoid(h_cat @ params["U_f"] + params["b_f"])
        c_kids = f[..., :H] * cl + f[..., H:] * cr
        m_kids = jnp.maximum(ml, mr)
        iou = h_cat @ params["U_iou"] + params["b_iou"]
        h, c = gates(iou, c_kids)
        m = jnp.maximum(h, m_kids)
        h_parts.append(h)
        m_parts.append(m)
        width //= 2

    h_all = jnp.concatenate(h_parts, axis=1)
    m_all = jnp.concatenate(m_parts, axis=1)
    return (h_all + m_all) @ params["W_lin"] + params["b_lin"]


# ----------------------------- main -----------------------------------------

if __name__ == "__main__":
    num_vocabs, x_size, h_size, num_classes = 100, 32, 32, 4
    num_leaves = 8                                  # per tree (power of two)
    batch = 64                                      # trees per fused call
    tile_b = 32                                     # trees per (parallel) grid step
    n_nodes = 2 * num_leaves - 1                    # 15 nodes per tree

    key = jax.random.PRNGKey(0)
    ks = jax.random.split(key, 8)

    def uinit(k, shape, fan_in):
        bound = 1.0 / jnp.sqrt(jnp.float32(fan_in))
        return jax.random.uniform(k, shape, jnp.float32, -bound, bound)

    params = {
        "embedding": jax.random.normal(ks[0], (num_vocabs, x_size), jnp.float32) * 0.1,
        "W_iou": uinit(ks[1], (x_size, 3 * h_size), x_size),          # no bias
        "U_iou": uinit(ks[2], (2 * h_size, 3 * h_size), 2 * h_size),
        "b_iou": jnp.zeros((1, 3 * h_size), jnp.float32),
        "U_f":   uinit(ks[3], (2 * h_size, 2 * h_size), 2 * h_size),
        "b_f":   uinit(ks[4], (1, 2 * h_size), 2 * h_size),
        "W_lin": uinit(ks[5], (h_size, num_classes), h_size),
        "b_lin": uinit(ks[6], (1, num_classes), h_size),
    }

    # SST-like batch: leaves carry words (mask=1), internal nodes do not (mask=0)
    wordid = jax.random.randint(ks[7], (batch, n_nodes), 0, num_vocabs, jnp.int32)
    mask = jnp.concatenate(
        [jnp.ones((batch, num_leaves), jnp.int32),
         jnp.zeros((batch, n_nodes - num_leaves), jnp.int32)], axis=1)

    logits = tree_lstm_forward(params, wordid, mask,
                               num_leaves=num_leaves, tile_b=tile_b)
    logits = jax.block_until_ready(logits)

    ref = tree_lstm_reference(params, wordid, mask, num_leaves)
    assert logits.shape == (batch, n_nodes, num_classes)
    assert jnp.allclose(logits, ref, atol=3e-3, rtol=3e-3), "mismatch vs reference"

    print("KERNEL_OK")
</pallas_src>

<mosaic_0001>
module attributes {stable_mosaic.version = 11 : i64} {
  func.func @_fused_tree_kernel(%arg0: i32, %arg1: memref<256x32xf32, #tpu.memory_space<vmem>>, %arg2: memref<32x96xf32, #tpu.memory_space<vmem>>, %arg3: memref<1x96xf32, #tpu.memory_space<vmem>>, %arg4: memref<64x160xf32, #tpu.memory_space<vmem>>, %arg5: memref<1x160xf32, #tpu.memory_space<vmem>>, %arg6: memref<32x128xf32, #tpu.memory_space<vmem>>, %arg7: memref<1x128xf32, #tpu.memory_space<vmem>>, %arg8: memref<480x128xf32, #tpu.memory_space<vmem>>, %arg9: memref<480x32xf32, #tpu.memory_space<vmem>>, %arg10: memref<128x64xf32, #tpu.memory_space<vmem>>, %arg11: memref<128x64xf32, #tpu.memory_space<vmem>>, %arg12: memref<128x64xf32, #tpu.memory_space<vmem>>) attributes {dimension_semantics = [#tpu.dimension_semantics<parallel>], iteration_bounds = array<i64: 2>, scalar_prefetch = 0 : i64, scratch_operands = 4 : i64, tpu.core_type = #tpu.core_type<tc>, window_params = [{transform_indices = @transform_0, window_bounds = array<i64: 256, 32>}, {pipeline_mode = #tpu.pipeline_mode<synchronous>, transform_indices = @transform_1, window_bounds = array<i64: 32, 96>}, {pipeline_mode = #tpu.pipeline_mode<synchronous>, transform_indices = @transform_2, window_bounds = array<i64: 1, 96>}, {pipeline_mode = #tpu.pipeline_mode<synchronous>, transform_indices = @transform_3, window_bounds = array<i64: 64, 160>}, {pipeline_mode = #tpu.pipeline_mode<synchronous>, transform_indices = @transform_4, window_bounds = array<i64: 1, 160>}, {pipeline_mode = #tpu.pipeline_mode<synchronous>, transform_indices = @transform_5, window_bounds = array<i64: 32, 128>}, {pipeline_mode = #tpu.pipeline_mode<synchronous>, transform_indices = @transform_6, window_bounds = array<i64: 1, 128>}, {transform_indices = @transform_7, window_bounds = array<i64: 480, 128>}]} {
    %c0 = arith.constant 0 : index
    %c0_0 = arith.constant 0 : index
    %0 = vector.load %arg1[%c0, %c0_0] : memref<256x32xf32, #tpu.memory_space<vmem>>, vector<256x32xf32>
    %c0_1 = arith.constant 0 : index
    %c0_2 = arith.constant 0 : index
    %1 = vector.load %arg2[%c0_1, %c0_2] : memref<32x96xf32, #tpu.memory_space<vmem>>, vector<32x96xf32>
    %cst = arith.constant dense<0.000000e+00> : vector<256x96xf32>
    %2 = tpu.matmul %0, %1, %cst {dimension_numbers = #tpu.dot_dimension_numbers<[1], [0], [0], [1], [0, 0, 1, 1], [], []>} : vector<256x32xf32>, vector<32x96xf32>, vector<256x96xf32> -> vector<256x96xf32>
    %c0_3 = arith.constant 0 : index
    %c0_4 = arith.constant 0 : index
    %3 = vector.load %arg3[%c0_3, %c0_4] : memref<1x96xf32, #tpu.memory_space<vmem>>, vector<1x96xf32>
    %4 = vector.broadcast %3 : vector<1x96xf32> to vector<256x96xf32>
    %5 = arith.addf %2, %4 : vector<256x96xf32>
    %6 = vector.extract_strided_slice %5 {offsets = [0, 0], sizes = [256, 32], strides = [1, 1]} : vector<256x96xf32> to vector<256x32xf32>
    %7 = vector.extract_strided_slice %5 {offsets = [0, 32], sizes = [256, 32], strides = [1, 1]} : vector<256x96xf32> to vector<256x32xf32>
    %8 = vector.extract_strided_slice %5 {offsets = [0, 64], sizes = [256, 32], strides = [1, 1]} : vector<256x96xf32> to vector<256x32xf32>
    %cst_5 = arith.constant 5.000000e-01 : f32
    %9 = vector.broadcast %cst_5 : f32 to vector<256x32xf32>
    %10 = arith.mulf %9, %6 : vector<256x32xf32>
    %11 = math.tanh %10 : vector<256x32xf32>
    %cst_6 = arith.constant 5.000000e-01 : f32
    %12 = vector.broadcast %cst_6 : f32 to vector<256x32xf32>
    %13 = arith.mulf %12, %11 : vector<256x32xf32>
    %cst_7 = arith.constant 5.000000e-01 : f32
    %14 = vector.broadcast %cst_7 : f32 to vector<256x32xf32>
    %15 = arith.addf %13, %14 : vector<256x32xf32>
    %cst_8 = arith.constant 5.000000e-01 : f32
    %16 = vector.broadcast %cst_8 : f32 to vector<256x32xf32>
    %17 = arith.mulf %16, %7 : vector<256x32xf32>
    %18 = math.tanh %17 : vector<256x32xf32>
    %cst_9 = arith.constant 5.000000e-01 : f32
    %19 = vector.broadcast %cst_9 : f32 to vector<256x32xf32>
    %20 = arith.mulf %19, %18 : vector<256x32xf32>
    %cst_10 = arith.constant 5.000000e-01 : f32
    %21 = vector.broadcast %cst_10 : f32 to vector<256x32xf32>
    %22 = arith.addf %20, %21 : vector<256x32xf32>
    %23 = math.tanh %8 : vector<256x32xf32>
    %24 = arith.mulf %15, %23 : vector<256x32xf32>
    %cst_11 = arith.constant 0.000000e+00 : f32
    %25 = vector.broadcast %cst_11 : f32 to vector<256x32xf32>
    %26 = arith.addf %24, %25 : vector<256x32xf32>
    %27 = math.tanh %26 : vector<256x32xf32>
    %28 = arith.mulf %22, %27 : vector<256x32xf32>
    %cst_12 = arith.constant 0.000000e+00 : f32
    %29 = vector.broadcast %cst_12 : f32 to vector<256x32xf32>
    %30 = arith.maximumf %28, %29 : vector<256x32xf32>
    %31 = arith.addf %28, %30 : vector<256x32xf32>
    %c0_13 = arith.constant 0 : index
    %c0_14 = arith.constant 0 : index
    %32 = vector.load %arg9[%c0_13, %c0_14] : memref<480x32xf32, #tpu.memory_space<vmem>>, vector<256x32xf32>
    tpu.vector_store %arg9[%c0_13, %c0_14], %31 {strides = array<i32>} : memref<480x32xf32, #tpu.memory_space<vmem>>, vector<256x32xf32>,
    %33 = vector.extract_strided_slice %28 {offsets = [0, 0], sizes = [128, 32], strides = [1, 1]} : vector<256x32xf32> to vector<128x32xf32>
    %c0_15 = arith.constant 0 : index
    %c0_16 = arith.constant 0 : index
    %34 = vector.load %arg10[%c0_15, %c0_16] : memref<128x64xf32, #tpu.memory_space<vmem>>, vector<128x32xf32>
    tpu.vector_store %arg10[%c0_15, %c0_16], %33 {strides = array<i32>} : memref<128x64xf32, #tpu.memory_space<vmem>>, vector<128x32xf32>,
    %35 = vector.extract_strided_slice %28 {offsets = [128, 0], sizes = [128, 32], strides = [1, 1]} : vector<256x32xf32> to vector<128x32xf32>
    %c0_17 = arith.constant 0 : index
    %c32 = arith.constant 32 : index
    %36 = vector.load %arg10[%c0_17, %c32] : memref<128x64xf32, #tpu.memory_space<vmem>>, vector<128x32xf32>
    tpu.vector_store %arg10[%c0_17, %c32], %35 {strides = array<i32>} : memref<128x64xf32, #tpu.memory_space<vmem>>, vector<128x32xf32>,
    %37 = vector.extract_strided_slice %26 {offsets = [0, 0], sizes = [128, 32], strides = [1, 1]} : vector<256x32xf32> to vector<128x32xf32>
    %c0_18 = arith.constant 0 : index
    %c0_19 = arith.constant 0 : index
    %38 = vector.load %arg11[%c0_18, %c0_19] : memref<128x64xf32, #tpu.memory_space<vmem>>, vector<128x32xf32>
    tpu.vector_store %arg11[%c0_18, %c0_19], %37 {strides = array<i32>} : memref<128x64xf32, #tpu.memory_space<vmem>>, vector<128x32xf32>,
    %39 = vector.extract_strided_slice %26 {offsets = [128, 0], sizes = [128, 32], strides = [1, 1]} : vector<256x32xf32> to vector<128x32xf32>
    %c0_20 = arith.constant 0 : index
    %c32_21 = arith.constant 32 : index
    %40 = vector.load %arg11[%c0_20, %c32_21] : memref<128x64xf32, #tpu.memory_space<vmem>>, vector<128x32xf32>
    tpu.vector_store %arg11[%c0_20, %c32_21], %39 {strides = array<i32>} : memref<128x64xf32, #tpu.memory_space<vmem>>, vector<128x32xf32>,
    %41 = vector.extract_strided_slice %30 {offsets = [0, 0], sizes = [128, 32], strides = [1, 1]} : vector<256x32xf32> to vector<128x32xf32>
    %c0_22 = arith.constant 0 : index
    %c0_23 = arith.constant 0 : index
    %42 = vector.load %arg12[%c0_22, %c0_23] : memref<128x64xf32, #tpu.memory_space<vmem>>, vector<128x32xf32>
    tpu.vector_store %arg12[%c0_22, %c0_23], %41 {strides = array<i32>} : memref<128x64xf32, #tpu.memory_space<vmem>>, vector<128x32xf32>,
    %43 = vector.extract_strided_slice %30 {offsets = [128, 0], sizes = [128, 32], strides = [1, 1]} : vector<256x32xf32> to vector<128x32xf32>
    %c0_24 = arith.constant 0 : index
    %c32_25 = arith.constant 32 : index
    %44 = vector.load %arg12[%c0_24, %c32_25] : memref<128x64xf32, #tpu.memory_space<vmem>>, vector<128x32xf32>
    tpu.vector_store %arg12[%c0_24, %c32_25], %43 {strides = array<i32>} : memref<128x64xf32, #tpu.memory_space<vmem>>, vector<128x32xf32>,
    %c0_26 = arith.constant 0 : index
    %c0_27 = arith.constant 0 : index
    %45 = vector.load %arg10[%c0_26, %c0_27] : memref<128x64xf32, #tpu.memory_space<vmem>>, vector<128x64xf32>
    %c0_28 = arith.constant 0 : index
    %c0_29 = arith.constant 0 : index
    %46 = vector.load %arg11[%c0_28, %c0_29] : memref<128x64xf32, #tpu.memory_space<vmem>>, vector<128x64xf32>
    %c0_30 = arith.constant 0 : index
    %c0_31 = arith.constant 0 : index
    %47 = vector.load %arg12[%c0_30, %c0_31] : memref<128x64xf32, #tpu.memory_space<vmem>>, vector<128x64xf32>
    %c0_32 = arith.constant 0 : index
    %c0_33 = arith.constant 0 : index
    %48 = vector.load %arg4[%c0_32, %c0_33] : memref<64x160xf32, #tpu.memory_space<vmem>>, vector<64x160xf32>
    %cst_34 = arith.constant dense<0.000000e+00> : vector<128x160xf32>
    %49 = tpu.matmul %45, %48, %cst_34 {dimension_numbers = #tpu.dot_dimension_numbers<[1], [0], [0], [1], [0, 0, 1, 1], [], []>} : vector<128x64xf32>, vector<64x160xf32>, vector<128x160xf32> -> vector<128x160xf32>
    %c0_35 = arith.constant 0 : index
    %c0_36 = arith.constant 0 : index
    %50 = vector.load %arg5[%c0_35, %c0_36] : memref<1x160xf32, #tpu.memory_space<vmem>>, vector<1x160xf32>
    %51 = vector.broadcast %50 : vector<1x160xf32> to vector<128x160xf32>
    %52 = arith.addf %49, %51 : vector<128x160xf32>
    %53 = vector.extract_strided_slice %52 {offsets = [0, 0], sizes = [128, 64], strides = [1, 1]} : vector<128x160xf32> to vector<128x64xf32>
    %cst_37 = arith.constant 5.000000e-01 : f32
    %54 = vector.broadcast %cst_37 : f32 to vector<128x64xf32>
    %55 = arith.mulf %54, %53 : vector<128x64xf32>
    %56 = math.tanh %55 : vector<128x64xf32>
    %cst_38 = arith.constant 5.000000e-01 : f32
    %57 = vector.broadcast %cst_38 : f32 to vector<128x64xf32>
    %58 = arith.mulf %57, %56 : vector<128x64xf32>
    %cst_39 = arith.constant 5.000000e-01 : f32
    %59 = vector.broadcast %cst_39 : f32 to vector<128x64xf32>
    %60 = arith.addf %58, %59 : vector<128x64xf32>
    %61 = arith.mulf %60, %46 : vector<128x64xf32>
    %62 = vector.extract_strided_slice %61 {offsets = [0, 0], sizes = [128, 32], strides = [1, 1]} : vector<128x64xf32> to vector<128x32xf32>
    %63 = vector.extract_strided_slice %61 {offsets = [0, 32], sizes = [128, 32], strides = [1, 1]} : vector<128x64xf32> to vector<128x32xf32>
    %64 = arith.addf %62, %63 : vector<128x32xf32>
    %65 = vector.extract_strided_slice %47 {offsets = [0, 0], sizes = [128, 32], strides = [1, 1]} : vector<128x64xf32> to vector<128x32xf32>
    %66 = vector.extract_strided_slice %47 {offsets = [0, 32], sizes = [128, 32], strides = [1, 1]} : vector<128x64xf32> to vector<128x32xf32>
    %67 = arith.maximumf %65, %66 : vector<128x32xf32>
    %68 = vector.extract_strided_slice %52 {offsets = [0, 64], sizes = [128, 32], strides = [1, 1]} : vector<128x160xf32> to vector<128x32xf32>
    %69 = vector.extract_strided_slice %52 {offsets = [0, 96], sizes = [128, 32], strides = [1, 1]} : vector<128x160xf32> to vector<128x32xf32>
    %70 = vector.extract_strided_slice %52 {offsets = [0, 128], sizes = [128, 32], strides = [1, 1]} : vector<128x160xf32> to vector<128x32xf32>
    %cst_40 = arith.constant 5.000000e-01 : f32
    %71 = vector.broadcast %cst_40 : f32 to vector<128x32xf32>
    %72 = arith.mulf %71, %68 : vector<128x32xf32>
    %73 = math.tanh %72 : vector<128x32xf32>
    %cst_41 = arith.constant 5.000000e-01 : f32
    %74 = vector.broadcast %cst_41 : f32 to vector<128x32xf32>
    %75 = arith.mulf %74, %73 : vector<128x32xf32>
    %cst_42 = arith.constant 5.000000e-01 : f32
    %76 = vector.broadcast %cst_42 : f32 to vector<128x32xf32>
    %77 = arith.addf %75, %76 : vector<128x32xf32>
    %cst_43 = arith.constant 5.000000e-01 : f32
    %78 = vector.broadcast %cst_43 : f32 to vector<128x32xf32>
    %79 = arith.mulf %78, %69 : vector<128x32xf32>
    %80 = math.tanh %79 : vector<128x32xf32>
    %cst_44 = arith.constant 5.000000e-01 : f32
    %81 = vector.broadcast %cst_44 : f32 to vector<128x32xf32>
    %82 = arith.mulf %81, %80 : vector<128x32xf32>
    %cst_45 = arith.constant 5.000000e-01 : f32
    %83 = vector.broadcast %cst_45 : f32 to vector<128x32xf32>
    %84 = arith.addf %82, %83 : vector<128x32xf32>
    %85 = math.tanh %70 : vector<128x32xf32>
    %86 = arith.mulf %77, %85 : vector<128x32xf32>
    %87 = arith.addf %86, %64 : vector<128x32xf32>
    %88 = math.tanh %87 : vector<128x32xf32>
    %89 = arith.mulf %84, %88 : vector<128x32xf32>
    %90 = arith.maximumf %89, %67 : vector<128x32xf32>
    %91 = arith.addf %89, %90 : vector<128x32xf32>
    %c256 = arith.constant 256 : index
    %c0_46 = arith.constant 0 : index
    %92 = vector.load %arg9[%c256, %c0_46] : memref<480x32xf32, #tpu.memory_space<vmem>>, vector<128x32xf32>
    tpu.vector_store %arg9[%c256, %c0_46], %91 {strides = array<i32>} : memref<480x32xf32, #tpu.memory_space<vmem>>, vector<128x32xf32>,
    %93 = vector.extract_strided_slice %89 {offsets = [0, 0], sizes = [64, 32], strides = [1, 1]} : vector<128x32xf32> to vector<64x32xf32>
    %c0_47 = arith.constant 0 : index
    %c0_48 = arith.constant 0 : index
    %94 = vector.load %arg10[%c0_47, %c0_48] : memref<128x64xf32, #tpu.memory_space<vmem>>, vector<64x32xf32>
    tpu.vector_store %arg10[%c0_47, %c0_48], %93 {strides = array<i32>} : memref<128x64xf32, #tpu.memory_space<vmem>>, vector<64x32xf32>,
    %95 = vector.extract_strided_slice %89 {offsets = [64, 0], sizes = [64, 32], strides = [1, 1]} : vector<128x32xf32> to vector<64x32xf32>
    %c0_49 = arith.constant 0 : index
    %c32_50 = arith.constant 32 : index
    %96 = vector.load %arg10[%c0_49, %c32_50] : memref<128x64xf32, #tpu.memory_space<vmem>>, vector<64x32xf32>
    tpu.vector_store %arg10[%c0_49, %c32_50], %95 {strides = array<i32>} : memref<128x64xf32, #tpu.memory_space<vmem>>, vector<64x32xf32>,
    %97 = vector.extract_strided_slice %87 {offsets = [0, 0], sizes = [64, 32], strides = [1, 1]} : vector<128x32xf32> to vector<64x32xf32>
    %c0_51 = arith.constant 0 : index
    %c0_52 = arith.constant 0 : index
    %98 = vector.load %arg11[%c0_51, %c0_52] : memref<128x64xf32, #tpu.memory_space<vmem>>, vector<64x32xf32>
    tpu.vector_store %arg11[%c0_51, %c0_52], %97 {strides = array<i32>} : memref<128x64xf32, #tpu.memory_space<vmem>>, vector<64x32xf32>,
    %99 = vector.extract_strided_slice %87 {offsets = [64, 0], sizes = [64, 32], strides = [1, 1]} : vector<128x32xf32> to vector<64x32xf32>
    %c0_53 = arith.constant 0 : index
    %c32_54 = arith.constant 32 : index
    %100 = vector.load %arg11[%c0_53, %c32_54] : memref<128x64xf32, #tpu.memory_space<vmem>>, vector<64x32xf32>
    tpu.vector_store %arg11[%c0_53, %c32_54], %99 {strides = array<i32>} : memref<128x64xf32, #tpu.memory_space<vmem>>, vector<64x32xf32>,
    %101 = vector.extract_strided_slice %90 {offsets = [0, 0], sizes = [64, 32], strides = [1, 1]} : vector<128x32xf32> to vector<64x32xf32>
    %c0_55 = arith.constant 0 : index
    %c0_56 = arith.constant 0 : index
    %102 = vector.load %arg12[%c0_55, %c0_56] : memref<128x64xf32, #tpu.memory_space<vmem>>, vector<64x32xf32>
    tpu.vector_store %arg12[%c0_55, %c0_56], %101 {strides = array<i32>} : memref<128x64xf32, #tpu.memory_space<vmem>>, vector<64x32xf32>,
    %103 = vector.extract_strided_slice %90 {offsets = [64, 0], sizes = [64, 32], strides = [1, 1]} : vector<128x32xf32> to vector<64x32xf32>
    %c0_57 = arith.constant 0 : index
    %c32_58 = arith.constant 32 : index
    %104 = vector.load %arg12[%c0_57, %c32_58] : memref<128x64xf32, #tpu.memory_space<vmem>>, vector<64x32xf32>
    tpu.vector_store %arg12[%c0_57, %c32_58], %103 {strides = array<i32>} : memref<128x64xf32, #tpu.memory_space<vmem>>, vector<64x32xf32>,
    %c0_59 = arith.constant 0 : index
    %c0_60 = arith.constant 0 : index
    %105 = vector.load %arg10[%c0_59, %c0_60] : memref<128x64xf32, #tpu.memory_space<vmem>>, vector<64x64xf32>
    %c0_61 = arith.constant 0 : index
    %c0_62 = arith.constant 0 : index
    %106 = vector.load %arg11[%c0_61, %c0_62] : memref<128x64xf32, #tpu.memory_space<vmem>>, vector<64x64xf32>
    %c0_63 = arith.constant 0 : index
    %c0_64 = arith.constant 0 : index
    %107 = vector.load %arg12[%c0_63, %c0_64] : memref<128x64xf32, #tpu.memory_space<vmem>>, vector<64x64xf32>
    %c0_65 = arith.constant 0 : index
    %c0_66 = arith.constant 0 : index
    %108 = vector.load %arg4[%c0_65, %c0_66] : memref<64x160xf32, #tpu.memory_space<vmem>>, vector<64x160xf32>
    %cst_67 = arith.constant dense<0.000000e+00> : vector<64x160xf32>
    %109 = tpu.matmul %105, %108, %cst_67 {dimension_numbers = #tpu.dot_dimension_numbers<[1], [0], [0], [1], [0, 0, 1, 1], [], []>} : vector<64x64xf32>, vector<64x160xf32>, vector<64x160xf32> -> vector<64x160xf32>
    %c0_68 = arith.constant 0 : index
    %c0_69 = arith.constant 0 : index
    %110 = vector.load %arg5[%c0_68, %c0_69] : memref<1x160xf32, #tpu.memory_space<vmem>>, vector<1x160xf32>
    %111 = vector.broadcast %110 : vector<1x160xf32> to vector<64x160xf32>
    %112 = arith.addf %109, %111 : vector<64x160xf32>
    %113 = vector.extract_strided_slice %112 {offsets = [0, 0], sizes = [64, 64], strides = [1, 1]} : vector<64x160xf32> to vector<64x64xf32>
    %cst_70 = arith.constant 5.000000e-01 : f32
    %114 = vector.broadcast %cst_70 : f32 to vector<64x64xf32>
    %115 = arith.mulf %114, %113 : vector<64x64xf32>
    %116 = math.tanh %115 : vector<64x64xf32>
    %cst_71 = arith.constant 5.000000e-01 : f32
    %117 = vector.broadcast %cst_71 : f32 to vector<64x64xf32>
    %118 = arith.mulf %117, %116 : vector<64x64xf32>
    %cst_72 = arith.constant 5.000000e-01 : f32
    %119 = vector.broadcast %cst_72 : f32 to vector<64x64xf32>
    %120 = arith.addf %118, %119 : vector<64x64xf32>
    %121 = arith.mulf %120, %106 : vector<64x64xf32>
    %122 = vector.extract_strided_slice %121 {offsets = [0, 0], sizes = [64, 32], strides = [1, 1]} : vector<64x64xf32> to vector<64x32xf32>
    %123 = vector.extract_strided_slice %121 {offsets = [0, 32], sizes = [64, 32], strides = [1, 1]} : vector<64x64xf32> to vector<64x32xf32>
    %124 = arith.addf %122, %123 : vector<64x32xf32>
    %125 = vector.extract_strided_slice %107 {offsets = [0, 0], sizes = [64, 32], strides = [1, 1]} : vector<64x64xf32> to vector<64x32xf32>
    %126 = vector.extract_strided_slice %107 {offsets = [0, 32], sizes = [64, 32], strides = [1, 1]} : vector<64x64xf32> to vector<64x32xf32>
    %127 = arith.maximumf %125, %126 : vector<64x32xf32>
    %128 = vector.extract_strided_slice %112 {offsets = [0, 64], sizes = [64, 32], strides = [1, 1]} : vector<64x160xf32> to vector<64x32xf32>
    %129 = vector.extract_strided_slice %112 {offsets = [0, 96], sizes = [64, 32], strides = [1, 1]} : vector<64x160xf32> to vector<64x32xf32>
    %130 = vector.extract_strided_slice %112 {offsets = [0, 128], sizes = [64, 32], strides = [1, 1]} : vector<64x160xf32> to vector<64x32xf32>
    %cst_73 = arith.constant 5.000000e-01 : f32
    %131 = vector.broadcast %cst_73 : f32 to vector<64x32xf32>
    %132 = arith.mulf %131, %128 : vector<64x32xf32>
    %133 = math.tanh %132 : vector<64x32xf32>
    %cst_74 = arith.constant 5.000000e-01 : f32
    %134 = vector.broadcast %cst_74 : f32 to vector<64x32xf32>
    %135 = arith.mulf %134, %133 : vector<64x32xf32>
    %cst_75 = arith.constant 5.000000e-01 : f32
    %136 = vector.broadcast %cst_75 : f32 to vector<64x32xf32>
    %137 = arith.addf %135, %136 : vector<64x32xf32>
    %cst_76 = arith.constant 5.000000e-01 : f32
    %138 = vector.broadcast %cst_76 : f32 to vector<64x32xf32>
    %139 = arith.mulf %138, %129 : vector<64x32xf32>
    %140 = math.tanh %139 : vector<64x32xf32>
    %cst_77 = arith.constant 5.000000e-01 : f32
    %141 = vector.broadcast %cst_77 : f32 to vector<64x32xf32>
    %142 = arith.mulf %141, %140 : vector<64x32xf32>
    %cst_78 = arith.constant 5.000000e-01 : f32
    %143 = vector.broadcast %cst_78 : f32 to vector<64x32xf32>
    %144 = arith.addf %142, %143 : vector<64x32xf32>
    %145 = math.tanh %130 : vector<64x32xf32>
    %146 = arith.mulf %137, %145 : vector<64x32xf32>
    %147 = arith.addf %146, %124 : vector<64x32xf32>
    %148 = math.tanh %147 : vector<64x32xf32>
    %149 = arith.mulf %144, %148 : vector<64x32xf32>
    %150 = arith.maximumf %149, %127 : vector<64x32xf32>
    %151 = arith.addf %149, %150 : vector<64x32xf32>
    %c384 = arith.constant 384 : index
    %c0_79 = arith.constant 0 : index
    %152 = vector.load %arg9[%c384, %c0_79] : memref<480x32xf32, #tpu.memory_space<vmem>>, vector<64x32xf32>
    tpu.vector_store %arg9[%c384, %c0_79], %151 {strides = array<i32>} : memref<480x32xf32, #tpu.memory_space<vmem>>, vector<64x32xf32>,
    %153 = vector.extract_strided_slice %149 {offsets = [0, 0], sizes = [32, 32], strides = [1, 1]} : vector<64x32xf32> to vector<32x32xf32>
    %c0_80 = arith.constant 0 : index
    %c0_81 = arith.constant 0 : index
    %154 = vector.load %arg10[%c0_80, %c0_81] : memref<128x64xf32, #tpu.memory_space<vmem>>, vector<32x32xf32>
    tpu.vector_store %arg10[%c0_80, %c0_81], %153 {strides = array<i32>} : memref<128x64xf32, #tpu.memory_space<vmem>>, vector<32x32xf32>,
    %155 = vector.extract_strided_slice %149 {offsets = [32, 0], sizes = [32, 32], strides = [1, 1]} : vector<64x32xf32> to vector<32x32xf32>
    %c0_82 = arith.constant 0 : index
    %c32_83 = arith.constant 32 : index
    %156 = vector.load %arg10[%c0_82, %c32_83] : memref<128x64xf32, #tpu.memory_space<vmem>>, vector<32x32xf32>
    tpu.vector_store %arg10[%c0_82, %c32_83], %155 {strides = array<i32>} : memref<128x64xf32, #tpu.memory_space<vmem>>, vector<32x32xf32>,
    %157 = vector.extract_strided_slice %147 {offsets = [0, 0], sizes = [32, 32], strides = [1, 1]} : vector<64x32xf32> to vector<32x32xf32>
    %c0_84 = arith.constant 0 : index
    %c0_85 = arith.constant 0 : index
    %158 = vector.load %arg11[%c0_84, %c0_85] : memref<128x64xf32, #tpu.memory_space<vmem>>, vector<32x32xf32>
    tpu.vector_store %arg11[%c0_84, %c0_85], %157 {strides = array<i32>} : memref<128x64xf32, #tpu.memory_space<vmem>>, vector<32x32xf32>,
    %159 = vector.extract_strided_slice %147 {offsets = [32, 0], sizes = [32, 32], strides = [1, 1]} : vector<64x32xf32> to vector<32x32xf32>
    %c0_86 = arith.constant 0 : index
    %c32_87 = arith.constant 32 : index
    %160 = vector.load %arg11[%c0_86, %c32_87] : memref<128x64xf32, #tpu.memory_space<vmem>>, vector<32x32xf32>
    tpu.vector_store %arg11[%c0_86, %c32_87], %159 {strides = array<i32>} : memref<128x64xf32, #tpu.memory_space<vmem>>, vector<32x32xf32>,
    %161 = vector.extract_strided_slice %150 {offsets = [0, 0], sizes = [32, 32], strides = [1, 1]} : vector<64x32xf32> to vector<32x32xf32>
    %c0_88 = arith.constant 0 : index
    %c0_89 = arith.constant 0 : index
    %162 = vector.load %arg12[%c0_88, %c0_89] : memref<128x64xf32, #tpu.memory_space<vmem>>, vector<32x32xf32>
    tpu.vector_store %arg12[%c0_88, %c0_89], %161 {strides = array<i32>} : memref<128x64xf32, #tpu.memory_space<vmem>>, vector<32x32xf32>,
    %163 = vector.extract_strided_slice %150 {offsets = [32, 0], sizes = [32, 32], strides = [1, 1]} : vector<64x32xf32> to vector<32x32xf32>
    %c0_90 = arith.constant 0 : index
    %c32_91 = arith.constant 32 : index
    %164 = vector.load %arg12[%c0_90, %c32_91] : memref<128x64xf32, #tpu.memory_space<vmem>>, vector<32x32xf32>
    tpu.vector_store %arg12[%c0_90, %c32_91], %163 {strides = array<i32>} : memref<128x64xf32, #tpu.memory_space<vmem>>, vector<32x32xf32>,
    %c0_92 = arith.constant 0 : index
    %c0_93 = arith.constant 0 : index
    %165 = vector.load %arg10[%c0_92, %c0_93] : memref<128x64xf32, #tpu.memory_space<vmem>>, vector<32x64xf32>
    %c0_94 = arith.constant 0 : index
    %c0_95 = arith.constant 0 : index
    %166 = vector.load %arg11[%c0_94, %c0_95] : memref<128x64xf32, #tpu.memory_space<vmem>>, vector<32x64xf32>
    %c0_96 = arith.constant 0 : index
    %c0_97 = arith.constant 0 : index
    %167 = vector.load %arg12[%c0_96, %c0_97] : memref<128x64xf32, #tpu.memory_space<vmem>>, vector<32x64xf32>
    %c0_98 = arith.constant 0 : index
    %c0_99 = arith.constant 0 : index
    %168 = vector.load %arg4[%c0_98, %c0_99] : memref<64x160xf32, #tpu.memory_space<vmem>>, vector<64x160xf32>
    %cst_100 = arith.constant dense<0.000000e+00> : vector<32x160xf32>
    %169 = tpu.matmul %165, %168, %cst_100 {dimension_numbers = #tpu.dot_dimension_numbers<[1], [0], [0], [1], [0, 0, 1, 1], [], []>} : vector<32x64xf32>, vector<64x160xf32>, vector<32x160xf32> -> vector<32x160xf32>
    %c0_101 = arith.constant 0 : index
    %c0_102 = arith.constant 0 : index
    %170 = vector.load %arg5[%c0_101, %c0_102] : memref<1x160xf32, #tpu.memory_space<vmem>>, vector<1x160xf32>
    %171 = vector.broadcast %170 : vector<1x160xf32> to vector<32x160xf32>
    %172 = arith.addf %169, %171 : vector<32x160xf32>
    %173 = vector.extract_strided_slice %172 {offsets = [0, 0], sizes = [32, 64], strides = [1, 1]} : vector<32x160xf32> to vector<32x64xf32>
    %cst_103 = arith.constant 5.000000e-01 : f32
    %174 = vector.broadcast %cst_103 : f32 to vector<32x64xf32>
    %175 = arith.mulf %174, %173 : vector<32x64xf32>
    %176 = math.tanh %175 : vector<32x64xf32>
    %cst_104 = arith.constant 5.000000e-01 : f32
    %177 = vector.broadcast %cst_104 : f32 to vector<32x64xf32>
    %178 = arith.mulf %177, %176 : vector<32x64xf32>
    %cst_105 = arith.constant 5.000000e-01 : f32
    %179 = vector.broadcast %cst_105 : f32 to vector<32x64xf32>
    %180 = arith.addf %178, %179 : vector<32x64xf32>
    %181 = arith.mulf %180, %166 : vector<32x64xf32>
    %182 = vector.extract_strided_slice %181 {offsets = [0, 0], sizes = [32, 32], strides = [1, 1]} : vector<32x64xf32> to vector<32x32xf32>
    %183 = vector.extract_strided_slice %181 {offsets = [0, 32], sizes = [32, 32], strides = [1, 1]} : vector<32x64xf32> to vector<32x32xf32>
    %184 = arith.addf %182, %183 : vector<32x32xf32>
    %185 = vector.extract_strided_slice %167 {offsets = [0, 0], sizes = [32, 32], strides = [1, 1]} : vector<32x64xf32> to vector<32x32xf32>
    %186 = vector.extract_strided_slice %167 {offsets = [0, 32], sizes = [32, 32], strides = [1, 1]} : vector<32x64xf32> to vector<32x32xf32>
    %187 = arith.maximumf %185, %186 : vector<32x32xf32>
    %188 = vector.extract_strided_slice %172 {offsets = [0, 64], sizes = [32, 32], strides = [1, 1]} : vector<32x160xf32> to vector<32x32xf32>
    %189 = vector.extract_strided_slice %172 {offsets = [0, 96], sizes = [32, 32], strides = [1, 1]} : vector<32x160xf32> to vector<32x32xf32>
    %190 = vector.extract_strided_slice %172 {offsets = [0, 128], sizes = [32, 32], strides = [1, 1]} : vector<32x160xf32> to vector<32x32xf32>
    %cst_106 = arith.constant 5.000000e-01 : f32
    %191 = vector.broadcast %cst_106 : f32 to vector<32x32xf32>
    %192 = arith.mulf %191, %188 : vector<32x32xf32>
    %193 = math.tanh %192 : vector<32x32xf32>
    %cst_107 = arith.constant 5.000000e-01 : f32
    %194 = vector.broadcast %cst_107 : f32 to vector<32x32xf32>
    %195 = arith.mulf %194, %193 : vector<32x32xf32>
    %cst_108 = arith.constant 5.000000e-01 : f32
    %196 = vector.broadcast %cst_108 : f32 to vector<32x32xf32>
    %197 = arith.addf %195, %196 : vector<32x32xf32>
    %cst_109 = arith.constant 5.000000e-01 : f32
    %198 = vector.broadcast %cst_109 : f32 to vector<32x32xf32>
    %199 = arith.mulf %198, %189 : vector<32x32xf32>
    %200 = math.tanh %199 : vector<32x32xf32>
    %cst_110 = arith.constant 5.000000e-01 : f32
    %201 = vector.broadcast %cst_110 : f32 to vector<32x32xf32>
    %202 = arith.mulf %201, %200 : vector<32x32xf32>
    %cst_111 = arith.constant 5.000000e-01 : f32
    %203 = vector.broadcast %cst_111 : f32 to vector<32x32xf32>
    %204 = arith.addf %202, %203 : vector<32x32xf32>
    %205 = math.tanh %190 : vector<32x32xf32>
    %206 = arith.mulf %197, %205 : vector<32x32xf32>
    %207 = arith.addf %206, %184 : vector<32x32xf32>
    %208 = math.tanh %207 : vector<32x32xf32>
    %209 = arith.mulf %204, %208 : vector<32x32xf32>
    %210 = arith.maximumf %209, %187 : vector<32x32xf32>
    %211 = arith.addf %209, %210 : vector<32x32xf32>
    %c448 = arith.constant 448 : index
    %c0_112 = arith.constant 0 : index
    %212 = vector.load %arg9[%c448, %c0_112] : memref<480x32xf32, #tpu.memory_space<vmem>>, vector<32x32xf32>
    tpu.vector_store %arg9[%c448, %c0_112], %211 {strides = array<i32>} : memref<480x32xf32, #tpu.memory_space<vmem>>, vector<32x32xf32>,
    %c0_113 = arith.constant 0 : index
    %c0_114 = arith.constant 0 : index
    %213 = vector.load %arg9[%c0_113, %c0_114] : memref<480x32xf32, #tpu.memory_space<vmem>>, vector<480x32xf32>
    %c0_115 = arith.constant 0 : index
    %c0_116 = arith.constant 0 : index
    %214 = vector.load %arg6[%c0_115, %c0_116] : memref<32x128xf32, #tpu.memory_space<vmem>>, vector<32x128xf32>
    %cst_117 = arith.constant dense<0.000000e+00> : vector<480x128xf32>
    %215 = tpu.matmul %213, %214, %cst_117 {dimension_numbers = #tpu.dot_dimension_numbers<[1], [0], [0], [1], [0, 0, 1, 1], [], []>} : vector<480x32xf32>, vector<32x128xf32>, vector<480x128xf32> -> vector<480x128xf32>
    %c0_118 = arith.constant 0 : index
    %c0_119 = arith.constant 0 : index
    %216 = vector.load %arg7[%c0_118, %c0_119] : memref<1x128xf32, #tpu.memory_space<vmem>>, vector<1x128xf32>
    %217 = vector.broadcast %216 : vector<1x128xf32> to vector<480x128xf32>
    %218 = arith.addf %215, %217 : vector<480x128xf32>
    %c0_120 = arith.constant 0 : index
    %c0_121 = arith.constant 0 : index
    %219 = vector.load %arg8[%c0_120, %c0_121] : memref<480x128xf32, #tpu.memory_space<vmem>>, vector<480x128xf32>
    tpu.vector_store %arg8[%c0_120, %c0_121], %218 {strides = array<i32>} : memref<480x128xf32, #tpu.memory_space<vmem>>, vector<480x128xf32>,
    return
  }
  func.func @transform_0(%arg0: i32) -> (i32, i32) {
    %c0_i32 = arith.constant 0 : i32
    %c0_i32_0 = arith.constant 0 : i32
    return %arg0, %c0_i32 : i32, i32
  }
  func.func @transform_1(%arg0: i32) -> (i32, i32) {
    %c0_i32 = arith.constant 0 : i32
    %c0_i32_0 = arith.constant 0 : i32
    %c0_i32_1 = arith.constant 0 : i32
    return %c0_i32, %c0_i32_0 : i32, i32
  }
  func.func @transform_2(%arg0: i32) -> (i32, i32) {
    %c0_i32 = arith.constant 0 : i32
    %c0_i32_0 = arith.constant 0 : i32
    %c0_i32_1 = arith.constant 0 : i32
    return %c0_i32, %c0_i32_0 : i32, i32
  }
  func.func @transform_3(%arg0: i32) -> (i32, i32) {
    %c0_i32 = arith.constant 0 : i32
    %c0_i32_0 = arith.constant 0 : i32
    %c0_i32_1 = arith.constant 0 : i32
    return %c0_i32, %c0_i32_0 : i32, i32
  }
  func.func @transform_4(%arg0: i32) -> (i32, i32) {
    %c0_i32 = arith.constant 0 : i32
    %c0_i32_0 = arith.constant 0 : i32
    %c0_i32_1 = arith.constant 0 : i32
    return %c0_i32, %c0_i32_0 : i32, i32
  }
  func.func @transform_5(%arg0: i32) -> (i32, i32) {
    %c0_i32 = arith.constant 0 : i32
    %c0_i32_0 = arith.constant 0 : i32
    %c0_i32_1 = arith.constant 0 : i32
    return %c0_i32, %c0_i32_0 : i32, i32
  }
  func.func @transform_6(%arg0: i32) -> (i32, i32) {
    %c0_i32 = arith.constant 0 : i32
    %c0_i32_0 = arith.constant 0 : i32
    %c0_i32_1 = arith.constant 0 : i32
    return %c0_i32, %c0_i32_0 : i32, i32
  }
  func.func @transform_7(%arg0: i32) -> (i32, i32) {
    %c0_i32 = arith.constant 0 : i32
    %c0_i32_0 = arith.constant 0 : i32
    return %arg0, %c0_i32 : i32, i32
  }
}

</mosaic_0001>

<llo_original>
// kernel: tree_lstm_forward.1
$region0: #{tree_lstm_forward.1}
  #allocation0 [shape = 'u32[]', space=smem, size = 0x4, offset = 0x4, fixed_abs, tag = 'smem constant byte address 0x4 - core index']
  #allocation1 [shape = 'u32[72,128]{1,0:T(1,128)}', space=vmem, size = 0x9000, scoped, tag = 'internal scratch']
  #allocation2 [shape = 'f32[480,32]{1,0:T(8,128)}', space=vmem, size = 0x3c000, scoped, tag = 'scratch operand']
  #allocation3 [shape = 'f32[128,64]{1,0:T(8,128)}', space=vmem, size = 0x10000, scoped, tag = 'scratch operand']
  #allocation4 [shape = 'f32[128,64]{1,0:T(8,128)}', space=vmem, size = 0x10000, scoped, tag = 'scratch operand']
  #allocation5 [shape = 'f32[128,64]{1,0:T(8,128)}', space=vmem, size = 0x10000, scoped, tag = 'scratch operand']
  %s0 = inlined_call_operand.vmem [shape: f32[512,32], index: 0, kind: input, shape index: {}]
  %s1 = inlined_call_operand.vmem [shape: f32[32,96], index: 1, kind: input, shape index: {}]
  %s2 = inlined_call_operand.vmem [shape: f32[1,96], index: 2, kind: input, shape index: {}]
  %s3 = inlined_call_operand.vmem [shape: f32[64,160], index: 3, kind: input, shape index: {}]
  %s4 = inlined_call_operand.vmem [shape: f32[1,160], index: 4, kind: input, shape index: {}]
  %s5 = inlined_call_operand.vmem [shape: f32[32,128], index: 5, kind: input, shape index: {}]
  %s6 = inlined_call_operand.vmem [shape: f32[1,128], index: 6, kind: input, shape index: {}]
  %s7 = inlined_call_operand.vmem [shape: f32[960,128], index: 7, kind: output, shape index: {}]
  %s8 = sld [smem:[#allocation0]]
  $region61: #{tree_lstm_forward.1} parent=0
    _
  %s10 = ssub.s32 1, %s8
  %s11 = scalar_select 0, %s10, %s8
  loop: start=0, step=1, limit=4
  $region2: #{tree_lstm_forward.1} parent=0 // loop_pre_header
    _
  $region3: #{tree_lstm_forward.1} parent=0 // loop_header
    %s13 = sphi 0, %s17
    %p14 = scmp.ge.s32.totalorder %s13, 4
    %s23 = sphi 0, %s25
    %s26 = sphi 0, %s23
    %s27 = sphi 0, %s26
    %s43 = sphi 0, %s27
    %s47 = sphi 0, %s47
    %s49 = sphi 0, %s47
    %s50 = sphi 0, %s49
    %s64 = sphi 0, %s50
    %s68 = sphi 0, %s68
    %s70 = sphi 0, %s68
    %s71 = sphi 0, %s70
    %s85 = sphi 0, %s71
    %s89 = sphi 0, %s89
    %s91 = sphi 0, %s89
    %s92 = sphi 0, %s91
    %s106 = sphi 0, %s92
    %s110 = sphi 0, %s110
    %s112 = sphi 0, %s110
    %s113 = sphi 0, %s112
    %s127 = sphi 0, %s113
    %s131 = sphi 0, %s131
    %s133 = sphi 0, %s131
    %s134 = sphi 0, %s133
    %s148 = sphi 0, %s134
    %s152 = sphi 0, %s152
    %s154 = sphi 0, %s152
    %s155 = sphi 0, %s154
    %s169 = sphi 0, %s155
    %s175 = sphi 0, %s177
    %s178 = sphi 0, %s175
    %s179 = sphi 0, %s178
    %s195 = sphi 0, %s179
  $region4: #{tree_lstm_forward.1} parent=0 // loop_header_branch
    %16 = sbr.rel (%p14) target = $region8
  $region5: #{tree_lstm_forward.1} parent=0 // loop_body
    %s18 = ssub.s32 %s13, 1
    %s19 = ssub.s32 %s13, 2
    %s20 = sadd.s32 %s13, 1
    %s21 = ssub.s32 %s13, %s20
    %p22 = scmp.eq.s32.totalorder %s21, 0
    %s24 = sadd.s32 %s23, 1
    %s25 = scalar_select %p22, %s23, %s24
    %p28 = pneg %p22
    %p29 = scmp.eq.s32.totalorder %s13, 1
    %p30 = por %p28, %p29
    %p31 = scmp.ne.s32.totalorder %s23, %s26
    %p32 = scmp.eq.s32.totalorder %s13, 0
    %p33 = por %p31, %p32
    %p34 = scmp.ne.s32.totalorder %s23, %s26
    %p35 = scmp.eq.s32.totalorder %s18, 1
    %p36 = por %p34, %p35
    %p37 = scmp.ne.s32.totalorder %s26, %s27
    %p38 = scmp.eq.s32.totalorder %s18, 0
    %p39 = por %p37, %p38
    %p40 = scmp.ne.s32.totalorder %s26, %s27
    %p41 = scmp.eq.s32.totalorder %s19, 1
    %p42 = por %p40, %p41
    %p44 = scmp.ne.s32.totalorder %s27, %s43
    %p45 = scmp.eq.s32.totalorder %s19, 0
    %p46 = por %p44, %p45
    %s48 = sadd.s32 %s47, 1
    %p51 = scmp.eq.s32.totalorder %s13, 1
    %p52 = scmp.ne.s32.totalorder %s47, %s49
    %p53 = scmp.eq.s32.totalorder %s13, 0
    %p54 = por %p52, %p53
    %p55 = scmp.ne.s32.totalorder %s47, %s49
    %p56 = scmp.eq.s32.totalorder %s18, 1
    %p57 = por %p55, %p56
    %p58 = scmp.ne.s32.totalorder %s49, %s50
    %p59 = scmp.eq.s32.totalorder %s18, 0
    %p60 = por %p58, %p59
    %p61 = scmp.ne.s32.totalorder %s49, %s50
    %p62 = scmp.eq.s32.totalorder %s19, 1
    %p63 = por %p61, %p62
    %p65 = scmp.ne.s32.totalorder %s50, %s64
    %p66 = scmp.eq.s32.totalorder %s19, 0
    %p67 = por %p65, %p66
    %s69 = sadd.s32 %s68, 1
    %p72 = scmp.eq.s32.totalorder %s13, 1
    %p73 = scmp.ne.s32.totalorder %s68, %s70
    %p74 = scmp.eq.s32.totalorder %s13, 0
    %p75 = por %p73, %p74
    %p76 = scmp.ne.s32.totalorder %s68, %s70
    %p77 = scmp.eq.s32.totalorder %s18, 1
    %p78 = por %p76, %p77
    %p79 = scmp.ne.s32.totalorder %s70, %s71
    %p80 = scmp.eq.s32.totalorder %s18, 0
    %p81 = por %p79, %p80
    %p82 = scmp.ne.s32.totalorder %s70, %s71
    %p83 = scmp.eq.s32.totalorder %s19, 1
    %p84 = por %p82, %p83
    %p86 = scmp.ne.s32.totalorder %s71, %s85
    %p87 = scmp.eq.s32.totalorder %s19, 0
    %p88 = por %p86, %p87
    %s90 = sadd.s32 %s89, 1
    %p93 = scmp.eq.s32.totalorder %s13, 1
    %p94 = scmp.ne.s32.totalorder %s89, %s91
    %p95 = scmp.eq.s32.totalorder %s13, 0
    %p96 = por %p94, %p95
    %p97 = scmp.ne.s32.totalorder %s89, %s91
    %p98 = scmp.eq.s32.totalorder %s18, 1
    %p99 = por %p97, %p98
    %p100 = scmp.ne.s32.totalorder %s91, %s92
    %p101 = scmp.eq.s32.totalorder %s18, 0
    %p102 = por %p100, %p101
    %p103 = scmp.ne.s32.totalorder %s91, %s92
    %p104 = scmp.eq.s32.totalorder %s19, 1
    %p105 = por %p103, %p104
    %p107 = scmp.ne.s32.totalorder %s92, %s106
    %p108 = scmp.eq.s32.totalorder %s19, 0
    %p109 = por %p107, %p108
    %s111 = sadd.s32 %s110, 1
    %p114 = scmp.eq.s32.totalorder %s13, 1
    %p115 = scmp.ne.s32.totalorder %s110, %s112
    %p116 = scmp.eq.s32.totalorder %s13, 0
    %p117 = por %p115, %p116
    %p118 = scmp.ne.s32.totalorder %s110, %s112
    %p119 = scmp.eq.s32.totalorder %s18, 1
    %p120 = por %p118, %p119
    %p121 = scmp.ne.s32.totalorder %s112, %s113
    %p122 = scmp.eq.s32.totalorder %s18, 0
    %p123 = por %p121, %p122
    %p124 = scmp.ne.s32.totalorder %s112, %s113
    %p125 = scmp.eq.s32.totalorder %s19, 1
    %p126 = por %p124, %p125
    %p128 = scmp.ne.s32.totalorder %s113, %s127
    %p129 = scmp.eq.s32.totalorder %s19, 0
    %p130 = por %p128, %p129
    %s132 = sadd.s32 %s131, 1
    %p135 = scmp.eq.s32.totalorder %s13, 1
    %p136 = scmp.ne.s32.totalorder %s131, %s133
    %p137 = scmp.eq.s32.totalorder %s13, 0
    %p138 = por %p136, %p137
    %p139 = scmp.ne.s32.totalorder %s131, %s133
    %p140 = scmp.eq.s32.totalorder %s18, 1
    %p141 = por %p139, %p140
    %p142 = scmp.ne.s32.totalorder %s133, %s134
    %p143 = scmp.eq.s32.totalorder %s18, 0
    %p144 = por %p142, %p143
    %p145 = scmp.ne.s32.totalorder %s133, %s134
    %p146 = scmp.eq.s32.totalorder %s19, 1
    %p147 = por %p145, %p146
    %p149 = scmp.ne.s32.totalorder %s134, %s148
    %p150 = scmp.eq.s32.totalorder %s19, 0
    %p151 = por %p149, %p150
    %s153 = sadd.s32 %s152, 1
    %p156 = scmp.eq.s32.totalorder %s13, 1
    %p157 = scmp.ne.s32.totalorder %s152, %s154
    %p158 = scmp.eq.s32.totalorder %s13, 0
    %p159 = por %p157, %p158
    %p160 = scmp.ne.s32.totalorder %s152, %s154
    %p161 = scmp.eq.s32.totalorder %s18, 1
    %p162 = por %p160, %p161
    %p163 = scmp.ne.s32.totalorder %s154, %s155
    %p164 = scmp.eq.s32.totalorder %s18, 0
    %p165 = por %p163, %p164
    %p166 = scmp.ne.s32.totalorder %s154, %s155
    %p167 = scmp.eq.s32.totalorder %s19, 1
    %p168 = por %p166, %p167
    %p170 = scmp.ne.s32.totalorder %s155, %s169
    %p171 = scmp.eq.s32.totalorder %s19, 0
    %p172 = por %p170, %p171
    %s173 = ssub.s32 %s13, %s20
    %p174 = scmp.eq.s32.totalorder %s173, 0
    %s176 = sadd.s32 %s175, 1
    %s177 = scalar_select %p174, %s175, %s176
    %p180 = pneg %p174
    %p181 = scmp.eq.s32.totalorder %s13, 1
    %p182 = por %p180, %p181
    %p183 = scmp.ne.s32.totalorder %s175, %s178
    %p184 = scmp.eq.s32.totalorder %s13, 0
    %p185 = por %p183, %p184
    %p186 = scmp.ne.s32.totalorder %s175, %s178
    %p187 = scmp.eq.s32.totalorder %s18, 1
    %p188 = por %p186, %p187
    %p189 = scmp.ne.s32.totalorder %s178, %s179
    %p190 = scmp.eq.s32.totalorder %s18, 0
    %p191 = por %p189, %p190
    %p192 = scmp.ne.s32.totalorder %s178, %s179
    %p193 = scmp.eq.s32.totalorder %s19, 1
    %p194 = por %p192, %p193
    %p196 = scmp.ne.s32.totalorder %s179, %s195
    %p197 = scmp.eq.s32.totalorder %s19, 0
    %p198 = por %p196, %p197
    %p199 = scmp.le.s32.totalorder 1, %s13
    %p200 = scmp.lt.s32.totalorder %s13, 3
    %p201 = pnand %p199, %p200
    %p202 = pneg %p201
    // Predicated region
    $region9: #{tree_lstm_forward.1} parent=5 // pred_check
      _
    $region10: #{tree_lstm_forward.1} parent=5 // pred_check_branch
      %204 = sbr.rel (%p201) target = $region12
    $region11: #{tree_lstm_forward.1} parent=5 // pred_region
      %s205 = ssub.s32 %s13, 1
      // Predicated region
      $region13: #{tree_lstm_forward.1} parent=11 // pred_check
        %p206 = pneg %p60
      $region14: #{tree_lstm_forward.1} parent=11 // pred_check_branch
        %208 = sbr.rel (%p206) target = $region16
      $region15: #{tree_lstm_forward.1} parent=11 // pred_region
        _
      $region16: #{tree_lstm_forward.1} parent=11 // pred_fallthru
        _
      // Predicated region
      $region17: #{tree_lstm_forward.1} parent=11 // pred_check
        %p209 = pneg %p81
      $region18: #{tree_lstm_forward.1} parent=11 // pred_check_branch
        %211 = sbr.rel (%p209) target = $region20
      $region19: #{tree_lstm_forward.1} parent=11 // pred_region
        _
      $region20: #{tree_lstm_forward.1} parent=11 // pred_fallthru
        _
      // Predicated region
      $region21: #{tree_lstm_forward.1} parent=11 // pred_check
        %p212 = pneg %p102
      $region22: #{tree_lstm_forward.1} parent=11 // pred_check_branch
        %214 = sbr.rel (%p212) target = $region24
      $region23: #{tree_lstm_forward.1} parent=11 // pred_region
        _
      $region24: #{tree_lstm_forward.1} parent=11 // pred_fallthru
        _
      // Predicated region
      $region25: #{tree_lstm_forward.1} parent=11 // pred_check
        %p215 = pneg %p123
      $region26: #{tree_lstm_forward.1} parent=11 // pred_check_branch
        %217 = sbr.rel (%p215) target = $region28
      $region27: #{tree_lstm_forward.1} parent=11 // pred_region
        _
      $region28: #{tree_lstm_forward.1} parent=11 // pred_fallthru
        _
      // Predicated region
      $region29: #{tree_lstm_forward.1} parent=11 // pred_check
        %p218 = pneg %p144
      $region30: #{tree_lstm_forward.1} parent=11 // pred_check_branch
        %220 = sbr.rel (%p218) target = $region32
      $region31: #{tree_lstm_forward.1} parent=11 // pred_region
        _
      $region32: #{tree_lstm_forward.1} parent=11 // pred_fallthru
        _
      // Predicated region
      $region33: #{tree_lstm_forward.1} parent=11 // pred_check
        %p221 = pneg %p165
      $region34: #{tree_lstm_forward.1} parent=11 // pred_check_branch
        %223 = sbr.rel (%p221) target = $region36
      $region35: #{tree_lstm_forward.1} parent=11 // pred_region
        _
      $region36: #{tree_lstm_forward.1} parent=11 // pred_fallthru
        _
    $region12: #{tree_lstm_forward.1} parent=5 // pred_fallthru
      _
    %p224 = scmp.lt.s32.totalorder %s13, 2
    // Predicated region
    $region37: #{tree_lstm_forward.1} parent=5 // pred_check
      %p225 = pneg %p224
    $region38: #{tree_lstm_forward.1} parent=5 // pred_check_branch
      %227 = sbr.rel (%p225) target = $region40
    $region39: #{tree_lstm_forward.1} parent=5 // pred_region
      // Predicated region
      $region41: #{tree_lstm_forward.1} parent=39 // pred_check
        %p228 = pneg %p33
      $region42: #{tree_lstm_forward.1} parent=39 // pred_check_branch
        %230 = sbr.rel (%p228) target = $region44
      $region43: #{tree_lstm_forward.1} parent=39 // pred_region
        %s231 = smul.u32 32, %s13
        %p232 = scmp.lt.s32.totalorder %s231, 63
        %s233 = scalar_select %p232, %s231, 63
        %s234 = smul.addr %s233, 8
        %s235 = scalar_lea.vmem %s0, %s234
        %s236 = smul.u32 32, %s13
      $region44: #{tree_lstm_forward.1} parent=39 // pred_fallthru
        _
    $region40: #{tree_lstm_forward.1} parent=5 // pred_fallthru
      _
    %p237 = scmp.le.s32.totalorder 1, %s13
    %p238 = scmp.lt.s32.totalorder %s13, 3
    %p239 = pnand %p237, %p238
    %p240 = pneg %p239
    // Predicated region
    $region45: #{tree_lstm_forward.1} parent=5 // pred_check
      _
    $region46: #{tree_lstm_forward.1} parent=5 // pred_check_branch
      %242 = sbr.rel (%p239) target = $region48
    $region47: #{tree_lstm_forward.1} parent=5 // pred_region
      %s243 = ssub.s32 %s13, 1
      %s244 = smul.u32 32, %s18
      %p245 = scmp.lt.s32.totalorder %s244, 63
      %s246 = scalar_select %p245, %s244, 63
      %s247 = smul.addr %s246, 8
      %s248 = scalar_lea.vmem %s0, %s247
      %p249 = pneg %p39
      %p250 = pneg %p36
      %p251 = pneg %p60
      %p252 = pneg %p57
      %p253 = pneg %p81
      %p254 = pneg %p78
      %p255 = pneg %p102
      %p256 = pneg %p99
      %p257 = pneg %p123
      %p258 = pneg %p120
      %p259 = pneg %p144
      %p260 = pneg %p141
      %p261 = pneg %p165
      %p262 = pneg %p162
      %p263 = pneg %p191
      %p264 = pneg %p188
      %s265 = smul.u32 60, %s18
      %p266 = scmp.lt.s32.totalorder %s265, 119
      %s267 = scalar_select %p266, %s265, 119
      %s268 = smul.addr %s267, 8
      %s269 = scalar_lea.vmem %s7, %s268
      %s270 = smul.u32 32, %s18
      %p271 = scmp.lt.s32.totalorder %s270, 63
      %s272 = scalar_select %p271, %s270, 63
      %s273 = smul.addr %s272, 8
      %s274 = scalar_lea.vmem %s0, %s273
      %s275 = smul.u32 32, %s18
      %s276 = smul.u32 60, %s18
      %p277 = scmp.lt.s32.totalorder %s276, 119
      %s278 = scalar_select %p277, %s276, 119
      %s279 = smul.addr %s278, 8
      %s280 = scalar_lea.vmem %s7, %s279
      %s281 = smul.u32 60, %s18
      %v282 = vld [vmem:[%s274] sm:$0xff]
      %v283 = vld [vmem:[%s274 + $0x8] sm:$0xff]
      %v284 = vld [vmem:[%s274 + $0x10] sm:$0xff]
      %v285 = vld [vmem:[%s274 + $0x18] sm:$0xff]
      %v286 = vld [vmem:[%s274 + $0x20] sm:$0xff]
      %v287 = vld [vmem:[%s274 + $0x28] sm:$0xff]
      %v288 = vld [vmem:[%s274 + $0x30] sm:$0xff]
      %v289 = vld [vmem:[%s274 + $0x38] sm:$0xff]
      %v290 = vld [vmem:[%s274 + $0x40] sm:$0xff]
      %v291 = vld [vmem:[%s274 + $0x48] sm:$0xff]
      %v292 = vld [vmem:[%s274 + $0x50] sm:$0xff]
      %v293 = vld [vmem:[%s274 + $0x58] sm:$0xff]
      %v294 = vld [vmem:[%s274 + $0x60] sm:$0xff]
      %v295 = vld [vmem:[%s274 + $0x68] sm:$0xff]
      %v296 = vld [vmem:[%s274 + $0x70] sm:$0xff]
      %v297 = vld [vmem:[%s274 + $0x78] sm:$0xff]
      %v298 = vld [vmem:[%s274 + $0x80] sm:$0xff]
      %v299 = vld [vmem:[%s274 + $0x88] sm:$0xff]
      %v300 = vld [vmem:[%s274 + $0x90] sm:$0xff]
      %v301 = vld [vmem:[%s274 + $0x98] sm:$0xff]
      %v302 = vld [vmem:[%s274 + $0xa0] sm:$0xff]
      %v303 = vld [vmem:[%s274 + $0xa8] sm:$0xff]
      %v304 = vld [vmem:[%s274 + $0xb0] sm:$0xff]
      %v305 = vld [vmem:[%s274 + $0xb8] sm:$0xff]
      %v306 = vld [vmem:[%s274 + $0xc0] sm:$0xff]
      %v307 = vld [vmem:[%s274 + $0xc8] sm:$0xff]
      %v308 = vld [vmem:[%s274 + $0xd0] sm:$0xff]
      %v309 = vld [vmem:[%s274 + $0xd8] sm:$0xff]
      %v310 = vld [vmem:[%s274 + $0xe0] sm:$0xff]
      %v311 = vld [vmem:[%s274 + $0xe8] sm:$0xff]
      %v312 = vld [vmem:[%s274 + $0xf0] sm:$0xff]
      %v313 = vld [vmem:[%s274 + $0xf8] sm:$0xff]
      %v314 = vld [vmem:[%s1] sm:$0xff]
      %v315 = vld [vmem:[%s1 + $0x8] sm:$0xff]
      %v316 = vld [vmem:[%s1 + $0x10] sm:$0xff]
      %v317 = vld [vmem:[%s1 + $0x18] sm:$0xff]
      %v318 = vld [vmem:[%s2] sm:$0x1]
      %v320 = vperm.slane %v318, 0
      %vm322 = vcmask 261120
      %v324 = vsel %vm322, %v282, 0
      %v327 = vsel %vm322, %v283, 0
      %v330 = vsel %vm322, %v284, 0
      %v333 = vsel %vm322, %v285, 0
      %v336 = vsel %vm322, %v286, 0
      %v339 = vsel %vm322, %v287, 0
      %v342 = vsel %vm322, %v288, 0
      %v345 = vsel %vm322, %v289, 0
      %v348 = vsel %vm322, %v290, 0
      %v351 = vsel %vm322, %v291, 0
      %v354 = vsel %vm322, %v292, 0
      %v357 = vsel %vm322, %v293, 0
      %v360 = vsel %vm322, %v294, 0
      %v363 = vsel %vm322, %v295, 0
      %v366 = vsel %vm322, %v296, 0
      %v369 = vsel %vm322, %v297, 0
      %v372 = vsel %vm322, %v298, 0
      %v375 = vsel %vm322, %v299, 0
      %v378 = vsel %vm322, %v300, 0
      %v381 = vsel %vm322, %v301, 0
      %v384 = vsel %vm322, %v302, 0
      %v387 = vsel %vm322, %v303, 0
      %v390 = vsel %vm322, %v304, 0
      %v393 = vsel %vm322, %v305, 0
      %v396 = vsel %vm322, %v306, 0
      %v399 = vsel %vm322, %v307, 0
      %v402 = vsel %vm322, %v308, 0
      %v405 = vsel %vm322, %v309, 0
      %v408 = vsel %vm322, %v310, 0
      %v411 = vsel %vm322, %v311, 0
      %v414 = vsel %vm322, %v312, 0
      %v417 = vsel %vm322, %v313, 0
      %419 = vmatpush.msra.mxu0 0.0
      %420 = vmatpush.msra.mxu0 0.0
      %421 = vmatpush.msra.mxu0 0.0
      %422 = vmatpush.msra.mxu0 0.0
      %423 = vmatpush.msra.mxu0 0.0
      %424 = vmatpush.msra.mxu0 0.0
      %425 = vmatpush.msra.mxu0 0.0
      %426 = vmatpush.msra.mxu0 0.0
      %427 = vmatpush.msra.mxu0 0.0
      %428 = vmatpush.msra.mxu0 0.0
      %429 = vmatpush.msra.mxu0 0.0
      %430 = vmatpush.msra.mxu0 0.0
      %431 = vmatpush.msra.mxu0 %v317
      %432 = vmatpush.msra.mxu0 %v316
      %433 = vmatpush.msra.mxu0 %v315
      %434 = vmatpush.msra.mxu0 %v314
      %435 = vmatmul.f32.gmra.mxu0 %v324
      %v436 = vpop.f32.mrf.mxu0
      %v437 = vadd.f32 %v320, %v436
      %438 = vmatmul.f32.gmra.mxu0 %v327
      %v439 = vpop.f32.mrf.mxu0
      %v440 = vadd.f32 %v320, %v439
      %441 = vmatmul.f32.gmra.mxu0 %v330
      %v442 = vpop.f32.mrf.mxu0
      %v443 = vadd.f32 %v320, %v442
      %444 = vmatmul.f32.gmra.mxu0 %v333
      %v445 = vpop.f32.mrf.mxu0
      %v446 = vadd.f32 %v320, %v445
      %447 = vmatmul.f32.gmra.mxu0 %v336
      %v448 = vpop.f32.mrf.mxu0
      %v449 = vadd.f32 %v320, %v448
      %450 = vmatmul.f32.gmra.mxu0 %v339
      %v451 = vpop.f32.mrf.mxu0
      %v452 = vadd.f32 %v320, %v451
      %453 = vmatmul.f32.gmra.mxu0 %v342
      %v454 = vpop.f32.mrf.mxu0
      %v455 = vadd.f32 %v320, %v454
      %456 = vmatmul.f32.gmra.mxu0 %v345
      %v457 = vpop.f32.mrf.mxu0
      %v458 = vadd.f32 %v320, %v457
      %459 = vmatmul.f32.gmra.mxu0 %v348
      %v460 = vpop.f32.mrf.mxu0
      %v461 = vadd.f32 %v320, %v460
      %462 = vmatmul.f32.gmra.mxu0 %v351
      %v463 = vpop.f32.mrf.mxu0
      %v464 = vadd.f32 %v320, %v463
      %465 = vmatmul.f32.gmra.mxu0 %v354
      %v466 = vpop.f32.mrf.mxu0
      %v467 = vadd.f32 %v320, %v466
      %468 = vmatmul.f32.gmra.mxu0 %v357
      %v469 = vpop.f32.mrf.mxu0
      %v470 = vadd.f32 %v320, %v469
      %471 = vmatmul.f32.gmra.mxu0 %v360
      %v472 = vpop.f32.mrf.mxu0
      %v473 = vadd.f32 %v320, %v472
      %474 = vmatmul.f32.gmra.mxu0 %v363
      %v475 = vpop.f32.mrf.mxu0
      %v476 = vadd.f32 %v320, %v475
      %477 = vmatmul.f32.gmra.mxu0 %v366
      %v478 = vpop.f32.mrf.mxu0
      %v479 = vadd.f32 %v320, %v478
      %480 = vmatmul.f32.gmra.mxu0 %v369
      %v481 = vpop.f32.mrf.mxu0
      %v482 = vadd.f32 %v320, %v481
      %483 = vmatmul.f32.gmra.mxu0 %v372
      %v484 = vpop.f32.mrf.mxu0
      %v485 = vadd.f32 %v320, %v484
      %486 = vmatmul.f32.gmra.mxu0 %v375
      %v487 = vpop.f32.mrf.mxu0
      %v488 = vadd.f32 %v320, %v487
      %489 = vmatmul.f32.gmra.mxu0 %v378
      %v490 = vpop.f32.mrf.mxu0
      %v491 = vadd.f32 %v320, %v490
      %492 = vmatmul.f32.gmra.mxu0 %v381
      %v493 = vpop.f32.mrf.mxu0
      %v494 = vadd.f32 %v320, %v493
      %495 = vmatmul.f32.gmra.mxu0 %v384
      %v496 = vpop.f32.mrf.mxu0
      %v497 = vadd.f32 %v320, %v496
      %498 = vmatmul.f32.gmra.mxu0 %v387
      %v499 = vpop.f32.mrf.mxu0
      %v500 = vadd.f32 %v320, %v499
      %501 = vmatmul.f32.gmra.mxu0 %v390
      %v502 = vpop.f32.mrf.mxu0
      %v503 = vadd.f32 %v320, %v502
      %504 = vmatmul.f32.gmra.mxu0 %v393
      %v505 = vpop.f32.mrf.mxu0
      %v506 = vadd.f32 %v320, %v505
      %507 = vmatmul.f32.gmra.mxu0 %v396
      %v508 = vpop.f32.mrf.mxu0
      %v509 = vadd.f32 %v320, %v508
      %510 = vmatmul.f32.gmra.mxu0 %v399
      %v511 = vpop.f32.mrf.mxu0
      %v512 = vadd.f32 %v320, %v511
      %513 = vmatmul.f32.gmra.mxu0 %v402
      %v514 = vpop.f32.mrf.mxu0
      %v515 = vadd.f32 %v320, %v514
      %516 = vmatmul.f32.gmra.mxu0 %v405
      %v517 = vpop.f32.mrf.mxu0
      %v518 = vadd.f32 %v320, %v517
      %519 = vmatmul.f32.gmra.mxu0 %v408
      %v520 = vpop.f32.mrf.mxu0
      %v521 = vadd.f32 %v320, %v520
      %522 = vmatmul.f32.gmra.mxu0 %v411
      %v523 = vpop.f32.mrf.mxu0
      %v524 = vadd.f32 %v320, %v523
      %525 = vmatmul.f32.gmra.mxu0 %v414
      %v526 = vpop.f32.mrf.mxu0
      %v527 = vadd.f32 %v320, %v526
      %528 = vmatmul.f32.gmra.mxu0 %v417
      %v529 = vpop.f32.mrf.mxu0
      %v530 = vadd.f32 %v320, %v529
      %531 = vdwg.mxu0
      %v532 = vmul.f32 %v437, 0.5
      %v533 = vmul.f32 %v440, 0.5
      %v534 = vmul.f32 %v443, 0.5
      %v535 = vmul.f32 %v446, 0.5
      %v536 = vmul.f32 %v449, 0.5
      %v537 = vmul.f32 %v452, 0.5
      %v538 = vmul.f32 %v455, 0.5
      %v539 = vmul.f32 %v458, 0.5
      %v540 = vmul.f32 %v461, 0.5
      %v541 = vmul.f32 %v464, 0.5
      %v542 = vmul.f32 %v467, 0.5
      %v543 = vmul.f32 %v470, 0.5
      %v544 = vmul.f32 %v473, 0.5
      %v545 = vmul.f32 %v476, 0.5
      %v546 = vmul.f32 %v479, 0.5
      %v547 = vmul.f32 %v482, 0.5
      %v548 = vmul.f32 %v485, 0.5
      %v549 = vmul.f32 %v488, 0.5
      %v550 = vmul.f32 %v491, 0.5
      %v551 = vmul.f32 %v494, 0.5
      %v552 = vmul.f32 %v497, 0.5
      %v553 = vmul.f32 %v500, 0.5
      %v554 = vmul.f32 %v503, 0.5
      %v555 = vmul.f32 %v506, 0.5
      %v556 = vmul.f32 %v509, 0.5
      %v557 = vmul.f32 %v512, 0.5
      %v558 = vmul.f32 %v515, 0.5
      %v559 = vmul.f32 %v518, 0.5
      %v560 = vmul.f32 %v521, 0.5
      %v561 = vmul.f32 %v524, 0.5
      %v562 = vmul.f32 %v527, 0.5
      %v563 = vmul.f32 %v530, 0.5
      %v564 = vtanh.pop %v532
      %v565 = vtanh.pop %v533
      %v566 = vtanh.pop %v534
      %v567 = vtanh.pop %v535
      %v568 = vtanh.pop %v536
      %v569 = vtanh.pop %v537
      %v570 = vtanh.pop %v538
      %v571 = vtanh.pop %v539
      %v572 = vtanh.pop %v540
      %v573 = vtanh.pop %v541
      %v574 = vtanh.pop %v542
      %v575 = vtanh.pop %v543
      %v576 = vtanh.pop %v544
      %v577 = vtanh.pop %v545
      %v578 = vtanh.pop %v546
      %v579 = vtanh.pop %v547
      %v580 = vtanh.pop %v548
      %v581 = vtanh.pop %v549
      %v582 = vtanh.pop %v550
      %v583 = vtanh.pop %v551
      %v584 = vtanh.pop %v552
      %v585 = vtanh.pop %v553
      %v586 = vtanh.pop %v554
      %v587 = vtanh.pop %v555
      %v588 = vtanh.pop %v556
      %v589 = vtanh.pop %v557
      %v590 = vtanh.pop %v558
      %v591 = vtanh.pop %v559
      %v592 = vtanh.pop %v560
      %v593 = vtanh.pop %v561
      %v594 = vtanh.pop %v562
      %v595 = vtanh.pop %v563
      %v596 = vmul.f32 %v564, 0.5
      %v597 = vmul.f32 %v565, 0.5
      %v598 = vmul.f32 %v566, 0.5
      %v599 = vmul.f32 %v567, 0.5
      %v600 = vmul.f32 %v568, 0.5
      %v601 = vmul.f32 %v569, 0.5
      %v602 = vmul.f32 %v570, 0.5
      %v603 = vmul.f32 %v571, 0.5
      %v604 = vmul.f32 %v572, 0.5
      %v605 = vmul.f32 %v573, 0.5
      %v606 = vmul.f32 %v574, 0.5
      %v607 = vmul.f32 %v575, 0.5
      %v608 = vmul.f32 %v576, 0.5
      %v609 = vmul.f32 %v577, 0.5
      %v610 = vmul.f32 %v578, 0.5
      %v611 = vmul.f32 %v579, 0.5
      %v612 = vmul.f32 %v580, 0.5
      %v613 = vmul.f32 %v581, 0.5
      %v614 = vmul.f32 %v582, 0.5
      %v615 = vmul.f32 %v583, 0.5
      %v616 = vmul.f32 %v584, 0.5
      %v617 = vmul.f32 %v585, 0.5
      %v618 = vmul.f32 %v586, 0.5
      %v619 = vmul.f32 %v587, 0.5
      %v620 = vmul.f32 %v588, 0.5
      %v621 = vmul.f32 %v589, 0.5
      %v622 = vmul.f32 %v590, 0.5
      %v623 = vmul.f32 %v591, 0.5
      %v624 = vmul.f32 %v592, 0.5
      %v625 = vmul.f32 %v593, 0.5
      %v626 = vmul.f32 %v594, 0.5
      %v627 = vmul.f32 %v595, 0.5
      %v628 = vadd.f32 %v596, 0.5
      %v629 = vadd.f32 %v597, 0.5
      %v630 = vadd.f32 %v598, 0.5
      %v631 = vadd.f32 %v599, 0.5
      %v632 = vadd.f32 %v600, 0.5
      %v633 = vadd.f32 %v601, 0.5
      %v634 = vadd.f32 %v602, 0.5
      %v635 = vadd.f32 %v603, 0.5
      %v636 = vadd.f32 %v604, 0.5
      %v637 = vadd.f32 %v605, 0.5
      %v638 = vadd.f32 %v606, 0.5
      %v639 = vadd.f32 %v607, 0.5
      %v640 = vadd.f32 %v608, 0.5
      %v641 = vadd.f32 %v609, 0.5
      %v642 = vadd.f32 %v610, 0.5
      %v643 = vadd.f32 %v611, 0.5
      %v644 = vadd.f32 %v612, 0.5
      %v645 = vadd.f32 %v613, 0.5
      %v646 = vadd.f32 %v614, 0.5
      %v647 = vadd.f32 %v615, 0.5
      %v648 = vadd.f32 %v616, 0.5
      %v649 = vadd.f32 %v617, 0.5
      %v650 = vadd.f32 %v618, 0.5
      %v651 = vadd.f32 %v619, 0.5
      %v652 = vadd.f32 %v620, 0.5
      %v653 = vadd.f32 %v621, 0.5
      %v654 = vadd.f32 %v622, 0.5
      %v655 = vadd.f32 %v623, 0.5
      %v656 = vadd.f32 %v624, 0.5
      %v657 = vadd.f32 %v625, 0.5
      %v658 = vadd.f32 %v626, 0.5
      %v659 = vadd.f32 %v627, 0.5
      %v660 = vtanh.pop %v437
      %v661 = vtanh.pop %v440
      %v662 = vtanh.pop %v443
      %v663 = vtanh.pop %v446
      %v664 = vtanh.pop %v449
      %v665 = vtanh.pop %v452
      %v666 = vtanh.pop %v455
      %v667 = vtanh.pop %v458
      %v668 = vtanh.pop %v461
      %v669 = vtanh.pop %v464
      %v670 = vtanh.pop %v467
      %v671 = vtanh.pop %v470
      %v672 = vtanh.pop %v473
      %v673 = vtanh.pop %v476
      %v674 = vtanh.pop %v479
      %v675 = vtanh.pop %v482
      %v676 = vtanh.pop %v485
      %v677 = vtanh.pop %v488
      %v678 = vtanh.pop %v491
      %v679 = vtanh.pop %v494
      %v680 = vtanh.pop %v497
      %v681 = vtanh.pop %v500
      %v682 = vtanh.pop %v503
      %v683 = vtanh.pop %v506
      %v684 = vtanh.pop %v509
      %v685 = vtanh.pop %v512
      %v686 = vtanh.pop %v515
      %v687 = vtanh.pop %v518
      %v688 = vtanh.pop %v521
      %v689 = vtanh.pop %v524
      %v690 = vtanh.pop %v527
      %v691 = vtanh.pop %v530
      %724 = vrot.lane.b32.xlu0 %v660, 64
      %v725 = vpop.permute.xlu0 %724
      %726 = vrot.lane.b32.xlu0 %v661, 64
      %v727 = vpop.permute.xlu0 %726
      %728 = vrot.lane.b32.xlu0 %v662, 64
      %v729 = vpop.permute.xlu0 %728
      %730 = vrot.lane.b32.xlu0 %v663, 64
      %v731 = vpop.permute.xlu0 %730
      %732 = vrot.lane.b32.xlu0 %v664, 64
      %v733 = vpop.permute.xlu0 %732
      %734 = vrot.lane.b32.xlu0 %v665, 64
      %v735 = vpop.permute.xlu0 %734
      %736 = vrot.lane.b32.xlu0 %v666, 64
      %v737 = vpop.permute.xlu0 %736
      %738 = vrot.lane.b32.xlu0 %v667, 64
      %v739 = vpop.permute.xlu0 %738
      %740 = vrot.lane.b32.xlu0 %v668, 64
      %v741 = vpop.permute.xlu0 %740
      %742 = vrot.lane.b32.xlu0 %v669, 64
      %v743 = vpop.permute.xlu0 %742
      %744 = vrot.lane.b32.xlu0 %v670, 64
      %v745 = vpop.permute.xlu0 %744
      %746 = vrot.lane.b32.xlu0 %v671, 64
      %v747 = vpop.permute.xlu0 %746
      %748 = vrot.lane.b32.xlu0 %v672, 64
      %v749 = vpop.permute.xlu0 %748
      %750 = vrot.lane.b32.xlu0 %v673, 64
      %v751 = vpop.permute.xlu0 %750
      %752 = vrot.lane.b32.xlu0 %v674, 64
      %v753 = vpop.permute.xlu0 %752
      %754 = vrot.lane.b32.xlu0 %v675, 64
      %v755 = vpop.permute.xlu0 %754
      %756 = vrot.lane.b32.xlu0 %v676, 64
      %v757 = vpop.permute.xlu0 %756
      %758 = vrot.lane.b32.xlu0 %v677, 64
      %v759 = vpop.permute.xlu0 %758
      %760 = vrot.lane.b32.xlu0 %v678, 64
      %v761 = vpop.permute.xlu0 %760
      %762 = vrot.lane.b32.xlu0 %v679, 64
      %v763 = vpop.permute.xlu0 %762
      %764 = vrot.lane.b32.xlu0 %v680, 64
      %v765 = vpop.permute.xlu0 %764
      %766 = vrot.lane.b32.xlu0 %v681, 64
      %v767 = vpop.permute.xlu0 %766
      %768 = vrot.lane.b32.xlu0 %v682, 64
      %v769 = vpop.permute.xlu0 %768
      %770 = vrot.lane.b32.xlu0 %v683, 64
      %v771 = vpop.permute.xlu0 %770
      %772 = vrot.lane.b32.xlu0 %v684, 64
      %v773 = vpop.permute.xlu0 %772
      %774 = vrot.lane.b32.xlu0 %v685, 64
      %v775 = vpop.permute.xlu0 %774
      %776 = vrot.lane.b32.xlu0 %v686, 64
      %v777 = vpop.permute.xlu0 %776
      %778 = vrot.lane.b32.xlu0 %v687, 64
      %v779 = vpop.permute.xlu0 %778
      %780 = vrot.lane.b32.xlu0 %v688, 64
      %v781 = vpop.permute.xlu0 %780
      %782 = vrot.lane.b32.xlu0 %v689, 64
      %v783 = vpop.permute.xlu0 %782
      %784 = vrot.lane.b32.xlu0 %v690, 64
      %v785 = vpop.permute.xlu0 %784
      %786 = vrot.lane.b32.xlu0 %v691, 64
      %v787 = vpop.permute.xlu0 %786
      %v820 = vmul.f32 %v628, %v725
      %v821 = vmul.f32 %v629, %v727
      %v822 = vmul.f32 %v630, %v729
      %v823 = vmul.f32 %v631, %v731
      %v824 = vmul.f32 %v632, %v733
      %v825 = vmul.f32 %v633, %v735
      %v826 = vmul.f32 %v634, %v737
      %v827 = vmul.f32 %v635, %v739
      %v828 = vmul.f32 %v636, %v741
      %v829 = vmul.f32 %v637, %v743
      %v830 = vmul.f32 %v638, %v745
      %v831 = vmul.f32 %v639, %v747
      %v832 = vmul.f32 %v640, %v749
      %v833 = vmul.f32 %v641, %v751
      %v834 = vmul.f32 %v642, %v753
      %v835 = vmul.f32 %v643, %v755
      %v836 = vmul.f32 %v644, %v757
      %v837 = vmul.f32 %v645, %v759
      %v838 = vmul.f32 %v646, %v761
      %v839 = vmul.f32 %v647, %v763
      %v840 = vmul.f32 %v648, %v765
      %v841 = vmul.f32 %v649, %v767
      %v842 = vmul.f32 %v650, %v769
      %v843 = vmul.f32 %v651, %v771
      %v844 = vmul.f32 %v652, %v773
      %v845 = vmul.f32 %v653, %v775
      %v846 = vmul.f32 %v654, %v777
      %v847 = vmul.f32 %v655, %v779
      %v848 = vmul.f32 %v656, %v781
      %v849 = vmul.f32 %v657, %v783
      %v850 = vmul.f32 %v658, %v785
      %v851 = vmul.f32 %v659, %v787
      %v852 = vadd.f32 %v820, 0.0
      %v853 = vadd.f32 %v821, 0.0
      %v854 = vadd.f32 %v822, 0.0
      %v855 = vadd.f32 %v823, 0.0
      %v856 = vadd.f32 %v824, 0.0
      %v857 = vadd.f32 %v825, 0.0
      %v858 = vadd.f32 %v826, 0.0
      %v859 = vadd.f32 %v827, 0.0
      %v860 = vadd.f32 %v828, 0.0
      %v861 = vadd.f32 %v829, 0.0
      %v862 = vadd.f32 %v830, 0.0
      %v863 = vadd.f32 %v831, 0.0
      %v864 = vadd.f32 %v832, 0.0
      %v865 = vadd.f32 %v833, 0.0
      %v866 = vadd.f32 %v834, 0.0
      %v867 = vadd.f32 %v835, 0.0
      %v868 = vadd.f32 %v836, 0.0
      %v869 = vadd.f32 %v837, 0.0
      %v870 = vadd.f32 %v838, 0.0
      %v871 = vadd.f32 %v839, 0.0
      %v872 = vadd.f32 %v840, 0.0
      %v873 = vadd.f32 %v841, 0.0
      %v874 = vadd.f32 %v842, 0.0
      %v875 = vadd.f32 %v843, 0.0
      %v876 = vadd.f32 %v844, 0.0
      %v877 = vadd.f32 %v845, 0.0
      %v878 = vadd.f32 %v846, 0.0
      %v879 = vadd.f32 %v847, 0.0
      %v880 = vadd.f32 %v848, 0.0
      %v881 = vadd.f32 %v849, 0.0
      %v882 = vadd.f32 %v850, 0.0
      %v883 = vadd.f32 %v851, 0.0
      %v884 = vtanh.pop %v852
      %v885 = vtanh.pop %v853
      %v886 = vtanh.pop %v854
      %v887 = vtanh.pop %v855
      %v888 = vtanh.pop %v856
      %v889 = vtanh.pop %v857
      %v890 = vtanh.pop %v858
      %v891 = vtanh.pop %v859
      %v892 = vtanh.pop %v860
      %v893 = vtanh.pop %v861
      %v894 = vtanh.pop %v862
      %v895 = vtanh.pop %v863
      %v896 = vtanh.pop %v864
      %v897 = vtanh.pop %v865
      %v898 = vtanh.pop %v866
      %v899 = vtanh.pop %v867
      %v900 = vtanh.pop %v868
      %v901 = vtanh.pop %v869
      %v902 = vtanh.pop %v870
      %v903 = vtanh.pop %v871
      %v904 = vtanh.pop %v872
      %v905 = vtanh.pop %v873
      %v906 = vtanh.pop %v874
      %v907 = vtanh.pop %v875
      %v908 = vtanh.pop %v876
      %v909 = vtanh.pop %v877
      %v910 = vtanh.pop %v878
      %v911 = vtanh.pop %v879
      %v912 = vtanh.pop %v880
      %v913 = vtanh.pop %v881
      %v914 = vtanh.pop %v882
      %v915 = vtanh.pop %v883
      %948 = vrot.lane.b32.xlu0 %v884, 32
      %v949 = vpop.permute.xlu0 %948
      %950 = vrot.lane.b32.xlu0 %v885, 32
      %v951 = vpop.permute.xlu0 %950
      %952 = vrot.lane.b32.xlu0 %v886, 32
      %v953 = vpop.permute.xlu0 %952
      %954 = vrot.lane.b32.xlu0 %v887, 32
      %v955 = vpop.permute.xlu0 %954
      %956 = vrot.lane.b32.xlu0 %v888, 32
      %v957 = vpop.permute.xlu0 %956
      %958 = vrot.lane.b32.xlu0 %v889, 32
      %v959 = vpop.permute.xlu0 %958
      %960 = vrot.lane.b32.xlu0 %v890, 32
      %v961 = vpop.permute.xlu0 %960
      %962 = vrot.lane.b32.xlu0 %v891, 32
      %v963 = vpop.permute.xlu0 %962
      %964 = vrot.lane.b32.xlu0 %v892, 32
      %v965 = vpop.permute.xlu0 %964
      %966 = vrot.lane.b32.xlu0 %v893, 32
      %v967 = vpop.permute.xlu0 %966
      %968 = vrot.lane.b32.xlu0 %v894, 32
      %v969 = vpop.permute.xlu0 %968
      %970 = vrot.lane.b32.xlu0 %v895, 32
      %v971 = vpop.permute.xlu0 %970
      %972 = vrot.lane.b32.xlu0 %v896, 32
      %v973 = vpop.permute.xlu0 %972
      %974 = vrot.lane.b32.xlu0 %v897, 32
      %v975 = vpop.permute.xlu0 %974
      %976 = vrot.lane.b32.xlu0 %v898, 32
      %v977 = vpop.permute.xlu0 %976
      %978 = vrot.lane.b32.xlu0 %v899, 32
      %v979 = vpop.permute.xlu0 %978
      %980 = vrot.lane.b32.xlu0 %v900, 32
      %v981 = vpop.permute.xlu0 %980
      %982 = vrot.lane.b32.xlu0 %v901, 32
      %v983 = vpop.permute.xlu0 %982
      %984 = vrot.lane.b32.xlu0 %v902, 32
      %v985 = vpop.permute.xlu0 %984
      %986 = vrot.lane.b32.xlu0 %v903, 32
      %v987 = vpop.permute.xlu0 %986
      %988 = vrot.lane.b32.xlu0 %v904, 32
      %v989 = vpop.permute.xlu0 %988
      %990 = vrot.lane.b32.xlu0 %v905, 32
      %v991 = vpop.permute.xlu0 %990
      %992 = vrot.lane.b32.xlu0 %v906, 32
      %v993 = vpop.permute.xlu0 %992
      %994 = vrot.lane.b32.xlu0 %v907, 32
      %v995 = vpop.permute.xlu0 %994
      %996 = vrot.lane.b32.xlu0 %v908, 32
      %v997 = vpop.permute.xlu0 %996
      %998 = vrot.lane.b32.xlu0 %v909, 32
      %v999 = vpop.permute.xlu0 %998
      %1000 = vrot.lane.b32.xlu0 %v910, 32
      %v1001 = vpop.permute.xlu0 %1000
      %1002 = vrot.lane.b32.xlu0 %v911, 32
      %v1003 = vpop.permute.xlu0 %1002
      %1004 = vrot.lane.b32.xlu0 %v912, 32
      %v1005 = vpop.permute.xlu0 %1004
      %1006 = vrot.lane.b32.xlu0 %v913, 32
      %v1007 = vpop.permute.xlu0 %1006
      %1008 = vrot.lane.b32.xlu0 %v914, 32
      %v1009 = vpop.permute.xlu0 %1008
      %1010 = vrot.lane.b32.xlu0 %v915, 32
      %v1011 = vpop.permute.xlu0 %1010
      %v1044 = vmul.f32 %v628, %v949
      %v1045 = vmul.f32 %v629, %v951
      %v1046 = vmul.f32 %v630, %v953
      %v1047 = vmul.f32 %v631, %v955
      %v1048 = vmul.f32 %v632, %v957
      %v1049 = vmul.f32 %v633, %v959
      %v1050 = vmul.f32 %v634, %v961
      %v1051 = vmul.f32 %v635, %v963
      %v1052 = vmul.f32 %v636, %v965
      %v1053 = vmul.f32 %v637, %v967
      %v1054 = vmul.f32 %v638, %v969
      %v1055 = vmul.f32 %v639, %v971
      %v1056 = vmul.f32 %v640, %v973
      %v1057 = vmul.f32 %v641, %v975
      %v1058 = vmul.f32 %v642, %v977
      %v1059 = vmul.f32 %v643, %v979
      %v1060 = vmul.f32 %v644, %v981
      %v1061 = vmul.f32 %v645, %v983
      %v1062 = vmul.f32 %v646, %v985
      %v1063 = vmul.f32 %v647, %v987
      %v1064 = vmul.f32 %v648, %v989
      %v1065 = vmul.f32 %v649, %v991
      %v1066 = vmul.f32 %v650, %v993
      %v1067 = vmul.f32 %v651, %v995
      %v1068 = vmul.f32 %v652, %v997
      %v1069 = vmul.f32 %v653, %v999
      %v1070 = vmul.f32 %v654, %v1001
      %v1071 = vmul.f32 %v655, %v1003
      %v1072 = vmul.f32 %v656, %v1005
      %v1073 = vmul.f32 %v657, %v1007
      %v1074 = vmul.f32 %v658, %v1009
      %v1075 = vmul.f32 %v659, %v1011
      %v1076 = vmax.f32 %v1044, 0.0
      %v1077 = vmax.f32 %v1045, 0.0
      %v1078 = vmax.f32 %v1046, 0.0
      %v1079 = vmax.f32 %v1047, 0.0
      %v1080 = vmax.f32 %v1048, 0.0
      %v1081 = vmax.f32 %v1049, 0.0
      %v1082 = vmax.f32 %v1050, 0.0
      %v1083 = vmax.f32 %v1051, 0.0
      %v1084 = vmax.f32 %v1052, 0.0
      %v1085 = vmax.f32 %v1053, 0.0
      %v1086 = vmax.f32 %v1054, 0.0
      %v1087 = vmax.f32 %v1055, 0.0
      %v1088 = vmax.f32 %v1056, 0.0
      %v1089 = vmax.f32 %v1057, 0.0
      %v1090 = vmax.f32 %v1058, 0.0
      %v1091 = vmax.f32 %v1059, 0.0
      %v1092 = vmax.f32 %v1060, 0.0
      %v1093 = vmax.f32 %v1061, 0.0
      %v1094 = vmax.f32 %v1062, 0.0
      %v1095 = vmax.f32 %v1063, 0.0
      %v1096 = vmax.f32 %v1064, 0.0
      %v1097 = vmax.f32 %v1065, 0.0
      %v1098 = vmax.f32 %v1066, 0.0
      %v1099 = vmax.f32 %v1067, 0.0
      %v1100 = vmax.f32 %v1068, 0.0
      %v1101 = vmax.f32 %v1069, 0.0
      %v1102 = vmax.f32 %v1070, 0.0
      %v1103 = vmax.f32 %v1071, 0.0
      %v1104 = vmax.f32 %v1072, 0.0
      %v1105 = vmax.f32 %v1073, 0.0
      %v1106 = vmax.f32 %v1074, 0.0
      %v1107 = vmax.f32 %v1075, 0.0
      %v1108 = vadd.f32 %v1044, %v1076
      %v1109 = vadd.f32 %v1045, %v1077
      %v1110 = vadd.f32 %v1046, %v1078
      %v1111 = vadd.f32 %v1047, %v1079
      %v1112 = vadd.f32 %v1048, %v1080
      %v1113 = vadd.f32 %v1049, %v1081
      %v1114 = vadd.f32 %v1050, %v1082
      %v1115 = vadd.f32 %v1051, %v1083
      %v1116 = vadd.f32 %v1052, %v1084
      %v1117 = vadd.f32 %v1053, %v1085
      %v1118 = vadd.f32 %v1054, %v1086
      %v1119 = vadd.f32 %v1055, %v1087
      %v1120 = vadd.f32 %v1056, %v1088
      %v1121 = vadd.f32 %v1057, %v1089
      %v1122 = vadd.f32 %v1058, %v1090
      %v1123 = vadd.f32 %v1059, %v1091
      %v1124 = vadd.f32 %v1060, %v1092
      %v1125 = vadd.f32 %v1061, %v1093
      %v1126 = vadd.f32 %v1062, %v1094
      %v1127 = vadd.f32 %v1063, %v1095
      %v1128 = vadd.f32 %v1064, %v1096
      %v1129 = vadd.f32 %v1065, %v1097
      %v1130 = vadd.f32 %v1066, %v1098
      %v1131 = vadd.f32 %v1067, %v1099
      %v1132 = vadd.f32 %v1068, %v1100
      %v1133 = vadd.f32 %v1069, %v1101
      %v1134 = vadd.f32 %v1070, %v1102
      %v1135 = vadd.f32 %v1071, %v1103
      %v1136 = vadd.f32 %v1072, %v1104
      %v1137 = vadd.f32 %v1073, %v1105
      %v1138 = vadd.f32 %v1074, %v1106
      %v1139 = vadd.f32 %v1075, %v1107
      %1172 = vrot.lane.b32.xlu0 %v1108, 96
      %v1173 = vpop.permute.xlu0 %1172
      %1174 = vrot.lane.b32.xlu0 %v1109, 96
      %v1175 = vpop.permute.xlu0 %1174
      %1176 = vrot.lane.b32.xlu0 %v1110, 96
      %v1177 = vpop.permute.xlu0 %1176
      %1178 = vrot.lane.b32.xlu0 %v1111, 96
      %v1179 = vpop.permute.xlu0 %1178
      %1180 = vrot.lane.b32.xlu0 %v1112, 96
      %v1181 = vpop.permute.xlu0 %1180
      %1182 = vrot.lane.b32.xlu0 %v1113, 96
      %v1183 = vpop.permute.xlu0 %1182
      %1184 = vrot.lane.b32.xlu0 %v1114, 96
      %v1185 = vpop.permute.xlu0 %1184
      %1186 = vrot.lane.b32.xlu0 %v1115, 96
      %v1187 = vpop.permute.xlu0 %1186
      %1188 = vrot.lane.b32.xlu0 %v1116, 96
      %v1189 = vpop.permute.xlu0 %1188
      %1190 = vrot.lane.b32.xlu0 %v1117, 96
      %v1191 = vpop.permute.xlu0 %1190
      %1192 = vrot.lane.b32.xlu0 %v1118, 96
      %v1193 = vpop.permute.xlu0 %1192
      %1194 = vrot.lane.b32.xlu0 %v1119, 96
      %v1195 = vpop.permute.xlu0 %1194
      %1196 = vrot.lane.b32.xlu0 %v1120, 96
      %v1197 = vpop.permute.xlu0 %1196
      %1198 = vrot.lane.b32.xlu0 %v1121, 96
      %v1199 = vpop.permute.xlu0 %1198
      %1200 = vrot.lane.b32.xlu0 %v1122, 96
      %v1201 = vpop.permute.xlu0 %1200
      %1202 = vrot.lane.b32.xlu0 %v1123, 96
      %v1203 = vpop.permute.xlu0 %1202
      %1204 = vrot.lane.b32.xlu0 %v1124, 96
      %v1205 = vpop.permute.xlu0 %1204
      %1206 = vrot.lane.b32.xlu0 %v1125, 96
      %v1207 = vpop.permute.xlu0 %1206
      %1208 = vrot.lane.b32.xlu0 %v1126, 96
      %v1209 = vpop.permute.xlu0 %1208
      %1210 = vrot.lane.b32.xlu0 %v1127, 96
      %v1211 = vpop.permute.xlu0 %1210
      %1212 = vrot.lane.b32.xlu0 %v1128, 96
      %v1213 = vpop.permute.xlu0 %1212
      %1214 = vrot.lane.b32.xlu0 %v1129, 96
      %v1215 = vpop.permute.xlu0 %1214
      %1216 = vrot.lane.b32.xlu0 %v1130, 96
      %v1217 = vpop.permute.xlu0 %1216
      %1218 = vrot.lane.b32.xlu0 %v1131, 96
      %v1219 = vpop.permute.xlu0 %1218
      %1220 = vrot.lane.b32.xlu0 %v1132, 96
      %v1221 = vpop.permute.xlu0 %1220
      %1222 = vrot.lane.b32.xlu0 %v1133, 96
      %v1223 = vpop.permute.xlu0 %1222
      %1224 = vrot.lane.b32.xlu0 %v1134, 96
      %v1225 = vpop.permute.xlu0 %1224
      %1226 = vrot.lane.b32.xlu0 %v1135, 96
      %v1227 = vpop.permute.xlu0 %1226
      %1228 = vrot.lane.b32.xlu0 %v1136, 96
      %v1229 = vpop.permute.xlu0 %1228
      %1230 = vrot.lane.b32.xlu0 %v1137, 96
      %v1231 = vpop.permute.xlu0 %1230
      %1232 = vrot.lane.b32.xlu0 %v1138, 96
      %v1233 = vpop.permute.xlu0 %1232
      %1234 = vrot.lane.b32.xlu0 %v1139, 96
      %v1235 = vpop.permute.xlu0 %1234
      %1268 = vst.msk [vmem:[#allocation2] sm:$0xff] %vm322, %v1173
      %1269 = vst.msk [vmem:[#allocation2 + $0x8] sm:$0xff] %vm322, %v1175
      %1270 = vst.msk [vmem:[#allocation2 + $0x10] sm:$0xff] %vm322, %v1177
      %1271 = vst.msk [vmem:[#allocation2 + $0x18] sm:$0xff] %vm322, %v1179
      %1272 = vst.msk [vmem:[#allocation2 + $0x20] sm:$0xff] %vm322, %v1181
      %1273 = vst.msk [vmem:[#allocation2 + $0x28] sm:$0xff] %vm322, %v1183
      %1274 = vst.msk [vmem:[#allocation2 + $0x30] sm:$0xff] %vm322, %v1185
      %1275 = vst.msk [vmem:[#allocation2 + $0x38] sm:$0xff] %vm322, %v1187
      %1276 = vst.msk [vmem:[#allocation2 + $0x40] sm:$0xff] %vm322, %v1189
      %1277 = vst.msk [vmem:[#allocation2 + $0x48] sm:$0xff] %vm322, %v1191
      %1278 = vst.msk [vmem:[#allocation2 + $0x50] sm:$0xff] %vm322, %v1193
      %1279 = vst.msk [vmem:[#allocation2 + $0x58] sm:$0xff] %vm322, %v1195
      %1280 = vst.msk [vmem:[#allocation2 + $0x60] sm:$0xff] %vm322, %v1197
      %1281 = vst.msk [vmem:[#allocation2 + $0x68] sm:$0xff] %vm322, %v1199
      %1282 = vst.msk [vmem:[#allocation2 + $0x70] sm:$0xff] %vm322, %v1201
      %1283 = vst.msk [vmem:[#allocation2 + $0x78] sm:$0xff] %vm322, %v1203
      %1284 = vst.msk [vmem:[#allocation2 + $0x80] sm:$0xff] %vm322, %v1205
      %1285 = vst.msk [vmem:[#allocation2 + $0x88] sm:$0xff] %vm322, %v1207
      %1286 = vst.msk [vmem:[#allocation2 + $0x90] sm:$0xff] %vm322, %v1209
      %1287 = vst.msk [vmem:[#allocation2 + $0x98] sm:$0xff] %vm322, %v1211
      %1288 = vst.msk [vmem:[#allocation2 + $0xa0] sm:$0xff] %vm322, %v1213
      %1289 = vst.msk [vmem:[#allocation2 + $0xa8] sm:$0xff] %vm322, %v1215
      %1290 = vst.msk [vmem:[#allocation2 + $0xb0] sm:$0xff] %vm322, %v1217
      %1291 = vst.msk [vmem:[#allocation2 + $0xb8] sm:$0xff] %vm322, %v1219
      %1292 = vst.msk [vmem:[#allocation2 + $0xc0] sm:$0xff] %vm322, %v1221
      %1293 = vst.msk [vmem:[#allocation2 + $0xc8] sm:$0xff] %vm322, %v1223
      %1294 = vst.msk [vmem:[#allocation2 + $0xd0] sm:$0xff] %vm322, %v1225
      %1295 = vst.msk [vmem:[#allocation2 + $0xd8] sm:$0xff] %vm322, %v1227
      %1296 = vst.msk [vmem:[#allocation2 + $0xe0] sm:$0xff] %vm322, %v1229
      %1297 = vst.msk [vmem:[#allocation2 + $0xe8] sm:$0xff] %vm322, %v1231
      %1298 = vst.msk [vmem:[#allocation2 + $0xf0] sm:$0xff] %vm322, %v1233
      %1299 = vst.msk [vmem:[#allocation2 + $0xf8] sm:$0xff] %vm322, %v1235
      %1316 = vrot.lane.b32.xlu0 %v1044, 96
      %v1317 = vpop.permute.xlu0 %1316
      %1318 = vrot.lane.b32.xlu0 %v1045, 96
      %v1319 = vpop.permute.xlu0 %1318
      %1320 = vrot.lane.b32.xlu0 %v1046, 96
      %v1321 = vpop.permute.xlu0 %1320
      %1322 = vrot.lane.b32.xlu0 %v1047, 96
      %v1323 = vpop.permute.xlu0 %1322
      %1324 = vrot.lane.b32.xlu0 %v1048, 96
      %v1325 = vpop.permute.xlu0 %1324
      %1326 = vrot.lane.b32.xlu0 %v1049, 96
      %v1327 = vpop.permute.xlu0 %1326
      %1328 = vrot.lane.b32.xlu0 %v1050, 96
      %v1329 = vpop.permute.xlu0 %1328
      %1330 = vrot.lane.b32.xlu0 %v1051, 96
      %v1331 = vpop.permute.xlu0 %1330
      %1332 = vrot.lane.b32.xlu0 %v1052, 96
      %v1333 = vpop.permute.xlu0 %1332
      %1334 = vrot.lane.b32.xlu0 %v1053, 96
      %v1335 = vpop.permute.xlu0 %1334
      %1336 = vrot.lane.b32.xlu0 %v1054, 96
      %v1337 = vpop.permute.xlu0 %1336
      %1338 = vrot.lane.b32.xlu0 %v1055, 96
      %v1339 = vpop.permute.xlu0 %1338
      %1340 = vrot.lane.b32.xlu0 %v1056, 96
      %v1341 = vpop.permute.xlu0 %1340
      %1342 = vrot.lane.b32.xlu0 %v1057, 96
      %v1343 = vpop.permute.xlu0 %1342
      %1344 = vrot.lane.b32.xlu0 %v1058, 96
      %v1345 = vpop.permute.xlu0 %1344
      %1346 = vrot.lane.b32.xlu0 %v1059, 96
      %v1347 = vpop.permute.xlu0 %1346
      %1364 = vst.msk [vmem:[#allocation3] sm:$0xff] %vm322, %v1317
      %1365 = vst.msk [vmem:[#allocation3 + $0x8] sm:$0xff] %vm322, %v1319
      %1366 = vst.msk [vmem:[#allocation3 + $0x10] sm:$0xff] %vm322, %v1321
      %1367 = vst.msk [vmem:[#allocation3 + $0x18] sm:$0xff] %vm322, %v1323
      %1368 = vst.msk [vmem:[#allocation3 + $0x20] sm:$0xff] %vm322, %v1325
      %1369 = vst.msk [vmem:[#allocation3 + $0x28] sm:$0xff] %vm322, %v1327
      %1370 = vst.msk [vmem:[#allocation3 + $0x30] sm:$0xff] %vm322, %v1329
      %1371 = vst.msk [vmem:[#allocation3 + $0x38] sm:$0xff] %vm322, %v1331
      %1372 = vst.msk [vmem:[#allocation3 + $0x40] sm:$0xff] %vm322, %v1333
      %1373 = vst.msk [vmem:[#allocation3 + $0x48] sm:$0xff] %vm322, %v1335
      %1374 = vst.msk [vmem:[#allocation3 + $0x50] sm:$0xff] %vm322, %v1337
      %1375 = vst.msk [vmem:[#allocation3 + $0x58] sm:$0xff] %vm322, %v1339
      %1376 = vst.msk [vmem:[#allocation3 + $0x60] sm:$0xff] %vm322, %v1341
      %1377 = vst.msk [vmem:[#allocation3 + $0x68] sm:$0xff] %vm322, %v1343
      %1378 = vst.msk [vmem:[#allocation3 + $0x70] sm:$0xff] %vm322, %v1345
      %1379 = vst.msk [vmem:[#allocation3 + $0x78] sm:$0xff] %vm322, %v1347
      %vm1380 = vcmask 523520
      %1381 = vst.msk [vmem:[#allocation3] sm:$0xff] %vm1380, %v1060
      %1382 = vst.msk [vmem:[#allocation3 + $0x8] sm:$0xff] %vm1380, %v1061
      %1383 = vst.msk [vmem:[#allocation3 + $0x10] sm:$0xff] %vm1380, %v1062
      %1384 = vst.msk [vmem:[#allocation3 + $0x18] sm:$0xff] %vm1380, %v1063
      %1385 = vst.msk [vmem:[#allocation3 + $0x20] sm:$0xff] %vm1380, %v1064
      %1386 = vst.msk [vmem:[#allocation3 + $0x28] sm:$0xff] %vm1380, %v1065
      %1387 = vst.msk [vmem:[#allocation3 + $0x30] sm:$0xff] %vm1380, %v1066
      %1388 = vst.msk [vmem:[#allocation3 + $0x38] sm:$0xff] %vm1380, %v1067
      %1389 = vst.msk [vmem:[#allocation3 + $0x40] sm:$0xff] %vm1380, %v1068
      %1390 = vst.msk [vmem:[#allocation3 + $0x48] sm:$0xff] %vm1380, %v1069
      %1391 = vst.msk [vmem:[#allocation3 + $0x50] sm:$0xff] %vm1380, %v1070
      %1392 = vst.msk [vmem:[#allocation3 + $0x58] sm:$0xff] %vm1380, %v1071
      %1393 = vst.msk [vmem:[#allocation3 + $0x60] sm:$0xff] %vm1380, %v1072
      %1394 = vst.msk [vmem:[#allocation3 + $0x68] sm:$0xff] %vm1380, %v1073
      %1395 = vst.msk [vmem:[#allocation3 + $0x70] sm:$0xff] %vm1380, %v1074
      %1396 = vst.msk [vmem:[#allocation3 + $0x78] sm:$0xff] %vm1380, %v1075
      %1397 = vst.msk [vmem:[#allocation4] sm:$0xff] %vm322, %v852
      %1398 = vst.msk [vmem:[#allocation4 + $0x8] sm:$0xff] %vm322, %v853
      %1399 = vst.msk [vmem:[#allocation4 + $0x10] sm:$0xff] %vm322, %v854
      %1400 = vst.msk [vmem:[#allocation4 + $0x18] sm:$0xff] %vm322, %v855
      %1401 = vst.msk [vmem:[#allocation4 + $0x20] sm:$0xff] %vm322, %v856
      %1402 = vst.msk [vmem:[#allocation4 + $0x28] sm:$0xff] %vm322, %v857
      %1403 = vst.msk [vmem:[#allocation4 + $0x30] sm:$0xff] %vm322, %v858
      %1404 = vst.msk [vmem:[#allocation4 + $0x38] sm:$0xff] %vm322, %v859
      %1405 = vst.msk [vmem:[#allocation4 + $0x40] sm:$0xff] %vm322, %v860
      %1406 = vst.msk [vmem:[#allocation4 + $0x48] sm:$0xff] %vm322, %v861
      %1407 = vst.msk [vmem:[#allocation4 + $0x50] sm:$0xff] %vm322, %v862
      %1408 = vst.msk [vmem:[#allocation4 + $0x58] sm:$0xff] %vm322, %v863
      %1409 = vst.msk [vmem:[#allocation4 + $0x60] sm:$0xff] %vm322, %v864
      %1410 = vst.msk [vmem:[#allocation4 + $0x68] sm:$0xff] %vm322, %v865
      %1411 = vst.msk [vmem:[#allocation4 + $0x70] sm:$0xff] %vm322, %v866
      %1412 = vst.msk [vmem:[#allocation4 + $0x78] sm:$0xff] %vm322, %v867
      %1429 = vrot.lane.b32.xlu0 %v868, 32
      %v1430 = vpop.permute.xlu0 %1429
      %1431 = vrot.lane.b32.xlu0 %v869, 32
      %v1432 = vpop.permute.xlu0 %1431
      %1433 = vrot.lane.b32.xlu0 %v870, 32
      %v1434 = vpop.permute.xlu0 %1433
      %1435 = vrot.lane.b32.xlu0 %v871, 32
      %v1436 = vpop.permute.xlu0 %1435
      %1437 = vrot.lane.b32.xlu0 %v872, 32
      %v1438 = vpop.permute.xlu0 %1437
      %1439 = vrot.lane.b32.xlu0 %v873, 32
      %v1440 = vpop.permute.xlu0 %1439
      %1441 = vrot.lane.b32.xlu0 %v874, 32
      %v1442 = vpop.permute.xlu0 %1441
      %1443 = vrot.lane.b32.xlu0 %v875, 32
      %v1444 = vpop.permute.xlu0 %1443
      %1445 = vrot.lane.b32.xlu0 %v876, 32
      %v1446 = vpop.permute.xlu0 %1445
      %1447 = vrot.lane.b32.xlu0 %v877, 32
      %v1448 = vpop.permute.xlu0 %1447
      %1449 = vrot.lane.b32.xlu0 %v878, 32
      %v1450 = vpop.permute.xlu0 %1449
      %1451 = vrot.lane.b32.xlu0 %v879, 32
      %v1452 = vpop.permute.xlu0 %1451
      %1453 = vrot.lane.b32.xlu0 %v880, 32
      %v1454 = vpop.permute.xlu0 %1453
      %1455 = vrot.lane.b32.xlu0 %v881, 32
      %v1456 = vpop.permute.xlu0 %1455
      %1457 = vrot.lane.b32.xlu0 %v882, 32
      %v1458 = vpop.permute.xlu0 %1457
      %1459 = vrot.lane.b32.xlu0 %v883, 32
      %v1460 = vpop.permute.xlu0 %1459
      %1477 = vst.msk [vmem:[#allocation4] sm:$0xff] %vm1380, %v1430
      %1478 = vst.msk [vmem:[#allocation4 + $0x8] sm:$0xff] %vm1380, %v1432
      %1479 = vst.msk [vmem:[#allocation4 + $0x10] sm:$0xff] %vm1380, %v1434
      %1480 = vst.msk [vmem:[#allocation4 + $0x18] sm:$0xff] %vm1380, %v1436
      %1481 = vst.msk [vmem:[#allocation4 + $0x20] sm:$0xff] %vm1380, %v1438
      %1482 = vst.msk [vmem:[#allocation4 + $0x28] sm:$0xff] %vm1380, %v1440
      %1483 = vst.msk [vmem:[#allocation4 + $0x30] sm:$0xff] %vm1380, %v1442
      %1484 = vst.msk [vmem:[#allocation4 + $0x38] sm:$0xff] %vm1380, %v1444
      %1485 = vst.msk [vmem:[#allocation4 + $0x40] sm:$0xff] %vm1380, %v1446
      %1486 = vst.msk [vmem:[#allocation4 + $0x48] sm:$0xff] %vm1380, %v1448
      %1487 = vst.msk [vmem:[#allocation4 + $0x50] sm:$0xff] %vm1380, %v1450
      %1488 = vst.msk [vmem:[#allocation4 + $0x58] sm:$0xff] %vm1380, %v1452
      %1489 = vst.msk [vmem:[#allocation4 + $0x60] sm:$0xff] %vm1380, %v1454
      %1490 = vst.msk [vmem:[#allocation4 + $0x68] sm:$0xff] %vm1380, %v1456
      %1491 = vst.msk [vmem:[#allocation4 + $0x70] sm:$0xff] %vm1380, %v1458
      %1492 = vst.msk [vmem:[#allocation4 + $0x78] sm:$0xff] %vm1380, %v1460
      %1509 = vrot.lane.b32.xlu0 %v1076, 96
      %v1510 = vpop.permute.xlu0 %1509
      %1511 = vrot.lane.b32.xlu0 %v1077, 96
      %v1512 = vpop.permute.xlu0 %1511
      %1513 = vrot.lane.b32.xlu0 %v1078, 96
      %v1514 = vpop.permute.xlu0 %1513
      %1515 = vrot.lane.b32.xlu0 %v1079, 96
      %v1516 = vpop.permute.xlu0 %1515
      %1517 = vrot.lane.b32.xlu0 %v1080, 96
      %v1518 = vpop.permute.xlu0 %1517
      %1519 = vrot.lane.b32.xlu0 %v1081, 96
      %v1520 = vpop.permute.xlu0 %1519
      %1521 = vrot.lane.b32.xlu0 %v1082, 96
      %v1522 = vpop.permute.xlu0 %1521
      %1523 = vrot.lane.b32.xlu0 %v1083, 96
      %v1524 = vpop.permute.xlu0 %1523
      %1525 = vrot.lane.b32.xlu0 %v1084, 96
      %v1526 = vpop.permute.xlu0 %1525
      %1527 = vrot.lane.b32.xlu0 %v1085, 96
      %v1528 = vpop.permute.xlu0 %1527
      %1529 = vrot.lane.b32.xlu0 %v1086, 96
      %v1530 = vpop.permute.xlu0 %1529
      %1531 = vrot.lane.b32.xlu0 %v1087, 96
      %v1532 = vpop.permute.xlu0 %1531
      %1533 = vrot.lane.b32.xlu0 %v1088, 96
      %v1534 = vpop.permute.xlu0 %1533
      %1535 = vrot.lane.b32.xlu0 %v1089, 96
      %v1536 = vpop.permute.xlu0 %1535
      %1537 = vrot.lane.b32.xlu0 %v1090, 96
      %v1538 = vpop.permute.xlu0 %1537
      %1539 = vrot.lane.b32.xlu0 %v1091, 96
      %v1540 = vpop.permute.xlu0 %1539
      %1557 = vst.msk [vmem:[#allocation5] sm:$0xff] %vm322, %v1510
      %1558 = vst.msk [vmem:[#allocation5 + $0x8] sm:$0xff] %vm322, %v1512
      %1559 = vst.msk [vmem:[#allocation5 + $0x10] sm:$0xff] %vm322, %v1514
      %1560 = vst.msk [vmem:[#allocation5 + $0x18] sm:$0xff] %vm322, %v1516
      %1561 = vst.msk [vmem:[#allocation5 + $0x20] sm:$0xff] %vm322, %v1518
      %1562 = vst.msk [vmem:[#allocation5 + $0x28] sm:$0xff] %vm322, %v1520
      %1563 = vst.msk [vmem:[#allocation5 + $0x30] sm:$0xff] %vm322, %v1522
      %1564 = vst.msk [vmem:[#allocation5 + $0x38] sm:$0xff] %vm322, %v1524
      %1565 = vst.msk [vmem:[#allocation5 + $0x40] sm:$0xff] %vm322, %v1526
      %1566 = vst.msk [vmem:[#allocation5 + $0x48] sm:$0xff] %vm322, %v1528
      %1567 = vst.msk [vmem:[#allocation5 + $0x50] sm:$0xff] %vm322, %v1530
      %1568 = vst.msk [vmem:[#allocation5 + $0x58] sm:$0xff] %vm322, %v1532
      %1569 = vst.msk [vmem:[#allocation5 + $0x60] sm:$0xff] %vm322, %v1534
      %1570 = vst.msk [vmem:[#allocation5 + $0x68] sm:$0xff] %vm322, %v1536
      %1571 = vst.msk [vmem:[#allocation5 + $0x70] sm:$0xff] %vm322, %v1538
      %1572 = vst.msk [vmem:[#allocation5 + $0x78] sm:$0xff] %vm322, %v1540
      %1573 = vst.msk [vmem:[#allocation5] sm:$0xff] %vm1380, %v1092
      %1574 = vst.msk [vmem:[#allocation5 + $0x8] sm:$0xff] %vm1380, %v1093
      %1575 = vst.msk [vmem:[#allocation5 + $0x10] sm:$0xff] %vm1380, %v1094
      %1576 = vst.msk [vmem:[#allocation5 + $0x18] sm:$0xff] %vm1380, %v1095
      %1577 = vst.msk [vmem:[#allocation5 + $0x20] sm:$0xff] %vm1380, %v1096
      %1578 = vst.msk [vmem:[#allocation5 + $0x28] sm:$0xff] %vm1380, %v1097
      %1579 = vst.msk [vmem:[#allocation5 + $0x30] sm:$0xff] %vm1380, %v1098
      %1580 = vst.msk [vmem:[#allocation5 + $0x38] sm:$0xff] %vm1380, %v1099
      %1581 = vst.msk [vmem:[#allocation5 + $0x40] sm:$0xff] %vm1380, %v1100
      %1582 = vst.msk [vmem:[#allocation5 + $0x48] sm:$0xff] %vm1380, %v1101
      %1583 = vst.msk [vmem:[#allocation5 + $0x50] sm:$0xff] %vm1380, %v1102
      %1584 = vst.msk [vmem:[#allocation5 + $0x58] sm:$0xff] %vm1380, %v1103
      %1585 = vst.msk [vmem:[#allocation5 + $0x60] sm:$0xff] %vm1380, %v1104
      %1586 = vst.msk [vmem:[#allocation5 + $0x68] sm:$0xff] %vm1380, %v1105
      %1587 = vst.msk [vmem:[#allocation5 + $0x70] sm:$0xff] %vm1380, %v1106
      %1588 = vst.msk [vmem:[#allocation5 + $0x78] sm:$0xff] %vm1380, %v1107
      %v1589 = vld [vmem:[#allocation3] sm:$0xff]
      %v1590 = vld [vmem:[#allocation3 + $0x8] sm:$0xff]
      %v1591 = vld [vmem:[#allocation3 + $0x10] sm:$0xff]
      %v1592 = vld [vmem:[#allocation3 + $0x18] sm:$0xff]
      %v1593 = vld [vmem:[#allocation3 + $0x20] sm:$0xff]
      %v1594 = vld [vmem:[#allocation3 + $0x28] sm:$0xff]
      %v1595 = vld [vmem:[#allocation3 + $0x30] sm:$0xff]
      %v1596 = vld [vmem:[#allocation3 + $0x38] sm:$0xff]
      %v1597 = vld [vmem:[#allocation3 + $0x40] sm:$0xff]
      %v1598 = vld [vmem:[#allocation3 + $0x48] sm:$0xff]
      %v1599 = vld [vmem:[#allocation3 + $0x50] sm:$0xff]
      %v1600 = vld [vmem:[#allocation3 + $0x58] sm:$0xff]
      %v1601 = vld [vmem:[#allocation3 + $0x60] sm:$0xff]
      %v1602 = vld [vmem:[#allocation3 + $0x68] sm:$0xff]
      %v1603 = vld [vmem:[#allocation3 + $0x70] sm:$0xff]
      %v1604 = vld [vmem:[#allocation3 + $0x78] sm:$0xff]
      %v1605 = vld [vmem:[#allocation4] sm:$0xff]
      %v1606 = vld [vmem:[#allocation4 + $0x8] sm:$0xff]
      %v1607 = vld [vmem:[#allocation4 + $0x10] sm:$0xff]
      %v1608 = vld [vmem:[#allocation4 + $0x18] sm:$0xff]
      %v1609 = vld [vmem:[#allocation4 + $0x20] sm:$0xff]
      %v1610 = vld [vmem:[#allocation4 + $0x28] sm:$0xff]
      %v1611 = vld [vmem:[#allocation4 + $0x30] sm:$0xff]
      %v1612 = vld [vmem:[#allocation4 + $0x38] sm:$0xff]
      %v1613 = vld [vmem:[#allocation4 + $0x40] sm:$0xff]
      %v1614 = vld [vmem:[#allocation4 + $0x48] sm:$0xff]
      %v1615 = vld [vmem:[#allocation4 + $0x50] sm:$0xff]
      %v1616 = vld [vmem:[#allocation4 + $0x58] sm:$0xff]
      %v1617 = vld [vmem:[#allocation4 + $0x60] sm:$0xff]
      %v1618 = vld [vmem:[#allocation4 + $0x68] sm:$0xff]
      %v1619 = vld [vmem:[#allocation4 + $0x70] sm:$0xff]
      %v1620 = vld [vmem:[#allocation4 + $0x78] sm:$0xff]
      %v1621 = vld [vmem:[#allocation5] sm:$0xff]
      %v1622 = vld [vmem:[#allocation5 + $0x8] sm:$0xff]
      %v1623 = vld [vmem:[#allocation5 + $0x10] sm:$0xff]
      %v1624 = vld [vmem:[#allocation5 + $0x18] sm:$0xff]
      %v1625 = vld [vmem:[#allocation5 + $0x20] sm:$0xff]
      %v1626 = vld [vmem:[#allocation5 + $0x28] sm:$0xff]
      %v1627 = vld [vmem:[#allocation5 + $0x30] sm:$0xff]
      %v1628 = vld [vmem:[#allocation5 + $0x38] sm:$0xff]
      %v1629 = vld [vmem:[#allocation5 + $0x40] sm:$0xff]
      %v1630 = vld [vmem:[#allocation5 + $0x48] sm:$0xff]
      %v1631 = vld [vmem:[#allocation5 + $0x50] sm:$0xff]
      %v1632 = vld [vmem:[#allocation5 + $0x58] sm:$0xff]
      %v1633 = vld [vmem:[#allocation5 + $0x60] sm:$0xff]
      %v1634 = vld [vmem:[#allocation5 + $0x68] sm:$0xff]
      %v1635 = vld [vmem:[#allocation5 + $0x70] sm:$0xff]
      %v1636 = vld [vmem:[#allocation5 + $0x78] sm:$0xff]
      %v1637 = vld [vmem:[%s3] sm:$0xff]
      %v1638 = vld [vmem:[%s3 + $0x8] sm:$0xff]
      %v1639 = vld [vmem:[%s3 + $0x10] sm:$0xff]
      %v1640 = vld [vmem:[%s3 + $0x18] sm:$0xff]
      %v1641 = vld [vmem:[%s3 + $0x20] sm:$0xff]
      %v1642 = vld [vmem:[%s3 + $0x28] sm:$0xff]
      %v1643 = vld [vmem:[%s3 + $0x30] sm:$0xff]
      %v1644 = vld [vmem:[%s3 + $0x38] sm:$0xff]
      %v1645 = vld [vmem:[%s3 + $0x40] sm:$0xff]
      %v1646 = vld [vmem:[%s3 + $0x48] sm:$0xff]
      %v1647 = vld [vmem:[%s3 + $0x50] sm:$0xff]
      %v1648 = vld [vmem:[%s3 + $0x58] sm:$0xff]
      %v1649 = vld [vmem:[%s3 + $0x60] sm:$0xff]
      %v1650 = vld [vmem:[%s3 + $0x68] sm:$0xff]
      %v1651 = vld [vmem:[%s3 + $0x70] sm:$0xff]
      %v1652 = vld [vmem:[%s3 + $0x78] sm:$0xff]
      %v1653 = vld [vmem:[%s4] sm:$0x3]
      %v1655 = vperm.slane %v1653, 0
      %v1656 = vperm.slane %v1653, 1
      %vm1659 = vcmask 523264
      %v1661 = vsel %vm1659, %v1589, 0
      %v1664 = vsel %vm1659, %v1590, 0
      %v1667 = vsel %vm1659, %v1591, 0
      %v1670 = vsel %vm1659, %v1592, 0
      %v1673 = vsel %vm1659, %v1593, 0
      %v1676 = vsel %vm1659, %v1594, 0
      %v1679 = vsel %vm1659, %v1595, 0
      %v1682 = vsel %vm1659, %v1596, 0
      %v1685 = vsel %vm1659, %v1597, 0
      %v1688 = vsel %vm1659, %v1598, 0
      %v1691 = vsel %vm1659, %v1599, 0
      %v1694 = vsel %vm1659, %v1600, 0
      %v1697 = vsel %vm1659, %v1601, 0
      %v1700 = vsel %vm1659, %v1602, 0
      %v1703 = vsel %vm1659, %v1603, 0
      %v1706 = vsel %vm1659, %v1604, 0
      %1708 = vmatpush.msra.mxu0 0.0
      %1709 = vmatpush.msra.mxu0 0.0
      %1710 = vmatpush.msra.mxu0 0.0
      %1711 = vmatpush.msra.mxu0 0.0
      %1712 = vmatpush.msra.mxu0 0.0
      %1713 = vmatpush.msra.mxu0 0.0
      %1714 = vmatpush.msra.mxu0 0.0
      %1715 = vmatpush.msra.mxu0 0.0
      %1716 = vmatpush.msra.mxu0 %v1651
      %1717 = vmatpush.msra.mxu0 %v1649
      %1718 = vmatpush.msra.mxu0 %v1647
      %1719 = vmatpush.msra.mxu0 %v1645
      %1720 = vmatpush.msra.mxu0 %v1643
      %1721 = vmatpush.msra.mxu0 %v1641
      %1722 = vmatpush.msra.mxu0 %v1639
      %1723 = vmatpush.msra.mxu0 %v1637
      %1724 = vmatmul.f32.gmra.mxu0 %v1661
      %v1725 = vpop.f32.mrf.mxu0
      %v1726 = vadd.f32 %v1655, %v1725
      %1727 = vmatmul.f32.gmra.mxu0 %v1664
      %v1728 = vpop.f32.mrf.mxu0
      %v1729 = vadd.f32 %v1655, %v1728
      %1730 = vmatmul.f32.gmra.mxu0 %v1667
      %v1731 = vpop.f32.mrf.mxu0
      %v1732 = vadd.f32 %v1655, %v1731
      %1733 = vmatmul.f32.gmra.mxu0 %v1670
      %v1734 = vpop.f32.mrf.mxu0
      %v1735 = vadd.f32 %v1655, %v1734
      %1736 = vmatmul.f32.gmra.mxu0 %v1673
      %v1737 = vpop.f32.mrf.mxu0
      %v1738 = vadd.f32 %v1655, %v1737
      %1739 = vmatmul.f32.gmra.mxu0 %v1676
      %v1740 = vpop.f32.mrf.mxu0
      %v1741 = vadd.f32 %v1655, %v1740
      %1742 = vmatmul.f32.gmra.mxu0 %v1679
      %v1743 = vpop.f32.mrf.mxu0
      %v1744 = vadd.f32 %v1655, %v1743
      %1745 = vmatmul.f32.gmra.mxu0 %v1682
      %v1746 = vpop.f32.mrf.mxu0
      %v1747 = vadd.f32 %v1655, %v1746
      %1748 = vmatmul.f32.gmra.mxu0 %v1685
      %v1749 = vpop.f32.mrf.mxu0
      %v1750 = vadd.f32 %v1655, %v1749
      %1751 = vmatmul.f32.gmra.mxu0 %v1688
      %v1752 = vpop.f32.mrf.mxu0
      %v1753 = vadd.f32 %v1655, %v1752
      %1754 = vmatmul.f32.gmra.mxu0 %v1691
      %v1755 = vpop.f32.mrf.mxu0
      %v1756 = vadd.f32 %v1655, %v1755
      %1757 = vmatmul.f32.gmra.mxu0 %v1694
      %v1758 = vpop.f32.mrf.mxu0
      %v1759 = vadd.f32 %v1655, %v1758
      %1760 = vmatmul.f32.gmra.mxu0 %v1697
      %v1761 = vpop.f32.mrf.mxu0
      %v1762 = vadd.f32 %v1655, %v1761
      %1763 = vmatmul.f32.gmra.mxu0 %v1700
      %v1764 = vpop.f32.mrf.mxu0
      %v1765 = vadd.f32 %v1655, %v1764
      %1766 = vmatmul.f32.gmra.mxu0 %v1703
      %v1767 = vpop.f32.mrf.mxu0
      %v1768 = vadd.f32 %v1655, %v1767
      %1769 = vmatmul.f32.gmra.mxu0 %v1706
      %v1770 = vpop.f32.mrf.mxu0
      %v1771 = vadd.f32 %v1655, %v1770
      %1772 = vdwg.mxu0
      %1773 = vmatpush.msra.mxu0 0.0
      %1774 = vmatpush.msra.mxu0 0.0
      %1775 = vmatpush.msra.mxu0 0.0
      %1776 = vmatpush.msra.mxu0 0.0
      %1777 = vmatpush.msra.mxu0 0.0
      %1778 = vmatpush.msra.mxu0 0.0
      %1779 = vmatpush.msra.mxu0 0.0
      %1780 = vmatpush.msra.mxu0 0.0
      %1781 = vmatpush.msra.mxu0 %v1652
      %1782 = vmatpush.msra.mxu0 %v1650
      %1783 = vmatpush.msra.mxu0 %v1648
      %1784 = vmatpush.msra.mxu0 %v1646
      %1785 = vmatpush.msra.mxu0 %v1644
      %1786 = vmatpush.msra.mxu0 %v1642
      %1787 = vmatpush.msra.mxu0 %v1640
      %1788 = vmatpush.msra.mxu0 %v1638
      %1789 = vmatmul.f32.gmra.mxu0 %v1661
      %v1790 = vpop.f32.mrf.mxu0
      %v1791 = vadd.f32 %v1656, %v1790
      %1792 = vmatmul.f32.gmra.mxu0 %v1664
      %v1793 = vpop.f32.mrf.mxu0
      %v1794 = vadd.f32 %v1656, %v1793
      %1795 = vmatmul.f32.gmra.mxu0 %v1667
      %v1796 = vpop.f32.mrf.mxu0
      %v1797 = vadd.f32 %v1656, %v1796
      %1798 = vmatmul.f32.gmra.mxu0 %v1670
      %v1799 = vpop.f32.mrf.mxu0
      %v1800 = vadd.f32 %v1656, %v1799
      %1801 = vmatmul.f32.gmra.mxu0 %v1673
      %v1802 = vpop.f32.mrf.mxu0
      %v1803 = vadd.f32 %v1656, %v1802
      %1804 = vmatmul.f32.gmra.mxu0 %v1676
      %v1805 = vpop.f32.mrf.mxu0
      %v1806 = vadd.f32 %v1656, %v1805
      %1807 = vmatmul.f32.gmra.mxu0 %v1679
      %v1808 = vpop.f32.mrf.mxu0
      %v1809 = vadd.f32 %v1656, %v1808
      %1810 = vmatmul.f32.gmra.mxu0 %v1682
      %v1811 = vpop.f32.mrf.mxu0
      %v1812 = vadd.f32 %v1656, %v1811
      %1813 = vmatmul.f32.gmra.mxu0 %v1685
      %v1814 = vpop.f32.mrf.mxu0
      %v1815 = vadd.f32 %v1656, %v1814
      %1816 = vmatmul.f32.gmra.mxu0 %v1688
      %v1817 = vpop.f32.mrf.mxu0
      %v1818 = vadd.f32 %v1656, %v1817
      %1819 = vmatmul.f32.gmra.mxu0 %v1691
      %v1820 = vpop.f32.mrf.mxu0
      %v1821 = vadd.f32 %v1656, %v1820
      %1822 = vmatmul.f32.gmra.mxu0 %v1694
      %v1823 = vpop.f32.mrf.mxu0
      %v1824 = vadd.f32 %v1656, %v1823
      %1825 = vmatmul.f32.gmra.mxu0 %v1697
      %v1826 = vpop.f32.mrf.mxu0
      %v1827 = vadd.f32 %v1656, %v1826
      %1828 = vmatmul.f32.gmra.mxu0 %v1700
      %v1829 = vpop.f32.mrf.mxu0
      %v1830 = vadd.f32 %v1656, %v1829
      %1831 = vmatmul.f32.gmra.mxu0 %v1703
      %v1832 = vpop.f32.mrf.mxu0
      %v1833 = vadd.f32 %v1656, %v1832
      %1834 = vmatmul.f32.gmra.mxu0 %v1706
      %v1835 = vpop.f32.mrf.mxu0
      %v1836 = vadd.f32 %v1656, %v1835
      %1837 = vdwg.mxu0
      %v1838 = vmul.f32 %v1726, 0.5
      %v1839 = vmul.f32 %v1729, 0.5
      %v1840 = vmul.f32 %v1732, 0.5
      %v1841 = vmul.f32 %v1735, 0.5
      %v1842 = vmul.f32 %v1738, 0.5
      %v1843 = vmul.f32 %v1741, 0.5
      %v1844 = vmul.f32 %v1744, 0.5
      %v1845 = vmul.f32 %v1747, 0.5
      %v1846 = vmul.f32 %v1750, 0.5
      %v1847 = vmul.f32 %v1753, 0.5
      %v1848 = vmul.f32 %v1756, 0.5
      %v1849 = vmul.f32 %v1759, 0.5
      %v1850 = vmul.f32 %v1762, 0.5
      %v1851 = vmul.f32 %v1765, 0.5
      %v1852 = vmul.f32 %v1768, 0.5
      %v1853 = vmul.f32 %v1771, 0.5
      %v1854 = vtanh.pop %v1838
      %v1855 = vtanh.pop %v1839
      %v1856 = vtanh.pop %v1840
      %v1857 = vtanh.pop %v1841
      %v1858 = vtanh.pop %v1842
      %v1859 = vtanh.pop %v1843
      %v1860 = vtanh.pop %v1844
      %v1861 = vtanh.pop %v1845
      %v1862 = vtanh.pop %v1846
      %v1863 = vtanh.pop %v1847
      %v1864 = vtanh.pop %v1848
      %v1865 = vtanh.pop %v1849
      %v1866 = vtanh.pop %v1850
      %v1867 = vtanh.pop %v1851
      %v1868 = vtanh.pop %v1852
      %v1869 = vtanh.pop %v1853
      %v1870 = vmul.f32 %v1854, 0.5
      %v1871 = vmul.f32 %v1855, 0.5
      %v1872 = vmul.f32 %v1856, 0.5
      %v1873 = vmul.f32 %v1857, 0.5
      %v1874 = vmul.f32 %v1858, 0.5
      %v1875 = vmul.f32 %v1859, 0.5
      %v1876 = vmul.f32 %v1860, 0.5
      %v1877 = vmul.f32 %v1861, 0.5
      %v1878 = vmul.f32 %v1862, 0.5
      %v1879 = vmul.f32 %v1863, 0.5
      %v1880 = vmul.f32 %v1864, 0.5
      %v1881 = vmul.f32 %v1865, 0.5
      %v1882 = vmul.f32 %v1866, 0.5
      %v1883 = vmul.f32 %v1867, 0.5
      %v1884 = vmul.f32 %v1868, 0.5
      %v1885 = vmul.f32 %v1869, 0.5
      %v1886 = vadd.f32 %v1870, 0.5
      %v1887 = vadd.f32 %v1871, 0.5
      %v1888 = vadd.f32 %v1872, 0.5
      %v1889 = vadd.f32 %v1873, 0.5
      %v1890 = vadd.f32 %v1874, 0.5
      %v1891 = vadd.f32 %v1875, 0.5
      %v1892 = vadd.f32 %v1876, 0.5
      %v1893 = vadd.f32 %v1877, 0.5
      %v1894 = vadd.f32 %v1878, 0.5
      %v1895 = vadd.f32 %v1879, 0.5
      %v1896 = vadd.f32 %v1880, 0.5
      %v1897 = vadd.f32 %v1881, 0.5
      %v1898 = vadd.f32 %v1882, 0.5
      %v1899 = vadd.f32 %v1883, 0.5
      %v1900 = vadd.f32 %v1884, 0.5
      %v1901 = vadd.f32 %v1885, 0.5
      %v1902 = vmul.f32 %v1886, %v1605
      %v1903 = vmul.f32 %v1887, %v1606
      %v1904 = vmul.f32 %v1888, %v1607
      %v1905 = vmul.f32 %v1889, %v1608
      %v1906 = vmul.f32 %v1890, %v1609
      %v1907 = vmul.f32 %v1891, %v1610
      %v1908 = vmul.f32 %v1892, %v1611
      %v1909 = vmul.f32 %v1893, %v1612
      %v1910 = vmul.f32 %v1894, %v1613
      %v1911 = vmul.f32 %v1895, %v1614
      %v1912 = vmul.f32 %v1896, %v1615
      %v1913 = vmul.f32 %v1897, %v1616
      %v1914 = vmul.f32 %v1898, %v1617
      %v1915 = vmul.f32 %v1899, %v1618
      %v1916 = vmul.f32 %v1900, %v1619
      %v1917 = vmul.f32 %v1901, %v1620
      %1934 = vrot.lane.b32.xlu0 %v1902, 96
      %v1935 = vpop.permute.xlu0 %1934
      %1936 = vrot.lane.b32.xlu0 %v1903, 96
      %v1937 = vpop.permute.xlu0 %1936
      %1938 = vrot.lane.b32.xlu0 %v1904, 96
      %v1939 = vpop.permute.xlu0 %1938
      %1940 = vrot.lane.b32.xlu0 %v1905, 96
      %v1941 = vpop.permute.xlu0 %1940
      %1942 = vrot.lane.b32.xlu0 %v1906, 96
      %v1943 = vpop.permute.xlu0 %1942
      %1944 = vrot.lane.b32.xlu0 %v1907, 96
      %v1945 = vpop.permute.xlu0 %1944
      %1946 = vrot.lane.b32.xlu0 %v1908, 96
      %v1947 = vpop.permute.xlu0 %1946
      %1948 = vrot.lane.b32.xlu0 %v1909, 96
      %v1949 = vpop.permute.xlu0 %1948
      %1950 = vrot.lane.b32.xlu0 %v1910, 96
      %v1951 = vpop.permute.xlu0 %1950
      %1952 = vrot.lane.b32.xlu0 %v1911, 96
      %v1953 = vpop.permute.xlu0 %1952
      %1954 = vrot.lane.b32.xlu0 %v1912, 96
      %v1955 = vpop.permute.xlu0 %1954
      %1956 = vrot.lane.b32.xlu0 %v1913, 96
      %v1957 = vpop.permute.xlu0 %1956
      %1958 = vrot.lane.b32.xlu0 %v1914, 96
      %v1959 = vpop.permute.xlu0 %1958
      %1960 = vrot.lane.b32.xlu0 %v1915, 96
      %v1961 = vpop.permute.xlu0 %1960
      %1962 = vrot.lane.b32.xlu0 %v1916, 96
      %v1963 = vpop.permute.xlu0 %1962
      %1964 = vrot.lane.b32.xlu0 %v1917, 96
      %v1965 = vpop.permute.xlu0 %1964
      %v1982 = vadd.f32 %v1902, %v1935
      %v1983 = vadd.f32 %v1903, %v1937
      %v1984 = vadd.f32 %v1904, %v1939
      %v1985 = vadd.f32 %v1905, %v1941
      %v1986 = vadd.f32 %v1906, %v1943
      %v1987 = vadd.f32 %v1907, %v1945
      %v1988 = vadd.f32 %v1908, %v1947
      %v1989 = vadd.f32 %v1909, %v1949
      %v1990 = vadd.f32 %v1910, %v1951
      %v1991 = vadd.f32 %v1911, %v1953
      %v1992 = vadd.f32 %v1912, %v1955
      %v1993 = vadd.f32 %v1913, %v1957
      %v1994 = vadd.f32 %v1914, %v1959
      %v1995 = vadd.f32 %v1915, %v1961
      %v1996 = vadd.f32 %v1916, %v1963
      %v1997 = vadd.f32 %v1917, %v1965
      %2014 = vrot.lane.b32.xlu0 %v1621, 96
      %v2015 = vpop.permute.xlu0 %2014
      %2016 = vrot.lane.b32.xlu0 %v1622, 96
      %v2017 = vpop.permute.xlu0 %2016
      %2018 = vrot.lane.b32.xlu0 %v1623, 96
      %v2019 = vpop.permute.xlu0 %2018
      %2020 = vrot.lane.b32.xlu0 %v1624, 96
      %v2021 = vpop.permute.xlu0 %2020
      %2022 = vrot.lane.b32.xlu0 %v1625, 96
      %v2023 = vpop.permute.xlu0 %2022
      %2024 = vrot.lane.b32.xlu0 %v1626, 96
      %v2025 = vpop.permute.xlu0 %2024
      %2026 = vrot.lane.b32.xlu0 %v1627, 96
      %v2027 = vpop.permute.xlu0 %2026
      %2028 = vrot.lane.b32.xlu0 %v1628, 96
      %v2029 = vpop.permute.xlu0 %2028
      %2030 = vrot.lane.b32.xlu0 %v1629, 96
      %v2031 = vpop.permute.xlu0 %2030
      %2032 = vrot.lane.b32.xlu0 %v1630, 96
      %v2033 = vpop.permute.xlu0 %2032
      %2034 = vrot.lane.b32.xlu0 %v1631, 96
      %v2035 = vpop.permute.xlu0 %2034
      %2036 = vrot.lane.b32.xlu0 %v1632, 96
      %v2037 = vpop.permute.xlu0 %2036
      %2038 = vrot.lane.b32.xlu0 %v1633, 96
      %v2039 = vpop.permute.xlu0 %2038
      %2040 = vrot.lane.b32.xlu0 %v1634, 96
      %v2041 = vpop.permute.xlu0 %2040
      %2042 = vrot.lane.b32.xlu0 %v1635, 96
      %v2043 = vpop.permute.xlu0 %2042
      %2044 = vrot.lane.b32.xlu0 %v1636, 96
      %v2045 = vpop.permute.xlu0 %2044
      %v2062 = vmax.f32 %v1621, %v2015
      %v2063 = vmax.f32 %v1622, %v2017
      %v2064 = vmax.f32 %v1623, %v2019
      %v2065 = vmax.f32 %v1624, %v2021
      %v2066 = vmax.f32 %v1625, %v2023
      %v2067 = vmax.f32 %v1626, %v2025
      %v2068 = vmax.f32 %v1627, %v2027
      %v2069 = vmax.f32 %v1628, %v2029
      %v2070 = vmax.f32 %v1629, %v2031
      %v2071 = vmax.f32 %v1630, %v2033
      %v2072 = vmax.f32 %v1631, %v2035
      %v2073 = vmax.f32 %v1632, %v2037
      %v2074 = vmax.f32 %v1633, %v2039
      %v2075 = vmax.f32 %v1634, %v2041
      %v2076 = vmax.f32 %v1635, %v2043
      %v2077 = vmax.f32 %v1636, %v2045
      %v2078 = vtanh.pop %v1791
      %v2079 = vtanh.pop %v1794
      %v2080 = vtanh.pop %v1797
      %v2081 = vtanh.pop %v1800
      %v2082 = vtanh.pop %v1803
      %v2083 = vtanh.pop %v1806
      %v2084 = vtanh.pop %v1809
      %v2085 = vtanh.pop %v1812
      %v2086 = vtanh.pop %v1815
      %v2087 = vtanh.pop %v1818
      %v2088 = vtanh.pop %v1821
      %v2089 = vtanh.pop %v1824
      %v2090 = vtanh.pop %v1827
      %v2091 = vtanh.pop %v1830
      %v2092 = vtanh.pop %v1833
      %v2093 = vtanh.pop %v1836
      %2110 = vrot.lane.b32.xlu0 %v2078, 64
      %v2111 = vpop.permute.xlu0 %2110
      %2112 = vrot.lane.b32.xlu0 %v2079, 64
      %v2113 = vpop.permute.xlu0 %2112
      %2114 = vrot.lane.b32.xlu0 %v2080, 64
      %v2115 = vpop.permute.xlu0 %2114
      %2116 = vrot.lane.b32.xlu0 %v2081, 64
      %v2117 = vpop.permute.xlu0 %2116
      %2118 = vrot.lane.b32.xlu0 %v2082, 64
      %v2119 = vpop.permute.xlu0 %2118
      %2120 = vrot.lane.b32.xlu0 %v2083, 64
      %v2121 = vpop.permute.xlu0 %2120
      %2122 = vrot.lane.b32.xlu0 %v2084, 64
      %v2123 = vpop.permute.xlu0 %2122
      %2124 = vrot.lane.b32.xlu0 %v2085, 64
      %v2125 = vpop.permute.xlu0 %2124
      %2126 = vrot.lane.b32.xlu0 %v2086, 64
      %v2127 = vpop.permute.xlu0 %2126
      %2128 = vrot.lane.b32.xlu0 %v2087, 64
      %v2129 = vpop.permute.xlu0 %2128
      %2130 = vrot.lane.b32.xlu0 %v2088, 64
      %v2131 = vpop.permute.xlu0 %2130
      %2132 = vrot.lane.b32.xlu0 %v2089, 64
      %v2133 = vpop.permute.xlu0 %2132
      %2134 = vrot.lane.b32.xlu0 %v2090, 64
      %v2135 = vpop.permute.xlu0 %2134
      %2136 = vrot.lane.b32.xlu0 %v2091, 64
      %v2137 = vpop.permute.xlu0 %2136
      %2138 = vrot.lane.b32.xlu0 %v2092, 64
      %v2139 = vpop.permute.xlu0 %2138
      %2140 = vrot.lane.b32.xlu0 %v2093, 64
      %v2141 = vpop.permute.xlu0 %2140
      %v2158 = vmul.f32 %v1886, %v2111
      %v2159 = vmul.f32 %v1887, %v2113
      %v2160 = vmul.f32 %v1888, %v2115
      %v2161 = vmul.f32 %v1889, %v2117
      %v2162 = vmul.f32 %v1890, %v2119
      %v2163 = vmul.f32 %v1891, %v2121
      %v2164 = vmul.f32 %v1892, %v2123
      %v2165 = vmul.f32 %v1893, %v2125
      %v2166 = vmul.f32 %v1894, %v2127
      %v2167 = vmul.f32 %v1895, %v2129
      %v2168 = vmul.f32 %v1896, %v2131
      %v2169 = vmul.f32 %v1897, %v2133
      %v2170 = vmul.f32 %v1898, %v2135
      %v2171 = vmul.f32 %v1899, %v2137
      %v2172 = vmul.f32 %v1900, %v2139
      %v2173 = vmul.f32 %v1901, %v2141
      %2190 = vrot.lane.b32.xlu0 %v1982, 64
      %v2191 = vpop.permute.xlu0 %2190
      %2192 = vrot.lane.b32.xlu0 %v1983, 64
      %v2193 = vpop.permute.xlu0 %2192
      %2194 = vrot.lane.b32.xlu0 %v1984, 64
      %v2195 = vpop.permute.xlu0 %2194
      %2196 = vrot.lane.b32.xlu0 %v1985, 64
      %v2197 = vpop.permute.xlu0 %2196
      %2198 = vrot.lane.b32.xlu0 %v1986, 64
      %v2199 = vpop.permute.xlu0 %2198
      %2200 = vrot.lane.b32.xlu0 %v1987, 64
      %v2201 = vpop.permute.xlu0 %2200
      %2202 = vrot.lane.b32.xlu0 %v1988, 64
      %v2203 = vpop.permute.xlu0 %2202
      %2204 = vrot.lane.b32.xlu0 %v1989, 64
      %v2205 = vpop.permute.xlu0 %2204
      %2206 = vrot.lane.b32.xlu0 %v1990, 64
      %v2207 = vpop.permute.xlu0 %2206
      %2208 = vrot.lane.b32.xlu0 %v1991, 64
      %v2209 = vpop.permute.xlu0 %2208
      %2210 = vrot.lane.b32.xlu0 %v1992, 64
      %v2211 = vpop.permute.xlu0 %2210
      %2212 = vrot.lane.b32.xlu0 %v1993, 64
      %v2213 = vpop.permute.xlu0 %2212
      %2214 = vrot.lane.b32.xlu0 %v1994, 64
      %v2215 = vpop.permute.xlu0 %2214
      %2216 = vrot.lane.b32.xlu0 %v1995, 64
      %v2217 = vpop.permute.xlu0 %2216
      %2218 = vrot.lane.b32.xlu0 %v1996, 64
      %v2219 = vpop.permute.xlu0 %2218
      %2220 = vrot.lane.b32.xlu0 %v1997, 64
      %v2221 = vpop.permute.xlu0 %2220
      %v2238 = vadd.f32 %v2158, %v2191
      %v2239 = vadd.f32 %v2159, %v2193
      %v2240 = vadd.f32 %v2160, %v2195
      %v2241 = vadd.f32 %v2161, %v2197
      %v2242 = vadd.f32 %v2162, %v2199
      %v2243 = vadd.f32 %v2163, %v2201
      %v2244 = vadd.f32 %v2164, %v2203
      %v2245 = vadd.f32 %v2165, %v2205
      %v2246 = vadd.f32 %v2166, %v2207
      %v2247 = vadd.f32 %v2167, %v2209
      %v2248 = vadd.f32 %v2168, %v2211
      %v2249 = vadd.f32 %v2169, %v2213
      %v2250 = vadd.f32 %v2170, %v2215
      %v2251 = vadd.f32 %v2171, %v2217
      %v2252 = vadd.f32 %v2172, %v2219
      %v2253 = vadd.f32 %v2173, %v2221
      %v2254 = vtanh.pop %v2238
      %v2255 = vtanh.pop %v2239
      %v2256 = vtanh.pop %v2240
      %v2257 = vtanh.pop %v2241
      %v2258 = vtanh.pop %v2242
      %v2259 = vtanh.pop %v2243
      %v2260 = vtanh.pop %v2244
      %v2261 = vtanh.pop %v2245
      %v2262 = vtanh.pop %v2246
      %v2263 = vtanh.pop %v2247
      %v2264 = vtanh.pop %v2248
      %v2265 = vtanh.pop %v2249
      %v2266 = vtanh.pop %v2250
      %v2267 = vtanh.pop %v2251
      %v2268 = vtanh.pop %v2252
      %v2269 = vtanh.pop %v2253
      %2286 = vrot.lane.b32.xlu0 %v2254, 32
      %v2287 = vpop.permute.xlu0 %2286
      %2288 = vrot.lane.b32.xlu0 %v2255, 32
      %v2289 = vpop.permute.xlu0 %2288
      %2290 = vrot.lane.b32.xlu0 %v2256, 32
      %v2291 = vpop.permute.xlu0 %2290
      %2292 = vrot.lane.b32.xlu0 %v2257, 32
      %v2293 = vpop.permute.xlu0 %2292
      %2294 = vrot.lane.b32.xlu0 %v2258, 32
      %v2295 = vpop.permute.xlu0 %2294
      %2296 = vrot.lane.b32.xlu0 %v2259, 32
      %v2297 = vpop.permute.xlu0 %2296
      %2298 = vrot.lane.b32.xlu0 %v2260, 32
      %v2299 = vpop.permute.xlu0 %2298
      %2300 = vrot.lane.b32.xlu0 %v2261, 32
      %v2301 = vpop.permute.xlu0 %2300
      %2302 = vrot.lane.b32.xlu0 %v2262, 32
      %v2303 = vpop.permute.xlu0 %2302
      %2304 = vrot.lane.b32.xlu0 %v2263, 32
      %v2305 = vpop.permute.xlu0 %2304
      %2306 = vrot.lane.b32.xlu0 %v2264, 32
      %v2307 = vpop.permute.xlu0 %2306
      %2308 = vrot.lane.b32.xlu0 %v2265, 32
      %v2309 = vpop.permute.xlu0 %2308
      %2310 = vrot.lane.b32.xlu0 %v2266, 32
      %v2311 = vpop.permute.xlu0 %2310
      %2312 = vrot.lane.b32.xlu0 %v2267, 32
      %v2313 = vpop.permute.xlu0 %2312
      %2314 = vrot.lane.b32.xlu0 %v2268, 32
      %v2315 = vpop.permute.xlu0 %2314
      %2316 = vrot.lane.b32.xlu0 %v2269, 32
      %v2317 = vpop.permute.xlu0 %2316
      %v2334 = vmul.f32 %v1886, %v2287
      %v2335 = vmul.f32 %v1887, %v2289
      %v2336 = vmul.f32 %v1888, %v2291
      %v2337 = vmul.f32 %v1889, %v2293
      %v2338 = vmul.f32 %v1890, %v2295
      %v2339 = vmul.f32 %v1891, %v2297
      %v2340 = vmul.f32 %v1892, %v2299
      %v2341 = vmul.f32 %v1893, %v2301
      %v2342 = vmul.f32 %v1894, %v2303
      %v2343 = vmul.f32 %v1895, %v2305
      %v2344 = vmul.f32 %v1896, %v2307
      %v2345 = vmul.f32 %v1897, %v2309
      %v2346 = vmul.f32 %v1898, %v2311
      %v2347 = vmul.f32 %v1899, %v2313
      %v2348 = vmul.f32 %v1900, %v2315
      %v2349 = vmul.f32 %v1901, %v2317
      %2366 = vrot.lane.b32.xlu0 %v2062, 96
      %v2367 = vpop.permute.xlu0 %2366
      %2368 = vrot.lane.b32.xlu0 %v2063, 96
      %v2369 = vpop.permute.xlu0 %2368
      %2370 = vrot.lane.b32.xlu0 %v2064, 96
      %v2371 = vpop.permute.xlu0 %2370
      %2372 = vrot.lane.b32.xlu0 %v2065, 96
      %v2373 = vpop.permute.xlu0 %2372
      %2374 = vrot.lane.b32.xlu0 %v2066, 96
      %v2375 = vpop.permute.xlu0 %2374
      %2376 = vrot.lane.b32.xlu0 %v2067, 96
      %v2377 = vpop.permute.xlu0 %2376
      %2378 = vrot.lane.b32.xlu0 %v2068, 96
      %v2379 = vpop.permute.xlu0 %2378
      %2380 = vrot.lane.b32.xlu0 %v2069, 96
      %v2381 = vpop.permute.xlu0 %2380
      %2382 = vrot.lane.b32.xlu0 %v2070, 96
      %v2383 = vpop.permute.xlu0 %2382
      %2384 = vrot.lane.b32.xlu0 %v2071, 96
      %v2385 = vpop.permute.xlu0 %2384
      %2386 = vrot.lane.b32.xlu0 %v2072, 96
      %v2387 = vpop.permute.xlu0 %2386
      %2388 = vrot.lane.b32.xlu0 %v2073, 96
      %v2389 = vpop.permute.xlu0 %2388
      %2390 = vrot.lane.b32.xlu0 %v2074, 96
      %v2391 = vpop.permute.xlu0 %2390
      %2392 = vrot.lane.b32.xlu0 %v2075, 96
      %v2393 = vpop.permute.xlu0 %2392
      %2394 = vrot.lane.b32.xlu0 %v2076, 96
      %v2395 = vpop.permute.xlu0 %2394
      %2396 = vrot.lane.b32.xlu0 %v2077, 96
      %v2397 = vpop.permute.xlu0 %2396
      %v2414 = vmax.f32 %v2334, %v2367
      %v2415 = vmax.f32 %v2335, %v2369
      %v2416 = vmax.f32 %v2336, %v2371
      %v2417 = vmax.f32 %v2337, %v2373
      %v2418 = vmax.f32 %v2338, %v2375
      %v2419 = vmax.f32 %v2339, %v2377
      %v2420 = vmax.f32 %v2340, %v2379
      %v2421 = vmax.f32 %v2341, %v2381
      %v2422 = vmax.f32 %v2342, %v2383
      %v2423 = vmax.f32 %v2343, %v2385
      %v2424 = vmax.f32 %v2344, %v2387
      %v2425 = vmax.f32 %v2345, %v2389
      %v2426 = vmax.f32 %v2346, %v2391
      %v2427 = vmax.f32 %v2347, %v2393
      %v2428 = vmax.f32 %v2348, %v2395
      %v2429 = vmax.f32 %v2349, %v2397
      %v2430 = vadd.f32 %v2334, %v2414
      %v2431 = vadd.f32 %v2335, %v2415
      %v2432 = vadd.f32 %v2336, %v2416
      %v2433 = vadd.f32 %v2337, %v2417
      %v2434 = vadd.f32 %v2338, %v2418
      %v2435 = vadd.f32 %v2339, %v2419
      %v2436 = vadd.f32 %v2340, %v2420
      %v2437 = vadd.f32 %v2341, %v2421
      %v2438 = vadd.f32 %v2342, %v2422
      %v2439 = vadd.f32 %v2343, %v2423
      %v2440 = vadd.f32 %v2344, %v2424
      %v2441 = vadd.f32 %v2345, %v2425
      %v2442 = vadd.f32 %v2346, %v2426
      %v2443 = vadd.f32 %v2347, %v2427
      %v2444 = vadd.f32 %v2348, %v2428
      %v2445 = vadd.f32 %v2349, %v2429
      %2462 = vrot.lane.b32.xlu0 %v2430, 32
      %v2463 = vpop.permute.xlu0 %2462
      %2464 = vrot.lane.b32.xlu0 %v2431, 32
      %v2465 = vpop.permute.xlu0 %2464
      %2466 = vrot.lane.b32.xlu0 %v2432, 32
      %v2467 = vpop.permute.xlu0 %2466
      %2468 = vrot.lane.b32.xlu0 %v2433, 32
      %v2469 = vpop.permute.xlu0 %2468
      %2470 = vrot.lane.b32.xlu0 %v2434, 32
      %v2471 = vpop.permute.xlu0 %2470
      %2472 = vrot.lane.b32.xlu0 %v2435, 32
      %v2473 = vpop.permute.xlu0 %2472
      %2474 = vrot.lane.b32.xlu0 %v2436, 32
      %v2475 = vpop.permute.xlu0 %2474
      %2476 = vrot.lane.b32.xlu0 %v2437, 32
      %v2477 = vpop.permute.xlu0 %2476
      %2478 = vrot.lane.b32.xlu0 %v2438, 32
      %v2479 = vpop.permute.xlu0 %2478
      %2480 = vrot.lane.b32.xlu0 %v2439, 32
      %v2481 = vpop.permute.xlu0 %2480
      %2482 = vrot.lane.b32.xlu0 %v2440, 32
      %v2483 = vpop.permute.xlu0 %2482
      %2484 = vrot.lane.b32.xlu0 %v2441, 32
      %v2485 = vpop.permute.xlu0 %2484
      %2486 = vrot.lane.b32.xlu0 %v2442, 32
      %v2487 = vpop.permute.xlu0 %2486
      %2488 = vrot.lane.b32.xlu0 %v2443, 32
      %v2489 = vpop.permute.xlu0 %2488
      %2490 = vrot.lane.b32.xlu0 %v2444, 32
      %v2491 = vpop.permute.xlu0 %2490
      %2492 = vrot.lane.b32.xlu0 %v2445, 32
      %v2493 = vpop.permute.xlu0 %2492
      %2510 = vst.msk [vmem:[#allocation2 + $0x100] sm:$0xff] %vm322, %v2463
      %2511 = vst.msk [vmem:[#allocation2 + $0x108] sm:$0xff] %vm322, %v2465
      %2512 = vst.msk [vmem:[#allocation2 + $0x110] sm:$0xff] %vm322, %v2467
      %2513 = vst.msk [vmem:[#allocation2 + $0x118] sm:$0xff] %vm322, %v2469
      %2514 = vst.msk [vmem:[#allocation2 + $0x120] sm:$0xff] %vm322, %v2471
      %2515 = vst.msk [vmem:[#allocation2 + $0x128] sm:$0xff] %vm322, %v2473
      %2516 = vst.msk [vmem:[#allocation2 + $0x130] sm:$0xff] %vm322, %v2475
      %2517 = vst.msk [vmem:[#allocation2 + $0x138] sm:$0xff] %vm322, %v2477
      %2518 = vst.msk [vmem:[#allocation2 + $0x140] sm:$0xff] %vm322, %v2479
      %2519 = vst.msk [vmem:[#allocation2 + $0x148] sm:$0xff] %vm322, %v2481
      %2520 = vst.msk [vmem:[#allocation2 + $0x150] sm:$0xff] %vm322, %v2483
      %2521 = vst.msk [vmem:[#allocation2 + $0x158] sm:$0xff] %vm322, %v2485
      %2522 = vst.msk [vmem:[#allocation2 + $0x160] sm:$0xff] %vm322, %v2487
      %2523 = vst.msk [vmem:[#allocation2 + $0x168] sm:$0xff] %vm322, %v2489
      %2524 = vst.msk [vmem:[#allocation2 + $0x170] sm:$0xff] %vm322, %v2491
      %2525 = vst.msk [vmem:[#allocation2 + $0x178] sm:$0xff] %vm322, %v2493
      %2534 = vrot.lane.b32.xlu0 %v2334, 32
      %v2535 = vpop.permute.xlu0 %2534
      %2536 = vrot.lane.b32.xlu0 %v2335, 32
      %v2537 = vpop.permute.xlu0 %2536
      %2538 = vrot.lane.b32.xlu0 %v2336, 32
      %v2539 = vpop.permute.xlu0 %2538
      %2540 = vrot.lane.b32.xlu0 %v2337, 32
      %v2541 = vpop.permute.xlu0 %2540
      %2542 = vrot.lane.b32.xlu0 %v2338, 32
      %v2543 = vpop.permute.xlu0 %2542
      %2544 = vrot.lane.b32.xlu0 %v2339, 32
      %v2545 = vpop.permute.xlu0 %2544
      %2546 = vrot.lane.b32.xlu0 %v2340, 32
      %v2547 = vpop.permute.xlu0 %2546
      %2548 = vrot.lane.b32.xlu0 %v2341, 32
      %v2549 = vpop.permute.xlu0 %2548
      %2558 = vst.msk [vmem:[#allocation3] sm:$0xff] %vm322, %v2535
      %2559 = vst.msk [vmem:[#allocation3 + $0x8] sm:$0xff] %vm322, %v2537
      %2560 = vst.msk [vmem:[#allocation3 + $0x10] sm:$0xff] %vm322, %v2539
      %2561 = vst.msk [vmem:[#allocation3 + $0x18] sm:$0xff] %vm322, %v2541
      %2562 = vst.msk [vmem:[#allocation3 + $0x20] sm:$0xff] %vm322, %v2543
      %2563 = vst.msk [vmem:[#allocation3 + $0x28] sm:$0xff] %vm322, %v2545
      %2564 = vst.msk [vmem:[#allocation3 + $0x30] sm:$0xff] %vm322, %v2547
      %2565 = vst.msk [vmem:[#allocation3 + $0x38] sm:$0xff] %vm322, %v2549
      %2574 = vrot.lane.b32.xlu0 %v2342, 64
      %v2575 = vpop.permute.xlu0 %2574
      %2576 = vrot.lane.b32.xlu0 %v2343, 64
      %v2577 = vpop.permute.xlu0 %2576
      %2578 = vrot.lane.b32.xlu0 %v2344, 64
      %v2579 = vpop.permute.xlu0 %2578
      %2580 = vrot.lane.b32.xlu0 %v2345, 64
      %v2581 = vpop.permute.xlu0 %2580
      %2582 = vrot.lane.b32.xlu0 %v2346, 64
      %v2583 = vpop.permute.xlu0 %2582
      %2584 = vrot.lane.b32.xlu0 %v2347, 64
      %v2585 = vpop.permute.xlu0 %2584
      %2586 = vrot.lane.b32.xlu0 %v2348, 64
      %v2587 = vpop.permute.xlu0 %2586
      %2588 = vrot.lane.b32.xlu0 %v2349, 64
      %v2589 = vpop.permute.xlu0 %2588
      %2598 = vst.msk [vmem:[#allocation3] sm:$0xff] %vm1380, %v2575
      %2599 = vst.msk [vmem:[#allocation3 + $0x8] sm:$0xff] %vm1380, %v2577
      %2600 = vst.msk [vmem:[#allocation3 + $0x10] sm:$0xff] %vm1380, %v2579
      %2601 = vst.msk [vmem:[#allocation3 + $0x18] sm:$0xff] %vm1380, %v2581
      %2602 = vst.msk [vmem:[#allocation3 + $0x20] sm:$0xff] %vm1380, %v2583
      %2603 = vst.msk [vmem:[#allocation3 + $0x28] sm:$0xff] %vm1380, %v2585
      %2604 = vst.msk [vmem:[#allocation3 + $0x30] sm:$0xff] %vm1380, %v2587
      %2605 = vst.msk [vmem:[#allocation3 + $0x38] sm:$0xff] %vm1380, %v2589
      %2614 = vrot.lane.b32.xlu0 %v2238, 64
      %v2615 = vpop.permute.xlu0 %2614
      %2616 = vrot.lane.b32.xlu0 %v2239, 64
      %v2617 = vpop.permute.xlu0 %2616
      %2618 = vrot.lane.b32.xlu0 %v2240, 64
      %v2619 = vpop.permute.xlu0 %2618
      %2620 = vrot.lane.b32.xlu0 %v2241, 64
      %v2621 = vpop.permute.xlu0 %2620
      %2622 = vrot.lane.b32.xlu0 %v2242, 64
      %v2623 = vpop.permute.xlu0 %2622
      %2624 = vrot.lane.b32.xlu0 %v2243, 64
      %v2625 = vpop.permute.xlu0 %2624
      %2626 = vrot.lane.b32.xlu0 %v2244, 64
      %v2627 = vpop.permute.xlu0 %2626
      %2628 = vrot.lane.b32.xlu0 %v2245, 64
      %v2629 = vpop.permute.xlu0 %2628
      %2638 = vst.msk [vmem:[#allocation4] sm:$0xff] %vm322, %v2615
      %2639 = vst.msk [vmem:[#allocation4 + $0x8] sm:$0xff] %vm322, %v2617
      %2640 = vst.msk [vmem:[#allocation4 + $0x10] sm:$0xff] %vm322, %v2619
      %2641 = vst.msk [vmem:[#allocation4 + $0x18] sm:$0xff] %vm322, %v2621
      %2642 = vst.msk [vmem:[#allocation4 + $0x20] sm:$0xff] %vm322, %v2623
      %2643 = vst.msk [vmem:[#allocation4 + $0x28] sm:$0xff] %vm322, %v2625
      %2644 = vst.msk [vmem:[#allocation4 + $0x30] sm:$0xff] %vm322, %v2627
      %2645 = vst.msk [vmem:[#allocation4 + $0x38] sm:$0xff] %vm322, %v2629
      %2654 = vrot.lane.b32.xlu0 %v2246, 96
      %v2655 = vpop.permute.xlu0 %2654
      %2656 = vrot.lane.b32.xlu0 %v2247, 96
      %v2657 = vpop.permute.xlu0 %2656
      %2658 = vrot.lane.b32.xlu0 %v2248, 96
      %v2659 = vpop.permute.xlu0 %2658
      %2660 = vrot.lane.b32.xlu0 %v2249, 96
      %v2661 = vpop.permute.xlu0 %2660
      %2662 = vrot.lane.b32.xlu0 %v2250, 96
      %v2663 = vpop.permute.xlu0 %2662
      %2664 = vrot.lane.b32.xlu0 %v2251, 96
      %v2665 = vpop.permute.xlu0 %2664
      %2666 = vrot.lane.b32.xlu0 %v2252, 96
      %v2667 = vpop.permute.xlu0 %2666
      %2668 = vrot.lane.b32.xlu0 %v2253, 96
      %v2669 = vpop.permute.xlu0 %2668
      %2678 = vst.msk [vmem:[#allocation4] sm:$0xff] %vm1380, %v2655
      %2679 = vst.msk [vmem:[#allocation4 + $0x8] sm:$0xff] %vm1380, %v2657
      %2680 = vst.msk [vmem:[#allocation4 + $0x10] sm:$0xff] %vm1380, %v2659
      %2681 = vst.msk [vmem:[#allocation4 + $0x18] sm:$0xff] %vm1380, %v2661
      %2682 = vst.msk [vmem:[#allocation4 + $0x20] sm:$0xff] %vm1380, %v2663
      %2683 = vst.msk [vmem:[#allocation4 + $0x28] sm:$0xff] %vm1380, %v2665
      %2684 = vst.msk [vmem:[#allocation4 + $0x30] sm:$0xff] %vm1380, %v2667
      %2685 = vst.msk [vmem:[#allocation4 + $0x38] sm:$0xff] %vm1380, %v2669
      %2694 = vrot.lane.b32.xlu0 %v2414, 32
      %v2695 = vpop.permute.xlu0 %2694
      %2696 = vrot.lane.b32.xlu0 %v2415, 32
      %v2697 = vpop.permute.xlu0 %2696
      %2698 = vrot.lane.b32.xlu0 %v2416, 32
      %v2699 = vpop.permute.xlu0 %2698
      %2700 = vrot.lane.b32.xlu0 %v2417, 32
      %v2701 = vpop.permute.xlu0 %2700
      %2702 = vrot.lane.b32.xlu0 %v2418, 32
      %v2703 = vpop.permute.xlu0 %2702
      %2704 = vrot.lane.b32.xlu0 %v2419, 32
      %v2705 = vpop.permute.xlu0 %2704
      %2706 = vrot.lane.b32.xlu0 %v2420, 32
      %v2707 = vpop.permute.xlu0 %2706
      %2708 = vrot.lane.b32.xlu0 %v2421, 32
      %v2709 = vpop.permute.xlu0 %2708
      %2718 = vst.msk [vmem:[#allocation5] sm:$0xff] %vm322, %v2695
      %2719 = vst.msk [vmem:[#allocation5 + $0x8] sm:$0xff] %vm322, %v2697
      %2720 = vst.msk [vmem:[#allocation5 + $0x10] sm:$0xff] %vm322, %v2699
      %2721 = vst.msk [vmem:[#allocation5 + $0x18] sm:$0xff] %vm322, %v2701
      %2722 = vst.msk [vmem:[#allocation5 + $0x20] sm:$0xff] %vm322, %v2703
      %2723 = vst.msk [vmem:[#allocation5 + $0x28] sm:$0xff] %vm322, %v2705
      %2724 = vst.msk [vmem:[#allocation5 + $0x30] sm:$0xff] %vm322, %v2707
      %2725 = vst.msk [vmem:[#allocation5 + $0x38] sm:$0xff] %vm322, %v2709
      %2734 = vrot.lane.b32.xlu0 %v2422, 64
      %v2735 = vpop.permute.xlu0 %2734
      %2736 = vrot.lane.b32.xlu0 %v2423, 64
      %v2737 = vpop.permute.xlu0 %2736
      %2738 = vrot.lane.b32.xlu0 %v2424, 64
      %v2739 = vpop.permute.xlu0 %2738
      %2740 = vrot.lane.b32.xlu0 %v2425, 64
      %v2741 = vpop.permute.xlu0 %2740
      %2742 = vrot.lane.b32.xlu0 %v2426, 64
      %v2743 = vpop.permute.xlu0 %2742
      %2744 = vrot.lane.b32.xlu0 %v2427, 64
      %v2745 = vpop.permute.xlu0 %2744
      %2746 = vrot.lane.b32.xlu0 %v2428, 64
      %v2747 = vpop.permute.xlu0 %2746
      %2748 = vrot.lane.b32.xlu0 %v2429, 64
      %v2749 = vpop.permute.xlu0 %2748
      %2758 = vst.msk [vmem:[#allocation5] sm:$0xff] %vm1380, %v2735
      %2759 = vst.msk [vmem:[#allocation5 + $0x8] sm:$0xff] %vm1380, %v2737
      %2760 = vst.msk [vmem:[#allocation5 + $0x10] sm:$0xff] %vm1380, %v2739
      %2761 = vst.msk [vmem:[#allocation5 + $0x18] sm:$0xff] %vm1380, %v2741
      %2762 = vst.msk [vmem:[#allocation5 + $0x20] sm:$0xff] %vm1380, %v2743
      %2763 = vst.msk [vmem:[#allocation5 + $0x28] sm:$0xff] %vm1380, %v2745
      %2764 = vst.msk [vmem:[#allocation5 + $0x30] sm:$0xff] %vm1380, %v2747
      %2765 = vst.msk [vmem:[#allocation5 + $0x38] sm:$0xff] %vm1380, %v2749
      %v2766 = vld [vmem:[#allocation3] sm:$0xff]
      %v2767 = vld [vmem:[#allocation3 + $0x8] sm:$0xff]
      %v2768 = vld [vmem:[#allocation3 + $0x10] sm:$0xff]
      %v2769 = vld [vmem:[#allocation3 + $0x18] sm:$0xff]
      %v2770 = vld [vmem:[#allocation3 + $0x20] sm:$0xff]
      %v2771 = vld [vmem:[#allocation3 + $0x28] sm:$0xff]
      %v2772 = vld [vmem:[#allocation3 + $0x30] sm:$0xff]
      %v2773 = vld [vmem:[#allocation3 + $0x38] sm:$0xff]
      %v2774 = vld [vmem:[#allocation4] sm:$0xff]
      %v2775 = vld [vmem:[#allocation4 + $0x8] sm:$0xff]
      %v2776 = vld [vmem:[#allocation4 + $0x10] sm:$0xff]
      %v2777 = vld [vmem:[#allocation4 + $0x18] sm:$0xff]
      %v2778 = vld [vmem:[#allocation4 + $0x20] sm:$0xff]
      %v2779 = vld [vmem:[#allocation4 + $0x28] sm:$0xff]
      %v2780 = vld [vmem:[#allocation4 + $0x30] sm:$0xff]
      %v2781 = vld [vmem:[#allocation4 + $0x38] sm:$0xff]
      %v2782 = vld [vmem:[#allocation5] sm:$0xff]
      %v2783 = vld [vmem:[#allocation5 + $0x8] sm:$0xff]
      %v2784 = vld [vmem:[#allocation5 + $0x10] sm:$0xff]
      %v2785 = vld [vmem:[#allocation5 + $0x18] sm:$0xff]
      %v2786 = vld [vmem:[#allocation5 + $0x20] sm:$0xff]
      %v2787 = vld [vmem:[#allocation5 + $0x28] sm:$0xff]
      %v2788 = vld [vmem:[#allocation5 + $0x30] sm:$0xff]
      %v2789 = vld [vmem:[#allocation5 + $0x38] sm:$0xff]
      %v2790 = vld [vmem:[%s3] sm:$0xff]
      %v2791 = vld [vmem:[%s3 + $0x8] sm:$0xff]
      %v2792 = vld [vmem:[%s3 + $0x10] sm:$0xff]
      %v2793 = vld [vmem:[%s3 + $0x18] sm:$0xff]
      %v2794 = vld [vmem:[%s3 + $0x20] sm:$0xff]
      %v2795 = vld [vmem:[%s3 + $0x28] sm:$0xff]
      %v2796 = vld [vmem:[%s3 + $0x30] sm:$0xff]
      %v2797 = vld [vmem:[%s3 + $0x38] sm:$0xff]
      %v2798 = vld [vmem:[%s3 + $0x40] sm:$0xff]
      %v2799 = vld [vmem:[%s3 + $0x48] sm:$0xff]
      %v2800 = vld [vmem:[%s3 + $0x50] sm:$0xff]
      %v2801 = vld [vmem:[%s3 + $0x58] sm:$0xff]
      %v2802 = vld [vmem:[%s3 + $0x60] sm:$0xff]
      %v2803 = vld [vmem:[%s3 + $0x68] sm:$0xff]
      %v2804 = vld [vmem:[%s3 + $0x70] sm:$0xff]
      %v2805 = vld [vmem:[%s3 + $0x78] sm:$0xff]
      %v2806 = vld [vmem:[%s4] sm:$0x3]
      %v2808 = vperm.slane %v2806, 0
      %v2809 = vperm.slane %v2806, 1
      %v2813 = vsel %vm1659, %v2766, 0
      %v2816 = vsel %vm1659, %v2767, 0
      %v2819 = vsel %vm1659, %v2768, 0
      %v2822 = vsel %vm1659, %v2769, 0
      %v2825 = vsel %vm1659, %v2770, 0
      %v2828 = vsel %vm1659, %v2771, 0
      %v2831 = vsel %vm1659, %v2772, 0
      %v2834 = vsel %vm1659, %v2773, 0
      %2836 = vmatpush.msra.mxu0 0.0
      %2837 = vmatpush.msra.mxu0 0.0
      %2838 = vmatpush.msra.mxu0 0.0
      %2839 = vmatpush.msra.mxu0 0.0
      %2840 = vmatpush.msra.mxu0 0.0
      %2841 = vmatpush.msra.mxu0 0.0
      %2842 = vmatpush.msra.mxu0 0.0
      %2843 = vmatpush.msra.mxu0 0.0
      %2844 = vmatpush.msra.mxu0 %v2804
      %2845 = vmatpush.msra.mxu0 %v2802
      %2846 = vmatpush.msra.mxu0 %v2800
      %2847 = vmatpush.msra.mxu0 %v2798
      %2848 = vmatpush.msra.mxu0 %v2796
      %2849 = vmatpush.msra.mxu0 %v2794
      %2850 = vmatpush.msra.mxu0 %v2792
      %2851 = vmatpush.msra.mxu0 %v2790
      %2852 = vmatmul.f32.gmra.mxu0 %v2813
      %v2853 = vpop.f32.mrf.mxu0
      %v2854 = vadd.f32 %v2808, %v2853
      %2855 = vmatmul.f32.gmra.mxu0 %v2816
      %v2856 = vpop.f32.mrf.mxu0
      %v2857 = vadd.f32 %v2808, %v2856
      %2858 = vmatmul.f32.gmra.mxu0 %v2819
      %v2859 = vpop.f32.mrf.mxu0
      %v2860 = vadd.f32 %v2808, %v2859
      %2861 = vmatmul.f32.gmra.mxu0 %v2822
      %v2862 = vpop.f32.mrf.mxu0
      %v2863 = vadd.f32 %v2808, %v2862
      %2864 = vmatmul.f32.gmra.mxu0 %v2825
      %v2865 = vpop.f32.mrf.mxu0
      %v2866 = vadd.f32 %v2808, %v2865
      %2867 = vmatmul.f32.gmra.mxu0 %v2828
      %v2868 = vpop.f32.mrf.mxu0
      %v2869 = vadd.f32 %v2808, %v2868
      %2870 = vmatmul.f32.gmra.mxu0 %v2831
      %v2871 = vpop.f32.mrf.mxu0
      %v2872 = vadd.f32 %v2808, %v2871
      %2873 = vmatmul.f32.gmra.mxu0 %v2834
      %v2874 = vpop.f32.mrf.mxu0
      %v2875 = vadd.f32 %v2808, %v2874
      %2876 = vdwg.mxu0
      %2877 = vmatpush.msra.mxu0 0.0
      %2878 = vmatpush.msra.mxu0 0.0
      %2879 = vmatpush.msra.mxu0 0.0
      %2880 = vmatpush.msra.mxu0 0.0
      %2881 = vmatpush.msra.mxu0 0.0
      %2882 = vmatpush.msra.mxu0 0.0
      %2883 = vmatpush.msra.mxu0 0.0
      %2884 = vmatpush.msra.mxu0 0.0
      %2885 = vmatpush.msra.mxu0 %v2805
      %2886 = vmatpush.msra.mxu0 %v2803
      %2887 = vmatpush.msra.mxu0 %v2801
      %2888 = vmatpush.msra.mxu0 %v2799
      %2889 = vmatpush.msra.mxu0 %v2797
      %2890 = vmatpush.msra.mxu0 %v2795
      %2891 = vmatpush.msra.mxu0 %v2793
      %2892 = vmatpush.msra.mxu0 %v2791
      %2893 = vmatmul.f32.gmra.mxu0 %v2813
      %v2894 = vpop.f32.mrf.mxu0
      %v2895 = vadd.f32 %v2809, %v2894
      %2896 = vmatmul.f32.gmra.mxu0 %v2816
      %v2897 = vpop.f32.mrf.mxu0
      %v2898 = vadd.f32 %v2809, %v2897
      %2899 = vmatmul.f32.gmra.mxu0 %v2819
      %v2900 = vpop.f32.mrf.mxu0
      %v2901 = vadd.f32 %v2809, %v2900
      %2902 = vmatmul.f32.gmra.mxu0 %v2822
      %v2903 = vpop.f32.mrf.mxu0
      %v2904 = vadd.f32 %v2809, %v2903
      %2905 = vmatmul.f32.gmra.mxu0 %v2825
      %v2906 = vpop.f32.mrf.mxu0
      %v2907 = vadd.f32 %v2809, %v2906
      %2908 = vmatmul.f32.gmra.mxu0 %v2828
      %v2909 = vpop.f32.mrf.mxu0
      %v2910 = vadd.f32 %v2809, %v2909
      %2911 = vmatmul.f32.gmra.mxu0 %v2831
      %v2912 = vpop.f32.mrf.mxu0
      %v2913 = vadd.f32 %v2809, %v2912
      %2914 = vmatmul.f32.gmra.mxu0 %v2834
      %v2915 = vpop.f32.mrf.mxu0
      %v2916 = vadd.f32 %v2809, %v2915
      %2917 = vdwg.mxu0
      %v2918 = vmul.f32 %v2854, 0.5
      %v2919 = vmul.f32 %v2857, 0.5
      %v2920 = vmul.f32 %v2860, 0.5
      %v2921 = vmul.f32 %v2863, 0.5
      %v2922 = vmul.f32 %v2866, 0.5
      %v2923 = vmul.f32 %v2869, 0.5
      %v2924 = vmul.f32 %v2872, 0.5
      %v2925 = vmul.f32 %v2875, 0.5
      %v2926 = vtanh.pop %v2918
      %v2927 = vtanh.pop %v2919
      %v2928 = vtanh.pop %v2920
      %v2929 = vtanh.pop %v2921
      %v2930 = vtanh.pop %v2922
      %v2931 = vtanh.pop %v2923
      %v2932 = vtanh.pop %v2924
      %v2933 = vtanh.pop %v2925
      %v2934 = vmul.f32 %v2926, 0.5
      %v2935 = vmul.f32 %v2927, 0.5
      %v2936 = vmul.f32 %v2928, 0.5
      %v2937 = vmul.f32 %v2929, 0.5
      %v2938 = vmul.f32 %v2930, 0.5
      %v2939 = vmul.f32 %v2931, 0.5
      %v2940 = vmul.f32 %v2932, 0.5
      %v2941 = vmul.f32 %v2933, 0.5
      %v2942 = vadd.f32 %v2934, 0.5
      %v2943 = vadd.f32 %v2935, 0.5
      %v2944 = vadd.f32 %v2936, 0.5
      %v2945 = vadd.f32 %v2937, 0.5
      %v2946 = vadd.f32 %v2938, 0.5
      %v2947 = vadd.f32 %v2939, 0.5
      %v2948 = vadd.f32 %v2940, 0.5
      %v2949 = vadd.f32 %v2941, 0.5
      %v2950 = vmul.f32 %v2942, %v2774
      %v2951 = vmul.f32 %v2943, %v2775
      %v2952 = vmul.f32 %v2944, %v2776
      %v2953 = vmul.f32 %v2945, %v2777
      %v2954 = vmul.f32 %v2946, %v2778
      %v2955 = vmul.f32 %v2947, %v2779
      %v2956 = vmul.f32 %v2948, %v2780
      %v2957 = vmul.f32 %v2949, %v2781
      %2966 = vrot.lane.b32.xlu0 %v2950, 96
      %v2967 = vpop.permute.xlu0 %2966
      %2968 = vrot.lane.b32.xlu0 %v2951, 96
      %v2969 = vpop.permute.xlu0 %2968
      %2970 = vrot.lane.b32.xlu0 %v2952, 96
      %v2971 = vpop.permute.xlu0 %2970
      %2972 = vrot.lane.b32.xlu0 %v2953, 96
      %v2973 = vpop.permute.xlu0 %2972
      %2974 = vrot.lane.b32.xlu0 %v2954, 96
      %v2975 = vpop.permute.xlu0 %2974
      %2976 = vrot.lane.b32.xlu0 %v2955, 96
      %v2977 = vpop.permute.xlu0 %2976
      %2978 = vrot.lane.b32.xlu0 %v2956, 96
      %v2979 = vpop.permute.xlu0 %2978
      %2980 = vrot.lane.b32.xlu0 %v2957, 96
      %v2981 = vpop.permute.xlu0 %2980
      %v2990 = vadd.f32 %v2950, %v2967
      %v2991 = vadd.f32 %v2951, %v2969
      %v2992 = vadd.f32 %v2952, %v2971
      %v2993 = vadd.f32 %v2953, %v2973
      %v2994 = vadd.f32 %v2954, %v2975
      %v2995 = vadd.f32 %v2955, %v2977
      %v2996 = vadd.f32 %v2956, %v2979
      %v2997 = vadd.f32 %v2957, %v2981
      %3006 = vrot.lane.b32.xlu0 %v2782, 96
      %v3007 = vpop.permute.xlu0 %3006
      %3008 = vrot.lane.b32.xlu0 %v2783, 96
      %v3009 = vpop.permute.xlu0 %3008
      %3010 = vrot.lane.b32.xlu0 %v2784, 96
      %v3011 = vpop.permute.xlu0 %3010
      %3012 = vrot.lane.b32.xlu0 %v2785, 96
      %v3013 = vpop.permute.xlu0 %3012
      %3014 = vrot.lane.b32.xlu0 %v2786, 96
      %v3015 = vpop.permute.xlu0 %3014
      %3016 = vrot.lane.b32.xlu0 %v2787, 96
      %v3017 = vpop.permute.xlu0 %3016
      %3018 = vrot.lane.b32.xlu0 %v2788, 96
      %v3019 = vpop.permute.xlu0 %3018
      %3020 = vrot.lane.b32.xlu0 %v2789, 96
      %v3021 = vpop.permute.xlu0 %3020
      %v3030 = vmax.f32 %v2782, %v3007
      %v3031 = vmax.f32 %v2783, %v3009
      %v3032 = vmax.f32 %v2784, %v3011
      %v3033 = vmax.f32 %v2785, %v3013
      %v3034 = vmax.f32 %v2786, %v3015
      %v3035 = vmax.f32 %v2787, %v3017
      %v3036 = vmax.f32 %v2788, %v3019
      %v3037 = vmax.f32 %v2789, %v3021
      %v3038 = vtanh.pop %v2895
      %v3039 = vtanh.pop %v2898
      %v3040 = vtanh.pop %v2901
      %v3041 = vtanh.pop %v2904
      %v3042 = vtanh.pop %v2907
      %v3043 = vtanh.pop %v2910
      %v3044 = vtanh.pop %v2913
      %v3045 = vtanh.pop %v2916
      %3054 = vrot.lane.b32.xlu0 %v3038, 64
      %v3055 = vpop.permute.xlu0 %3054
      %3056 = vrot.lane.b32.xlu0 %v3039, 64
      %v3057 = vpop.permute.xlu0 %3056
      %3058 = vrot.lane.b32.xlu0 %v3040, 64
      %v3059 = vpop.permute.xlu0 %3058
      %3060 = vrot.lane.b32.xlu0 %v3041, 64
      %v3061 = vpop.permute.xlu0 %3060
      %3062 = vrot.lane.b32.xlu0 %v3042, 64
      %v3063 = vpop.permute.xlu0 %3062
      %3064 = vrot.lane.b32.xlu0 %v3043, 64
      %v3065 = vpop.permute.xlu0 %3064
      %3066 = vrot.lane.b32.xlu0 %v3044, 64
      %v3067 = vpop.permute.xlu0 %3066
      %3068 = vrot.lane.b32.xlu0 %v3045, 64
      %v3069 = vpop.permute.xlu0 %3068
      %v3078 = vmul.f32 %v2942, %v3055
      %v3079 = vmul.f32 %v2943, %v3057
      %v3080 = vmul.f32 %v2944, %v3059
      %v3081 = vmul.f32 %v2945, %v3061
      %v3082 = vmul.f32 %v2946, %v3063
      %v3083 = vmul.f32 %v2947, %v3065
      %v3084 = vmul.f32 %v2948, %v3067
      %v3085 = vmul.f32 %v2949, %v3069
      %3094 = vrot.lane.b32.xlu0 %v2990, 64
      %v3095 = vpop.permute.xlu0 %3094
      %3096 = vrot.lane.b32.xlu0 %v2991, 64
      %v3097 = vpop.permute.xlu0 %3096
      %3098 = vrot.lane.b32.xlu0 %v2992, 64
      %v3099 = vpop.permute.xlu0 %3098
      %3100 = vrot.lane.b32.xlu0 %v2993, 64
      %v3101 = vpop.permute.xlu0 %3100
      %3102 = vrot.lane.b32.xlu0 %v2994, 64
      %v3103 = vpop.permute.xlu0 %3102
      %3104 = vrot.lane.b32.xlu0 %v2995, 64
      %v3105 = vpop.permute.xlu0 %3104
      %3106 = vrot.lane.b32.xlu0 %v2996, 64
      %v3107 = vpop.permute.xlu0 %3106
      %3108 = vrot.lane.b32.xlu0 %v2997, 64
      %v3109 = vpop.permute.xlu0 %3108
      %v3118 = vadd.f32 %v3078, %v3095
      %v3119 = vadd.f32 %v3079, %v3097
      %v3120 = vadd.f32 %v3080, %v3099
      %v3121 = vadd.f32 %v3081, %v3101
      %v3122 = vadd.f32 %v3082, %v3103
      %v3123 = vadd.f32 %v3083, %v3105
      %v3124 = vadd.f32 %v3084, %v3107
      %v3125 = vadd.f32 %v3085, %v3109
      %v3126 = vtanh.pop %v3118
      %v3127 = vtanh.pop %v3119
      %v3128 = vtanh.pop %v3120
      %v3129 = vtanh.pop %v3121
      %v3130 = vtanh.pop %v3122
      %v3131 = vtanh.pop %v3123
      %v3132 = vtanh.pop %v3124
      %v3133 = vtanh.pop %v3125
      %3142 = vrot.lane.b32.xlu0 %v3126, 32
      %v3143 = vpop.permute.xlu0 %3142
      %3144 = vrot.lane.b32.xlu0 %v3127, 32
      %v3145 = vpop.permute.xlu0 %3144
      %3146 = vrot.lane.b32.xlu0 %v3128, 32
      %v3147 = vpop.permute.xlu0 %3146
      %3148 = vrot.lane.b32.xlu0 %v3129, 32
      %v3149 = vpop.permute.xlu0 %3148
      %3150 = vrot.lane.b32.xlu0 %v3130, 32
      %v3151 = vpop.permute.xlu0 %3150
      %3152 = vrot.lane.b32.xlu0 %v3131, 32
      %v3153 = vpop.permute.xlu0 %3152
      %3154 = vrot.lane.b32.xlu0 %v3132, 32
      %v3155 = vpop.permute.xlu0 %3154
      %3156 = vrot.lane.b32.xlu0 %v3133, 32
      %v3157 = vpop.permute.xlu0 %3156
      %v3166 = vmul.f32 %v2942, %v3143
      %v3167 = vmul.f32 %v2943, %v3145
      %v3168 = vmul.f32 %v2944, %v3147
      %v3169 = vmul.f32 %v2945, %v3149
      %v3170 = vmul.f32 %v2946, %v3151
      %v3171 = vmul.f32 %v2947, %v3153
      %v3172 = vmul.f32 %v2948, %v3155
      %v3173 = vmul.f32 %v2949, %v3157
      %3182 = vrot.lane.b32.xlu0 %v3030, 96
      %v3183 = vpop.permute.xlu0 %3182
      %3184 = vrot.lane.b32.xlu0 %v3031, 96
      %v3185 = vpop.permute.xlu0 %3184
      %3186 = vrot.lane.b32.xlu0 %v3032, 96
      %v3187 = vpop.permute.xlu0 %3186
      %3188 = vrot.lane.b32.xlu0 %v3033, 96
      %v3189 = vpop.permute.xlu0 %3188
      %3190 = vrot.lane.b32.xlu0 %v3034, 96
      %v3191 = vpop.permute.xlu0 %3190
      %3192 = vrot.lane.b32.xlu0 %v3035, 96
      %v3193 = vpop.permute.xlu0 %3192
      %3194 = vrot.lane.b32.xlu0 %v3036, 96
      %v3195 = vpop.permute.xlu0 %3194
      %3196 = vrot.lane.b32.xlu0 %v3037, 96
      %v3197 = vpop.permute.xlu0 %3196
      %v3206 = vmax.f32 %v3166, %v3183
      %v3207 = vmax.f32 %v3167, %v3185
      %v3208 = vmax.f32 %v3168, %v3187
      %v3209 = vmax.f32 %v3169, %v3189
      %v3210 = vmax.f32 %v3170, %v3191
      %v3211 = vmax.f32 %v3171, %v3193
      %v3212 = vmax.f32 %v3172, %v3195
      %v3213 = vmax.f32 %v3173, %v3197
      %v3214 = vadd.f32 %v3166, %v3206
      %v3215 = vadd.f32 %v3167, %v3207
      %v3216 = vadd.f32 %v3168, %v3208
      %v3217 = vadd.f32 %v3169, %v3209
      %v3218 = vadd.f32 %v3170, %v3210
      %v3219 = vadd.f32 %v3171, %v3211
      %v3220 = vadd.f32 %v3172, %v3212
      %v3221 = vadd.f32 %v3173, %v3213
      %3230 = vrot.lane.b32.xlu0 %v3214, 32
      %v3231 = vpop.permute.xlu0 %3230
      %3232 = vrot.lane.b32.xlu0 %v3215, 32
      %v3233 = vpop.permute.xlu0 %3232
      %3234 = vrot.lane.b32.xlu0 %v3216, 32
      %v3235 = vpop.permute.xlu0 %3234
      %3236 = vrot.lane.b32.xlu0 %v3217, 32
      %v3237 = vpop.permute.xlu0 %3236
      %3238 = vrot.lane.b32.xlu0 %v3218, 32
      %v3239 = vpop.permute.xlu0 %3238
      %3240 = vrot.lane.b32.xlu0 %v3219, 32
      %v3241 = vpop.permute.xlu0 %3240
      %3242 = vrot.lane.b32.xlu0 %v3220, 32
      %v3243 = vpop.permute.xlu0 %3242
      %3244 = vrot.lane.b32.xlu0 %v3221, 32
      %v3245 = vpop.permute.xlu0 %3244
      %3254 = vst.msk [vmem:[#allocation2 + $0x180] sm:$0xff] %vm322, %v3231
      %3255 = vst.msk [vmem:[#allocation2 + $0x188] sm:$0xff] %vm322, %v3233
      %3256 = vst.msk [vmem:[#allocation2 + $0x190] sm:$0xff] %vm322, %v3235
      %3257 = vst.msk [vmem:[#allocation2 + $0x198] sm:$0xff] %vm322, %v3237
      %3258 = vst.msk [vmem:[#allocation2 + $0x1a0] sm:$0xff] %vm322, %v3239
      %3259 = vst.msk [vmem:[#allocation2 + $0x1a8] sm:$0xff] %vm322, %v3241
      %3260 = vst.msk [vmem:[#allocation2 + $0x1b0] sm:$0xff] %vm322, %v3243
      %3261 = vst.msk [vmem:[#allocation2 + $0x1b8] sm:$0xff] %vm322, %v3245
      %3266 = vrot.lane.b32.xlu0 %v3166, 32
      %v3267 = vpop.permute.xlu0 %3266
      %3268 = vrot.lane.b32.xlu0 %v3167, 32
      %v3269 = vpop.permute.xlu0 %3268
      %3270 = vrot.lane.b32.xlu0 %v3168, 32
      %v3271 = vpop.permute.xlu0 %3270
      %3272 = vrot.lane.b32.xlu0 %v3169, 32
      %v3273 = vpop.permute.xlu0 %3272
      %3278 = vst.msk [vmem:[#allocation3] sm:$0xff] %vm322, %v3267
      %3279 = vst.msk [vmem:[#allocation3 + $0x8] sm:$0xff] %vm322, %v3269
      %3280 = vst.msk [vmem:[#allocation3 + $0x10] sm:$0xff] %vm322, %v3271
      %3281 = vst.msk [vmem:[#allocation3 + $0x18] sm:$0xff] %vm322, %v3273
      %3286 = vrot.lane.b32.xlu0 %v3170, 64
      %v3287 = vpop.permute.xlu0 %3286
      %3288 = vrot.lane.b32.xlu0 %v3171, 64
      %v3289 = vpop.permute.xlu0 %3288
      %3290 = vrot.lane.b32.xlu0 %v3172, 64
      %v3291 = vpop.permute.xlu0 %3290
      %3292 = vrot.lane.b32.xlu0 %v3173, 64
      %v3293 = vpop.permute.xlu0 %3292
      %3298 = vst.msk [vmem:[#allocation3] sm:$0xff] %vm1380, %v3287
      %3299 = vst.msk [vmem:[#allocation3 + $0x8] sm:$0xff] %vm1380, %v3289
      %3300 = vst.msk [vmem:[#allocation3 + $0x10] sm:$0xff] %vm1380, %v3291
      %3301 = vst.msk [vmem:[#allocation3 + $0x18] sm:$0xff] %vm1380, %v3293
      %3306 = vrot.lane.b32.xlu0 %v3118, 64
      %v3307 = vpop.permute.xlu0 %3306
      %3308 = vrot.lane.b32.xlu0 %v3119, 64
      %v3309 = vpop.permute.xlu0 %3308
      %3310 = vrot.lane.b32.xlu0 %v3120, 64
      %v3311 = vpop.permute.xlu0 %3310
      %3312 = vrot.lane.b32.xlu0 %v3121, 64
      %v3313 = vpop.permute.xlu0 %3312
      %3318 = vst.msk [vmem:[#allocation4] sm:$0xff] %vm322, %v3307
      %3319 = vst.msk [vmem:[#allocation4 + $0x8] sm:$0xff] %vm322, %v3309
      %3320 = vst.msk [vmem:[#allocation4 + $0x10] sm:$0xff] %vm322, %v3311
      %3321 = vst.msk [vmem:[#allocation4 + $0x18] sm:$0xff] %vm322, %v3313
      %3326 = vrot.lane.b32.xlu0 %v3122, 96
      %v3327 = vpop.permute.xlu0 %3326
      %3328 = vrot.lane.b32.xlu0 %v3123, 96
      %v3329 = vpop.permute.xlu0 %3328
      %3330 = vrot.lane.b32.xlu0 %v3124, 96
      %v3331 = vpop.permute.xlu0 %3330
      %3332 = vrot.lane.b32.xlu0 %v3125, 96
      %v3333 = vpop.permute.xlu0 %3332
      %3338 = vst.msk [vmem:[#allocation4] sm:$0xff] %vm1380, %v3327
      %3339 = vst.msk [vmem:[#allocation4 + $0x8] sm:$0xff] %vm1380, %v3329
      %3340 = vst.msk [vmem:[#allocation4 + $0x10] sm:$0xff] %vm1380, %v3331
      %3341 = vst.msk [vmem:[#allocation4 + $0x18] sm:$0xff] %vm1380, %v3333
      %3346 = vrot.lane.b32.xlu0 %v3206, 32
      %v3347 = vpop.permute.xlu0 %3346
      %3348 = vrot.lane.b32.xlu0 %v3207, 32
      %v3349 = vpop.permute.xlu0 %3348
      %3350 = vrot.lane.b32.xlu0 %v3208, 32
      %v3351 = vpop.permute.xlu0 %3350
      %3352 = vrot.lane.b32.xlu0 %v3209, 32
      %v3353 = vpop.permute.xlu0 %3352
      %3358 = vst.msk [vmem:[#allocation5] sm:$0xff] %vm322, %v3347
      %3359 = vst.msk [vmem:[#allocation5 + $0x8] sm:$0xff] %vm322, %v3349
      %3360 = vst.msk [vmem:[#allocation5 + $0x10] sm:$0xff] %vm322, %v3351
      %3361 = vst.msk [vmem:[#allocation5 + $0x18] sm:$0xff] %vm322, %v3353
      %3366 = vrot.lane.b32.xlu0 %v3210, 64
      %v3367 = vpop.permute.xlu0 %3366
      %3368 = vrot.lane.b32.xlu0 %v3211, 64
      %v3369 = vpop.permute.xlu0 %3368
      %3370 = vrot.lane.b32.xlu0 %v3212, 64
      %v3371 = vpop.permute.xlu0 %3370
      %3372 = vrot.lane.b32.xlu0 %v3213, 64
      %v3373 = vpop.permute.xlu0 %3372
      %3378 = vst.msk [vmem:[#allocation5] sm:$0xff] %vm1380, %v3367
      %3379 = vst.msk [vmem:[#allocation5 + $0x8] sm:$0xff] %vm1380, %v3369
      %3380 = vst.msk [vmem:[#allocation5 + $0x10] sm:$0xff] %vm1380, %v3371
      %3381 = vst.msk [vmem:[#allocation5 + $0x18] sm:$0xff] %vm1380, %v3373
      %v3382 = vld [vmem:[#allocation3] sm:$0xff]
      %v3383 = vld [vmem:[#allocation3 + $0x8] sm:$0xff]
      %v3384 = vld [vmem:[#allocation3 + $0x10] sm:$0xff]
      %v3385 = vld [vmem:[#allocation3 + $0x18] sm:$0xff]
      %v3386 = vld [vmem:[#allocation4] sm:$0xff]
      %v3387 = vld [vmem:[#allocation4 + $0x8] sm:$0xff]
      %v3388 = vld [vmem:[#allocation4 + $0x10] sm:$0xff]
      %v3389 = vld [vmem:[#allocation4 + $0x18] sm:$0xff]
      %v3390 = vld [vmem:[#allocation5] sm:$0xff]
      %v3391 = vld [vmem:[#allocation5 + $0x8] sm:$0xff]
      %v3392 = vld [vmem:[#allocation5 + $0x10] sm:$0xff]
      %v3393 = vld [vmem:[#allocation5 + $0x18] sm:$0xff]
      %v3394 = vld [vmem:[%s3] sm:$0xff]
      %v3395 = vld [vmem:[%s3 + $0x8] sm:$0xff]
      %v3396 = vld [vmem:[%s3 + $0x10] sm:$0xff]
      %v3397 = vld [vmem:[%s3 + $0x18] sm:$0xff]
      %v3398 = vld [vmem:[%s3 + $0x20] sm:$0xff]
      %v3399 = vld [vmem:[%s3 + $0x28] sm:$0xff]
      %v3400 = vld [vmem:[%s3 + $0x30] sm:$0xff]
      %v3401 = vld [vmem:[%s3 + $0x38] sm:$0xff]
      %v3402 = vld [vmem:[%s3 + $0x40] sm:$0xff]
      %v3403 = vld [vmem:[%s3 + $0x48] sm:$0xff]
      %v3404 = vld [vmem:[%s3 + $0x50] sm:$0xff]
      %v3405 = vld [vmem:[%s3 + $0x58] sm:$0xff]
      %v3406 = vld [vmem:[%s3 + $0x60] sm:$0xff]
      %v3407 = vld [vmem:[%s3 + $0x68] sm:$0xff]
      %v3408 = vld [vmem:[%s3 + $0x70] sm:$0xff]
      %v3409 = vld [vmem:[%s3 + $0x78] sm:$0xff]
      %v3410 = vld [vmem:[%s4] sm:$0x3]
      %v3412 = vperm.slane %v3410, 0
      %v3413 = vperm.slane %v3410, 1
      %v3417 = vsel %vm1659, %v3382, 0
      %v3420 = vsel %vm1659, %v3383, 0
      %v3423 = vsel %vm1659, %v3384, 0
      %v3426 = vsel %vm1659, %v3385, 0
      %3428 = vmatpush.msra.mxu0 0.0
      %3429 = vmatpush.msra.mxu0 0.0
      %3430 = vmatpush.msra.mxu0 0.0
      %3431 = vmatpush.msra.mxu0 0.0
      %3432 = vmatpush.msra.mxu0 0.0
      %3433 = vmatpush.msra.mxu0 0.0
      %3434 = vmatpush.msra.mxu0 0.0
      %3435 = vmatpush.msra.mxu0 0.0
      %3436 = vmatpush.msra.mxu0 %v3408
      %3437 = vmatpush.msra.mxu0 %v3406
      %3438 = vmatpush.msra.mxu0 %v3404
      %3439 = vmatpush.msra.mxu0 %v3402
      %3440 = vmatpush.msra.mxu0 %v3400
      %3441 = vmatpush.msra.mxu0 %v3398
      %3442 = vmatpush.msra.mxu0 %v3396
      %3443 = vmatpush.msra.mxu0 %v3394
      %3444 = vmatmul.f32.gmra.mxu0 %v3417
      %v3445 = vpop.f32.mrf.mxu0
      %v3446 = vadd.f32 %v3412, %v3445
      %3447 = vmatmul.f32.gmra.mxu0 %v3420
      %v3448 = vpop.f32.mrf.mxu0
      %v3449 = vadd.f32 %v3412, %v3448
      %3450 = vmatmul.f32.gmra.mxu0 %v3423
      %v3451 = vpop.f32.mrf.mxu0
      %v3452 = vadd.f32 %v3412, %v3451
      %3453 = vmatmul.f32.gmra.mxu0 %v3426
      %v3454 = vpop.f32.mrf.mxu0
      %v3455 = vadd.f32 %v3412, %v3454
      %3456 = vdwg.mxu0
      %3457 = vmatpush.msra.mxu0 0.0
      %3458 = vmatpush.msra.mxu0 0.0
      %3459 = vmatpush.msra.mxu0 0.0
      %3460 = vmatpush.msra.mxu0 0.0
      %3461 = vmatpush.msra.mxu0 0.0
      %3462 = vmatpush.msra.mxu0 0.0
      %3463 = vmatpush.msra.mxu0 0.0
      %3464 = vmatpush.msra.mxu0 0.0
      %3465 = vmatpush.msra.mxu0 %v3409
      %3466 = vmatpush.msra.mxu0 %v3407
      %3467 = vmatpush.msra.mxu0 %v3405
      %3468 = vmatpush.msra.mxu0 %v3403
      %3469 = vmatpush.msra.mxu0 %v3401
      %3470 = vmatpush.msra.mxu0 %v3399
      %3471 = vmatpush.msra.mxu0 %v3397
      %3472 = vmatpush.msra.mxu0 %v3395
      %3473 = vmatmul.f32.gmra.mxu0 %v3417
      %v3474 = vpop.f32.mrf.mxu0
      %v3475 = vadd.f32 %v3413, %v3474
      %3476 = vmatmul.f32.gmra.mxu0 %v3420
      %v3477 = vpop.f32.mrf.mxu0
      %v3478 = vadd.f32 %v3413, %v3477
      %3479 = vmatmul.f32.gmra.mxu0 %v3423
      %v3480 = vpop.f32.mrf.mxu0
      %v3481 = vadd.f32 %v3413, %v3480
      %3482 = vmatmul.f32.gmra.mxu0 %v3426
      %v3483 = vpop.f32.mrf.mxu0
      %v3484 = vadd.f32 %v3413, %v3483
      %3485 = vdwg.mxu0
      %v3486 = vmul.f32 %v3446, 0.5
      %v3487 = vmul.f32 %v3449, 0.5
      %v3488 = vmul.f32 %v3452, 0.5
      %v3489 = vmul.f32 %v3455, 0.5
      %v3490 = vtanh.pop %v3486
      %v3491 = vtanh.pop %v3487
      %v3492 = vtanh.pop %v3488
      %v3493 = vtanh.pop %v3489
      %v3494 = vmul.f32 %v3490, 0.5
      %v3495 = vmul.f32 %v3491, 0.5
      %v3496 = vmul.f32 %v3492, 0.5
      %v3497 = vmul.f32 %v3493, 0.5
      %v3498 = vadd.f32 %v3494, 0.5
      %v3499 = vadd.f32 %v3495, 0.5
      %v3500 = vadd.f32 %v3496, 0.5
      %v3501 = vadd.f32 %v3497, 0.5
      %v3502 = vmul.f32 %v3498, %v3386
      %v3503 = vmul.f32 %v3499, %v3387
      %v3504 = vmul.f32 %v3500, %v3388
      %v3505 = vmul.f32 %v3501, %v3389
      %3510 = vrot.lane.b32.xlu0 %v3502, 96
      %v3511 = vpop.permute.xlu0 %3510
      %3512 = vrot.lane.b32.xlu0 %v3503, 96
      %v3513 = vpop.permute.xlu0 %3512
      %3514 = vrot.lane.b32.xlu0 %v3504, 96
      %v3515 = vpop.permute.xlu0 %3514
      %3516 = vrot.lane.b32.xlu0 %v3505, 96
      %v3517 = vpop.permute.xlu0 %3516
      %v3522 = vadd.f32 %v3502, %v3511
      %v3523 = vadd.f32 %v3503, %v3513
      %v3524 = vadd.f32 %v3504, %v3515
      %v3525 = vadd.f32 %v3505, %v3517
      %3530 = vrot.lane.b32.xlu0 %v3390, 96
      %v3531 = vpop.permute.xlu0 %3530
      %3532 = vrot.lane.b32.xlu0 %v3391, 96
      %v3533 = vpop.permute.xlu0 %3532
      %3534 = vrot.lane.b32.xlu0 %v3392, 96
      %v3535 = vpop.permute.xlu0 %3534
      %3536 = vrot.lane.b32.xlu0 %v3393, 96
      %v3537 = vpop.permute.xlu0 %3536
      %v3542 = vmax.f32 %v3390, %v3531
      %v3543 = vmax.f32 %v3391, %v3533
      %v3544 = vmax.f32 %v3392, %v3535
      %v3545 = vmax.f32 %v3393, %v3537
      %v3546 = vtanh.pop %v3475
      %v3547 = vtanh.pop %v3478
      %v3548 = vtanh.pop %v3481
      %v3549 = vtanh.pop %v3484
      %3554 = vrot.lane.b32.xlu0 %v3546, 64
      %v3555 = vpop.permute.xlu0 %3554
      %3556 = vrot.lane.b32.xlu0 %v3547, 64
      %v3557 = vpop.permute.xlu0 %3556
      %3558 = vrot.lane.b32.xlu0 %v3548, 64
      %v3559 = vpop.permute.xlu0 %3558
      %3560 = vrot.lane.b32.xlu0 %v3549, 64
      %v3561 = vpop.permute.xlu0 %3560
      %v3566 = vmul.f32 %v3498, %v3555
      %v3567 = vmul.f32 %v3499, %v3557
      %v3568 = vmul.f32 %v3500, %v3559
      %v3569 = vmul.f32 %v3501, %v3561
      %3574 = vrot.lane.b32.xlu0 %v3522, 64
      %v3575 = vpop.permute.xlu0 %3574
      %3576 = vrot.lane.b32.xlu0 %v3523, 64
      %v3577 = vpop.permute.xlu0 %3576
      %3578 = vrot.lane.b32.xlu0 %v3524, 64
      %v3579 = vpop.permute.xlu0 %3578
      %3580 = vrot.lane.b32.xlu0 %v3525, 64
      %v3581 = vpop.permute.xlu0 %3580
      %v3586 = vadd.f32 %v3566, %v3575
      %v3587 = vadd.f32 %v3567, %v3577
      %v3588 = vadd.f32 %v3568, %v3579
      %v3589 = vadd.f32 %v3569, %v3581
      %v3590 = vtanh.pop %v3586
      %v3591 = vtanh.pop %v3587
      %v3592 = vtanh.pop %v3588
      %v3593 = vtanh.pop %v3589
      %3598 = vrot.lane.b32.xlu0 %v3590, 32
      %v3599 = vpop.permute.xlu0 %3598
      %3600 = vrot.lane.b32.xlu0 %v3591, 32
      %v3601 = vpop.permute.xlu0 %3600
      %3602 = vrot.lane.b32.xlu0 %v3592, 32
      %v3603 = vpop.permute.xlu0 %3602
      %3604 = vrot.lane.b32.xlu0 %v3593, 32
      %v3605 = vpop.permute.xlu0 %3604
      %v3610 = vmul.f32 %v3498, %v3599
      %v3611 = vmul.f32 %v3499, %v3601
      %v3612 = vmul.f32 %v3500, %v3603
      %v3613 = vmul.f32 %v3501, %v3605
      %3618 = vrot.lane.b32.xlu0 %v3542, 96
      %v3619 = vpop.permute.xlu0 %3618
      %3620 = vrot.lane.b32.xlu0 %v3543, 96
      %v3621 = vpop.permute.xlu0 %3620
      %3622 = vrot.lane.b32.xlu0 %v3544, 96
      %v3623 = vpop.permute.xlu0 %3622
      %3624 = vrot.lane.b32.xlu0 %v3545, 96
      %v3625 = vpop.permute.xlu0 %3624
      %v3630 = vmax.f32 %v3610, %v3619
      %v3631 = vmax.f32 %v3611, %v3621
      %v3632 = vmax.f32 %v3612, %v3623
      %v3633 = vmax.f32 %v3613, %v3625
      %v3634 = vadd.f32 %v3610, %v3630
      %v3635 = vadd.f32 %v3611, %v3631
      %v3636 = vadd.f32 %v3612, %v3632
      %v3637 = vadd.f32 %v3613, %v3633
      %3642 = vrot.lane.b32.xlu0 %v3634, 32
      %v3643 = vpop.permute.xlu0 %3642
      %3644 = vrot.lane.b32.xlu0 %v3635, 32
      %v3645 = vpop.permute.xlu0 %3644
      %3646 = vrot.lane.b32.xlu0 %v3636, 32
      %v3647 = vpop.permute.xlu0 %3646
      %3648 = vrot.lane.b32.xlu0 %v3637, 32
      %v3649 = vpop.permute.xlu0 %3648
      %3654 = vst.msk [vmem:[#allocation2 + $0x1c0] sm:$0xff] %vm322, %v3643
      %3655 = vst.msk [vmem:[#allocation2 + $0x1c8] sm:$0xff] %vm322, %v3645
      %3656 = vst.msk [vmem:[#allocation2 + $0x1d0] sm:$0xff] %vm322, %v3647
      %3657 = vst.msk [vmem:[#allocation2 + $0x1d8] sm:$0xff] %vm322, %v3649
      %v3658 = vld [vmem:[#allocation2] sm:$0xff]
      %v3659 = vld [vmem:[#allocation2 + $0x8] sm:$0xff]
      %v3660 = vld [vmem:[#allocation2 + $0x10] sm:$0xff]
      %v3661 = vld [vmem:[#allocation2 + $0x18] sm:$0xff]
      %v3662 = vld [vmem:[#allocation2 + $0x20] sm:$0xff]
      %v3663 = vld [vmem:[#allocation2 + $0x28] sm:$0xff]
      %v3664 = vld [vmem:[#allocation2 + $0x30] sm:$0xff]
      %v3665 = vld [vmem:[#allocation2 + $0x38] sm:$0xff]
      %v3666 = vld [vmem:[#allocation2 + $0x40] sm:$0xff]
      %v3667 = vld [vmem:[#allocation2 + $0x48] sm:$0xff]
      %v3668 = vld [vmem:[#allocation2 + $0x50] sm:$0xff]
      %v3669 = vld [vmem:[#allocation2 + $0x58] sm:$0xff]
      %v3670 = vld [vmem:[#allocation2 + $0x60] sm:$0xff]
      %v3671 = vld [vmem:[#allocation2 + $0x68] sm:$0xff]
      %v3672 = vld [vmem:[#allocation2 + $0x70] sm:$0xff]
      %v3673 = vld [vmem:[#allocation2 + $0x78] sm:$0xff]
      %v3674 = vld [vmem:[#allocation2 + $0x80] sm:$0xff]
      %v3675 = vld [vmem:[#allocation2 + $0x88] sm:$0xff]
      %v3676 = vld [vmem:[#allocation2 + $0x90] sm:$0xff]
      %v3677 = vld [vmem:[#allocation2 + $0x98] sm:$0xff]
      %v3678 = vld [vmem:[#allocation2 + $0xa0] sm:$0xff]
      %v3679 = vld [vmem:[#allocation2 + $0xa8] sm:$0xff]
      %v3680 = vld [vmem:[#allocation2 + $0xb0] sm:$0xff]
      %v3681 = vld [vmem:[#allocation2 + $0xb8] sm:$0xff]
      %v3682 = vld [vmem:[#allocation2 + $0xc0] sm:$0xff]
      %v3683 = vld [vmem:[#allocation2 + $0xc8] sm:$0xff]
      %v3684 = vld [vmem:[#allocation2 + $0xd0] sm:$0xff]
      %v3685 = vld [vmem:[#allocation2 + $0xd8] sm:$0xff]
      %v3686 = vld [vmem:[#allocation2 + $0xe0] sm:$0xff]
      %v3687 = vld [vmem:[#allocation2 + $0xe8] sm:$0xff]
      %v3688 = vld [vmem:[#allocation2 + $0xf0] sm:$0xff]
      %v3689 = vld [vmem:[#allocation2 + $0xf8] sm:$0xff]
      %v3690 = vld [vmem:[#allocation2 + $0x100] sm:$0xff]
      %v3691 = vld [vmem:[#allocation2 + $0x108] sm:$0xff]
      %v3692 = vld [vmem:[#allocation2 + $0x110] sm:$0xff]
      %v3693 = vld [vmem:[#allocation2 + $0x118] sm:$0xff]
      %v3694 = vld [vmem:[#allocation2 + $0x120] sm:$0xff]
      %v3695 = vld [vmem:[#allocation2 + $0x128] sm:$0xff]
      %v3696 = vld [vmem:[#allocation2 + $0x130] sm:$0xff]
      %v3697 = vld [vmem:[#allocation2 + $0x138] sm:$0xff]
      %v3698 = vld [vmem:[#allocation2 + $0x140] sm:$0xff]
      %v3699 = vld [vmem:[#allocation2 + $0x148] sm:$0xff]
      %v3700 = vld [vmem:[#allocation2 + $0x150] sm:$0xff]
      %v3701 = vld [vmem:[#allocation2 + $0x158] sm:$0xff]
      %v3702 = vld [vmem:[#allocation2 + $0x160] sm:$0xff]
      %v3703 = vld [vmem:[#allocation2 + $0x168] sm:$0xff]
      %v3704 = vld [vmem:[#allocation2 + $0x170] sm:$0xff]
      %v3705 = vld [vmem:[#allocation2 + $0x178] sm:$0xff]
      %v3706 = vld [vmem:[#allocation2 + $0x180] sm:$0xff]
      %v3707 = vld [vmem:[#allocation2 + $0x188] sm:$0xff]
      %v3708 = vld [vmem:[#allocation2 + $0x190] sm:$0xff]
      %v3709 = vld [vmem:[#allocation2 + $0x198] sm:$0xff]
      %v3710 = vld [vmem:[#allocation2 + $0x1a0] sm:$0xff]
      %v3711 = vld [vmem:[#allocation2 + $0x1a8] sm:$0xff]
      %v3712 = vld [vmem:[#allocation2 + $0x1b0] sm:$0xff]
      %v3713 = vld [vmem:[#allocation2 + $0x1b8] sm:$0xff]
      %v3714 = vld [vmem:[#allocation2 + $0x1c0] sm:$0xff]
      %v3715 = vld [vmem:[#allocation2 + $0x1c8] sm:$0xff]
      %v3716 = vld [vmem:[#allocation2 + $0x1d0] sm:$0xff]
      %v3717 = vld [vmem:[#allocation2 + $0x1d8] sm:$0xff]
      %v3718 = vld [vmem:[%s5] sm:$0xff]
      %v3719 = vld [vmem:[%s5 + $0x8] sm:$0xff]
      %v3720 = vld [vmem:[%s5 + $0x10] sm:$0xff]
      %v3721 = vld [vmem:[%s5 + $0x18] sm:$0xff]
      %v3722 = vld [vmem:[%s6] sm:$0x1]
      %v3724 = vperm.slane %v3722, 0
      %v3727 = vsel %vm322, %v3658, 0
      %v3730 = vsel %vm322, %v3659, 0
      %v3733 = vsel %vm322, %v3660, 0
      %v3736 = vsel %vm322, %v3661, 0
      %v3739 = vsel %vm322, %v3662, 0
      %v3742 = vsel %vm322, %v3663, 0
      %v3745 = vsel %vm322, %v3664, 0
      %v3748 = vsel %vm322, %v3665, 0
      %v3751 = vsel %vm322, %v3666, 0
      %v3754 = vsel %vm322, %v3667, 0
      %v3757 = vsel %vm322, %v3668, 0
      %v3760 = vsel %vm322, %v3669, 0
      %v3763 = vsel %vm322, %v3670, 0
      %v3766 = vsel %vm322, %v3671, 0
      %v3769 = vsel %vm322, %v3672, 0
      %v3772 = vsel %vm322, %v3673, 0
      %v3775 = vsel %vm322, %v3674, 0
      %v3778 = vsel %vm322, %v3675, 0
      %v3781 = vsel %vm322, %v3676, 0
      %v3784 = vsel %vm322, %v3677, 0
      %v3787 = vsel %vm322, %v3678, 0
      %v3790 = vsel %vm322, %v3679, 0
      %v3793 = vsel %vm322, %v3680, 0
      %v3796 = vsel %vm322, %v3681, 0
      %v3799 = vsel %vm322, %v3682, 0
      %v3802 = vsel %vm322, %v3683, 0
      %v3805 = vsel %vm322, %v3684, 0
      %v3808 = vsel %vm322, %v3685, 0
      %v3811 = vsel %vm322, %v3686, 0
      %v3814 = vsel %vm322, %v3687, 0
      %v3817 = vsel %vm322, %v3688, 0
      %v3820 = vsel %vm322, %v3689, 0
      %v3823 = vsel %vm322, %v3690, 0
      %v3826 = vsel %vm322, %v3691, 0
      %v3829 = vsel %vm322, %v3692, 0
      %v3832 = vsel %vm322, %v3693, 0
      %v3835 = vsel %vm322, %v3694, 0
      %v3838 = vsel %vm322, %v3695, 0
      %v3841 = vsel %vm322, %v3696, 0
      %v3844 = vsel %vm322, %v3697, 0
      %v3847 = vsel %vm322, %v3698, 0
      %v3850 = vsel %vm322, %v3699, 0
      %v3853 = vsel %vm322, %v3700, 0
      %v3856 = vsel %vm322, %v3701, 0
      %v3859 = vsel %vm322, %v3702, 0
      %v3862 = vsel %vm322, %v3703, 0
      %v3865 = vsel %vm322, %v3704, 0
      %v3868 = vsel %vm322, %v3705, 0
      %v3871 = vsel %vm322, %v3706, 0
      %v3874 = vsel %vm322, %v3707, 0
      %v3877 = vsel %vm322, %v3708, 0
      %v3880 = vsel %vm322, %v3709, 0
      %v3883 = vsel %vm322, %v3710, 0
      %v3886 = vsel %vm322, %v3711, 0
      %v3889 = vsel %vm322, %v3712, 0
      %v3892 = vsel %vm322, %v3713, 0
      %v3895 = vsel %vm322, %v3714, 0
      %v3898 = vsel %vm322, %v3715, 0
      %v3901 = vsel %vm322, %v3716, 0
      %v3904 = vsel %vm322, %v3717, 0
      %3906 = vmatpush.msra.mxu0 0.0
      %3907 = vmatpush.msra.mxu0 0.0
      %3908 = vmatpush.msra.mxu0 0.0
      %3909 = vmatpush.msra.mxu0 0.0
      %3910 = vmatpush.msra.mxu0 0.0
      %3911 = vmatpush.msra.mxu0 0.0
      %3912 = vmatpush.msra.mxu0 0.0
      %3913 = vmatpush.msra.mxu0 0.0
      %3914 = vmatpush.msra.mxu0 0.0
      %3915 = vmatpush.msra.mxu0 0.0
      %3916 = vmatpush.msra.mxu0 0.0
      %3917 = vmatpush.msra.mxu0 0.0
      %3918 = vmatpush.msra.mxu0 %v3721
      %3919 = vmatpush.msra.mxu0 %v3720
      %3920 = vmatpush.msra.mxu0 %v3719
      %3921 = vmatpush.msra.mxu0 %v3718
      %3922 = vmatmul.f32.gmra.mxu0 %v3727
      %v3923 = vpop.f32.mrf.mxu0
      %v3924 = vadd.f32 %v3724, %v3923
      %3925 = vmatmul.f32.gmra.mxu0 %v3730
      %v3926 = vpop.f32.mrf.mxu0
      %v3927 = vadd.f32 %v3724, %v3926
      %3928 = vmatmul.f32.gmra.mxu0 %v3733
      %v3929 = vpop.f32.mrf.mxu0
      %v3930 = vadd.f32 %v3724, %v3929
      %3931 = vmatmul.f32.gmra.mxu0 %v3736
      %v3932 = vpop.f32.mrf.mxu0
      %v3933 = vadd.f32 %v3724, %v3932
      %3934 = vmatmul.f32.gmra.mxu0 %v3739
      %v3935 = vpop.f32.mrf.mxu0
      %v3936 = vadd.f32 %v3724, %v3935
      %3937 = vmatmul.f32.gmra.mxu0 %v3742
      %v3938 = vpop.f32.mrf.mxu0
      %v3939 = vadd.f32 %v3724, %v3938
      %3940 = vmatmul.f32.gmra.mxu0 %v3745
      %v3941 = vpop.f32.mrf.mxu0
      %v3942 = vadd.f32 %v3724, %v3941
      %3943 = vmatmul.f32.gmra.mxu0 %v3748
      %v3944 = vpop.f32.mrf.mxu0
      %v3945 = vadd.f32 %v3724, %v3944
      %3946 = vmatmul.f32.gmra.mxu0 %v3751
      %v3947 = vpop.f32.mrf.mxu0
      %v3948 = vadd.f32 %v3724, %v3947
      %3949 = vmatmul.f32.gmra.mxu0 %v3754
      %v3950 = vpop.f32.mrf.mxu0
      %v3951 = vadd.f32 %v3724, %v3950
      %3952 = vmatmul.f32.gmra.mxu0 %v3757
      %v3953 = vpop.f32.mrf.mxu0
      %v3954 = vadd.f32 %v3724, %v3953
      %3955 = vmatmul.f32.gmra.mxu0 %v3760
      %v3956 = vpop.f32.mrf.mxu0
      %v3957 = vadd.f32 %v3724, %v3956
      %3958 = vmatmul.f32.gmra.mxu0 %v3763
      %v3959 = vpop.f32.mrf.mxu0
      %v3960 = vadd.f32 %v3724, %v3959
      %3961 = vmatmul.f32.gmra.mxu0 %v3766
      %v3962 = vpop.f32.mrf.mxu0
      %v3963 = vadd.f32 %v3724, %v3962
      %3964 = vmatmul.f32.gmra.mxu0 %v3769
      %v3965 = vpop.f32.mrf.mxu0
      %v3966 = vadd.f32 %v3724, %v3965
      %3967 = vmatmul.f32.gmra.mxu0 %v3772
      %v3968 = vpop.f32.mrf.mxu0
      %v3969 = vadd.f32 %v3724, %v3968
      %3970 = vmatmul.f32.gmra.mxu0 %v3775
      %v3971 = vpop.f32.mrf.mxu0
      %v3972 = vadd.f32 %v3724, %v3971
      %3973 = vmatmul.f32.gmra.mxu0 %v3778
      %v3974 = vpop.f32.mrf.mxu0
      %v3975 = vadd.f32 %v3724, %v3974
      %3976 = vmatmul.f32.gmra.mxu0 %v3781
      %v3977 = vpop.f32.mrf.mxu0
      %v3978 = vadd.f32 %v3724, %v3977
      %3979 = vmatmul.f32.gmra.mxu0 %v3784
      %v3980 = vpop.f32.mrf.mxu0
      %v3981 = vadd.f32 %v3724, %v3980
      %3982 = vmatmul.f32.gmra.mxu0 %v3787
      %v3983 = vpop.f32.mrf.mxu0
      %v3984 = vadd.f32 %v3724, %v3983
      %3985 = vmatmul.f32.gmra.mxu0 %v3790
      %v3986 = vpop.f32.mrf.mxu0
      %v3987 = vadd.f32 %v3724, %v3986
      %3988 = vmatmul.f32.gmra.mxu0 %v3793
      %v3989 = vpop.f32.mrf.mxu0
      %v3990 = vadd.f32 %v3724, %v3989
      %3991 = vmatmul.f32.gmra.mxu0 %v3796
      %v3992 = vpop.f32.mrf.mxu0
      %v3993 = vadd.f32 %v3724, %v3992
      %3994 = vmatmul.f32.gmra.mxu0 %v3799
      %v3995 = vpop.f32.mrf.mxu0
      %v3996 = vadd.f32 %v3724, %v3995
      %3997 = vmatmul.f32.gmra.mxu0 %v3802
      %v3998 = vpop.f32.mrf.mxu0
      %v3999 = vadd.f32 %v3724, %v3998
      %4000 = vmatmul.f32.gmra.mxu0 %v3805
      %v4001 = vpop.f32.mrf.mxu0
      %v4002 = vadd.f32 %v3724, %v4001
      %4003 = vmatmul.f32.gmra.mxu0 %v3808
      %v4004 = vpop.f32.mrf.mxu0
      %v4005 = vadd.f32 %v3724, %v4004
      %4006 = vmatmul.f32.gmra.mxu0 %v3811
      %v4007 = vpop.f32.mrf.mxu0
      %v4008 = vadd.f32 %v3724, %v4007
      %4009 = vmatmul.f32.gmra.mxu0 %v3814
      %v4010 = vpop.f32.mrf.mxu0
      %v4011 = vadd.f32 %v3724, %v4010
      %4012 = vmatmul.f32.gmra.mxu0 %v3817
      %v4013 = vpop.f32.mrf.mxu0
      %v4014 = vadd.f32 %v3724, %v4013
      %4015 = vmatmul.f32.gmra.mxu0 %v3820
      %v4016 = vpop.f32.mrf.mxu0
      %v4017 = vadd.f32 %v3724, %v4016
      %4018 = vmatmul.f32.gmra.mxu0 %v3823
      %v4019 = vpop.f32.mrf.mxu0
      %v4020 = vadd.f32 %v3724, %v4019
      %4021 = vmatmul.f32.gmra.mxu0 %v3826
      %v4022 = vpop.f32.mrf.mxu0
      %v4023 = vadd.f32 %v3724, %v4022
      %4024 = vmatmul.f32.gmra.mxu0 %v3829
      %v4025 = vpop.f32.mrf.mxu0
      %v4026 = vadd.f32 %v3724, %v4025
      %4027 = vmatmul.f32.gmra.mxu0 %v3832
      %v4028 = vpop.f32.mrf.mxu0
      %v4029 = vadd.f32 %v3724, %v4028
      %4030 = vmatmul.f32.gmra.mxu0 %v3835
      %v4031 = vpop.f32.mrf.mxu0
      %v4032 = vadd.f32 %v3724, %v4031
      %4033 = vmatmul.f32.gmra.mxu0 %v3838
      %v4034 = vpop.f32.mrf.mxu0
      %v4035 = vadd.f32 %v3724, %v4034
      %4036 = vmatmul.f32.gmra.mxu0 %v3841
      %v4037 = vpop.f32.mrf.mxu0
      %v4038 = vadd.f32 %v3724, %v4037
      %4039 = vmatmul.f32.gmra.mxu0 %v3844
      %v4040 = vpop.f32.mrf.mxu0
      %v4041 = vadd.f32 %v3724, %v4040
      %4042 = vmatmul.f32.gmra.mxu0 %v3847
      %v4043 = vpop.f32.mrf.mxu0
      %v4044 = vadd.f32 %v3724, %v4043
      %4045 = vmatmul.f32.gmra.mxu0 %v3850
      %v4046 = vpop.f32.mrf.mxu0
      %v4047 = vadd.f32 %v3724, %v4046
      %4048 = vmatmul.f32.gmra.mxu0 %v3853
      %v4049 = vpop.f32.mrf.mxu0
      %v4050 = vadd.f32 %v3724, %v4049
      %4051 = vmatmul.f32.gmra.mxu0 %v3856
      %v4052 = vpop.f32.mrf.mxu0
      %v4053 = vadd.f32 %v3724, %v4052
      %4054 = vmatmul.f32.gmra.mxu0 %v3859
      %v4055 = vpop.f32.mrf.mxu0
      %v4056 = vadd.f32 %v3724, %v4055
      %4057 = vmatmul.f32.gmra.mxu0 %v3862
      %v4058 = vpop.f32.mrf.mxu0
      %v4059 = vadd.f32 %v3724, %v4058
      %4060 = vmatmul.f32.gmra.mxu0 %v3865
      %v4061 = vpop.f32.mrf.mxu0
      %v4062 = vadd.f32 %v3724, %v4061
      %4063 = vmatmul.f32.gmra.mxu0 %v3868
      %v4064 = vpop.f32.mrf.mxu0
      %v4065 = vadd.f32 %v3724, %v4064
      %4066 = vmatmul.f32.gmra.mxu0 %v3871
      %v4067 = vpop.f32.mrf.mxu0
      %v4068 = vadd.f32 %v3724, %v4067
      %4069 = vmatmul.f32.gmra.mxu0 %v3874
      %v4070 = vpop.f32.mrf.mxu0
      %v4071 = vadd.f32 %v3724, %v4070
      %4072 = vmatmul.f32.gmra.mxu0 %v3877
      %v4073 = vpop.f32.mrf.mxu0
      %v4074 = vadd.f32 %v3724, %v4073
      %4075 = vmatmul.f32.gmra.mxu0 %v3880
      %v4076 = vpop.f32.mrf.mxu0
      %v4077 = vadd.f32 %v3724, %v4076
      %4078 = vmatmul.f32.gmra.mxu0 %v3883
      %v4079 = vpop.f32.mrf.mxu0
      %v4080 = vadd.f32 %v3724, %v4079
      %4081 = vmatmul.f32.gmra.mxu0 %v3886
      %v4082 = vpop.f32.mrf.mxu0
      %v4083 = vadd.f32 %v3724, %v4082
      %4084 = vmatmul.f32.gmra.mxu0 %v3889
      %v4085 = vpop.f32.mrf.mxu0
      %v4086 = vadd.f32 %v3724, %v4085
      %4087 = vmatmul.f32.gmra.mxu0 %v3892
      %v4088 = vpop.f32.mrf.mxu0
      %v4089 = vadd.f32 %v3724, %v4088
      %4090 = vmatmul.f32.gmra.mxu0 %v3895
      %v4091 = vpop.f32.mrf.mxu0
      %v4092 = vadd.f32 %v3724, %v4091
      %4093 = vmatmul.f32.gmra.mxu0 %v3898
      %v4094 = vpop.f32.mrf.mxu0
      %v4095 = vadd.f32 %v3724, %v4094
      %4096 = vmatmul.f32.gmra.mxu0 %v3901
      %v4097 = vpop.f32.mrf.mxu0
      %v4098 = vadd.f32 %v3724, %v4097
      %4099 = vmatmul.f32.gmra.mxu0 %v3904
      %v4100 = vpop.f32.mrf.mxu0
      %v4101 = vadd.f32 %v3724, %v4100
      %4102 = vdwg.mxu0
      %4103 = vst [vmem:[%s280] sm:$0xff] %v3924
      %4104 = vst [vmem:[%s280 + $0x8] sm:$0xff] %v3927
      %4105 = vst [vmem:[%s280 + $0x10] sm:$0xff] %v3930
      %4106 = vst [vmem:[%s280 + $0x18] sm:$0xff] %v3933
      %4107 = vst [vmem:[%s280 + $0x20] sm:$0xff] %v3936
      %4108 = vst [vmem:[%s280 + $0x28] sm:$0xff] %v3939
      %4109 = vst [vmem:[%s280 + $0x30] sm:$0xff] %v3942
      %4110 = vst [vmem:[%s280 + $0x38] sm:$0xff] %v3945
      %4111 = vst [vmem:[%s280 + $0x40] sm:$0xff] %v3948
      %4112 = vst [vmem:[%s280 + $0x48] sm:$0xff] %v3951
      %4113 = vst [vmem:[%s280 + $0x50] sm:$0xff] %v3954
      %4114 = vst [vmem:[%s280 + $0x58] sm:$0xff] %v3957
      %4115 = vst [vmem:[%s280 + $0x60] sm:$0xff] %v3960
      %4116 = vst [vmem:[%s280 + $0x68] sm:$0xff] %v3963
      %4117 = vst [vmem:[%s280 + $0x70] sm:$0xff] %v3966
      %4118 = vst [vmem:[%s280 + $0x78] sm:$0xff] %v3969
      %4119 = vst [vmem:[%s280 + $0x80] sm:$0xff] %v3972
      %4120 = vst [vmem:[%s280 + $0x88] sm:$0xff] %v3975
      %4121 = vst [vmem:[%s280 + $0x90] sm:$0xff] %v3978
      %4122 = vst [vmem:[%s280 + $0x98] sm:$0xff] %v3981
      %4123 = vst [vmem:[%s280 + $0xa0] sm:$0xff] %v3984
      %4124 = vst [vmem:[%s280 + $0xa8] sm:$0xff] %v3987
      %4125 = vst [vmem:[%s280 + $0xb0] sm:$0xff] %v3990
      %4126 = vst [vmem:[%s280 + $0xb8] sm:$0xff] %v3993
      %4127 = vst [vmem:[%s280 + $0xc0] sm:$0xff] %v3996
      %4128 = vst [vmem:[%s280 + $0xc8] sm:$0xff] %v3999
      %4129 = vst [vmem:[%s280 + $0xd0] sm:$0xff] %v4002
      %4130 = vst [vmem:[%s280 + $0xd8] sm:$0xff] %v4005
      %4131 = vst [vmem:[%s280 + $0xe0] sm:$0xff] %v4008
      %4132 = vst [vmem:[%s280 + $0xe8] sm:$0xff] %v4011
      %4133 = vst [vmem:[%s280 + $0xf0] sm:$0xff] %v4014
      %4134 = vst [vmem:[%s280 + $0xf8] sm:$0xff] %v4017
      %4135 = vst [vmem:[%s280 + $0x100] sm:$0xff] %v4020
      %4136 = vst [vmem:[%s280 + $0x108] sm:$0xff] %v4023
      %4137 = vst [vmem:[%s280 + $0x110] sm:$0xff] %v4026
      %4138 = vst [vmem:[%s280 + $0x118] sm:$0xff] %v4029
      %4139 = vst [vmem:[%s280 + $0x120] sm:$0xff] %v4032
      %4140 = vst [vmem:[%s280 + $0x128] sm:$0xff] %v4035
      %4141 = vst [vmem:[%s280 + $0x130] sm:$0xff] %v4038
      %4142 = vst [vmem:[%s280 + $0x138] sm:$0xff] %v4041
      %4143 = vst [vmem:[%s280 + $0x140] sm:$0xff] %v4044
      %4144 = vst [vmem:[%s280 + $0x148] sm:$0xff] %v4047
      %4145 = vst [vmem:[%s280 + $0x150] sm:$0xff] %v4050
      %4146 = vst [vmem:[%s280 + $0x158] sm:$0xff] %v4053
      %4147 = vst [vmem:[%s280 + $0x160] sm:$0xff] %v4056
      %4148 = vst [vmem:[%s280 + $0x168] sm:$0xff] %v4059
      %4149 = vst [vmem:[%s280 + $0x170] sm:$0xff] %v4062
      %4150 = vst [vmem:[%s280 + $0x178] sm:$0xff] %v4065
      %4151 = vst [vmem:[%s280 + $0x180] sm:$0xff] %v4068
      %4152 = vst [vmem:[%s280 + $0x188] sm:$0xff] %v4071
      %4153 = vst [vmem:[%s280 + $0x190] sm:$0xff] %v4074
      %4154 = vst [vmem:[%s280 + $0x198] sm:$0xff] %v4077
      %4155 = vst [vmem:[%s280 + $0x1a0] sm:$0xff] %v4080
      %4156 = vst [vmem:[%s280 + $0x1a8] sm:$0xff] %v4083
      %4157 = vst [vmem:[%s280 + $0x1b0] sm:$0xff] %v4086
      %4158 = vst [vmem:[%s280 + $0x1b8] sm:$0xff] %v4089
      %4159 = vst [vmem:[%s280 + $0x1c0] sm:$0xff] %v4092
      %4160 = vst [vmem:[%s280 + $0x1c8] sm:$0xff] %v4095
      %4161 = vst [vmem:[%s280 + $0x1d0] sm:$0xff] %v4098
      %4162 = vst [vmem:[%s280 + $0x1d8] sm:$0xff] %v4101
      %s4163 = smul.u32 60, %s18
      %p4164 = scmp.lt.s32.totalorder %s4163, 119
      %s4165 = scalar_select %p4164, %s4163, 119
      %s4166 = smul.addr %s4165, 8
      %s4167 = scalar_lea.vmem %s7, %s4166
      // Predicated region
      $region49: #{tree_lstm_forward.1} parent=47 // pred_check
        %p4168 = pneg %p188
      $region50: #{tree_lstm_forward.1} parent=47 // pred_check_branch
        %4170 = sbr.rel (%p4168) target = $region52
      $region51: #{tree_lstm_forward.1} parent=47 // pred_region
        %s4171 = smul.u32 60, %s18
      $region52: #{tree_lstm_forward.1} parent=47 // pred_fallthru
        _
    $region48: #{tree_lstm_forward.1} parent=5 // pred_fallthru
      _
    %p4172 = scmp.le.s32.totalorder 2, %s13
    // Predicated region
    $region53: #{tree_lstm_forward.1} parent=5 // pred_check
      %p4173 = pneg %p4172
    $region54: #{tree_lstm_forward.1} parent=5 // pred_check_branch
      %4175 = sbr.rel (%p4173) target = $region56
    $region55: #{tree_lstm_forward.1} parent=5 // pred_region
      %s4176 = ssub.s32 %s13, 2
      // Predicated region
      $region57: #{tree_lstm_forward.1} parent=55 // pred_check
        %p4177 = pneg %p194
      $region58: #{tree_lstm_forward.1} parent=55 // pred_check_branch
        %4179 = sbr.rel (%p4177) target = $region60
      $region59: #{tree_lstm_forward.1} parent=55 // pred_region
        %s4180 = smul.u32 60, %s19
        %p4181 = scmp.lt.s32.totalorder %s4180, 119
        %s4182 = scalar_select %p4181, %s4180, 119
        %s4183 = smul.addr %s4182, 8
        %s4184 = scalar_lea.vmem %s7, %s4183
      $region60: #{tree_lstm_forward.1} parent=55 // pred_fallthru
        _
    $region56: #{tree_lstm_forward.1} parent=5 // pred_fallthru
      _
  $region6: #{tree_lstm_forward.1} parent=0 // loop_footer
    %s17 = sadd.s32 1, %s13
  $region7: #{tree_lstm_forward.1} parent=0 // loop_footer_branch
    %12 = sbr.rel target = $region3
  $region8: #{tree_lstm_forward.1} parent=0 // loop_exit
    _

</llo_original>
